<compile_context>
chip_gen: v5e
topology: v5e:2x2
jax: 0.10.0
libtpu: 0.0.40
codegen_flags: <defaults>
</compile_context>

<pallas_src>
import numpy as np
import jax
import jax.numpy as jnp
from jax.experimental import pallas as pl
from jax.experimental.pallas import tpu as pltpu

# ----- scaled-down hyperparameters (original values in parentheses) -----
B = 2
DIM = 64                 # (768)
RED_DIM = DIM // 2       # ATRM reduced dim
HEADS = 4                # (8)
HEAD_DIM = DIM // HEADS
CTX = 32                 # (256)
C2 = CTX // 2
NQ = 16                  # (196) -> 4x4 query map
QH = QW = 4
IMG = 32                 # (224)
PATCH = 4                # (16)
FH = FW = IMG // PATCH   # 8x8 feature grid
N_TOK = FH * FW          # 64
KEEP = N_TOK // 2        # keep_ratio 0.5 -> 32
RED_RATIO = 0.2
RED_V = int(KEEP * RED_RATIO)      # 6
TXT_LEN = 8
RED_T = int(TXT_LEN * RED_RATIO)   # 1
TXT_HID = 32             # (512)
VOCAB = 50
OUT_SZ = 16              # (224) final bilinear output size
UP_SZ = 2 * QH           # 8

CDT = jnp.bfloat16       # MXU-native matmul input dtype (f32 accumulation everywhere)

# rows of the packed bias slab for the fused qgen/text kernel
ROW_BK, ROW_BV, ROW_BO, ROW_B1, ROW_B2, ROW_VA, ROW_TA, ROW_TXT = range(8)


def _full(a):
    nd = a.ndim
    return pl.BlockSpec(a.shape, lambda i, _nd=nd: (0,) * _nd)


def _softmax(s):
    # exact softmax (consistent across all modules, matches the PyTorch reference)
    s = s - jnp.max(s, axis=-1, keepdims=True)
    e = jnp.exp(s)
    return e / jnp.sum(e, axis=-1, keepdims=True)


# =========================== Pallas kernels ===========================

def _embed_select_kernel(patch_ref, pw_ref, misc_ref, tok_ref, score_ref):
    # fused patch-embed linear + TokenSelector (LayerNorm + score fc + softmax over tokens)
    # misc rows: 0=patch_b, 1=ln_gamma, 2=ln_beta, 3=score_w (row), 4[0]=score_b
    patches = patch_ref[0]                                                   # (N_TOK, 3*P*P) bf16
    tokens = jnp.dot(patches, pw_ref[...],
                     preferred_element_type=jnp.float32) + misc_ref[0:1, :]  # (N_TOK, DIM) f32
    tok_ref[...] = tokens.astype(CDT)[None]
    mu = jnp.mean(tokens, axis=-1, keepdims=True)
    var = jnp.mean((tokens - mu) ** 2, axis=-1, keepdims=True)
    ln = (tokens - mu) * jax.lax.rsqrt(var + 1e-5) * misc_ref[1:2, :] + misc_ref[2:3, :]
    # score fc has a single output channel: lane-reduce instead of a 1-lane-output matmul
    s_col = jnp.sum(ln * misc_ref[3:4, :], axis=-1, keepdims=True) + misc_ref[4:5, 0:1]
    score_ref[...] = _softmax(s_col.T)[None]                                 # (1, 1, N_TOK)


def _qgen_text_kernel(tok_ref, oh_ref, emb_ref,
                      q_ref, wkv_ref, wo_ref, w1_ref, w2_ref,
                      va_ref, ta_ref, tw_ref, bias_ref,
                      q_out, tf_out, va_out, ta_out,
                      attn_cat):
    # ---- QueryGenerator: cross-attention (full-width KV proj, per-head attention written into
    #      a VMEM concat scratch, one wide output projection) + residual MLP ----
    toks = tok_ref[0]                                                        # (N_TOK, DIM) bf16
    # top-k selection as a one-hot matmul gather (MXU), no HBM round-trip of gathered tokens
    sel = jnp.dot(oh_ref[0], toks, preferred_element_type=jnp.float32)       # (KEEP, DIM) f32
    sel_c = sel.astype(CDT)

    kv = jnp.dot(sel_c, wkv_ref[...], preferred_element_type=jnp.float32)    # (KEEP, 2*DIM)
    k_full = (kv[:, :DIM] + bias_ref[ROW_BK:ROW_BK + 1, :DIM]).astype(CDT)
    v_full = (kv[:, DIM:] + bias_ref[ROW_BV:ROW_BV + 1, :DIM]).astype(CDT)
    q_full = q_ref[...]                                  # (NQ, DIM) bf16, scale+bias pre-folded
    for h in range(HEADS):
        lo, hi = h * HEAD_DIM, (h + 1) * HEAD_DIM
        s = jnp.dot(q_full[:, lo:hi], k_full[:, lo:hi].T,
                    preferred_element_type=jnp.float32)                      # (NQ, KEEP)
        p = _softmax(s)
        attn_cat[:, lo:hi] = jnp.dot(p.astype(CDT), v_full[:, lo:hi],
                                     preferred_element_type=jnp.float32)
    attn = (jnp.dot(attn_cat[...].astype(CDT), wo_ref[...],
                    preferred_element_type=jnp.float32)
            + bias_ref[ROW_BO:ROW_BO + 1, :DIM])                             # (NQ, DIM)
    hmid = jnp.maximum(
        jnp.dot(attn.astype(CDT), w1_ref[...], preferred_element_type=jnp.float32)
        + bias_ref[ROW_B1:ROW_B1 + 1, :CTX], 0.0)
    mlp = (jnp.dot(hmid.astype(CDT), w2_ref[...], preferred_element_type=jnp.float32)
           + bias_ref[ROW_B2:ROW_B2 + 1, :DIM])
    q_out[...] = (attn + mlp).astype(CDT)[None]

    # ---- visual ATRM scores on the selected tokens (1/temperature folded into wq at init) ----
    qk = (jnp.dot(sel_c, va_ref[...], preferred_element_type=jnp.float32)
          + bias_ref[ROW_VA:ROW_VA + 1, :2 * RED_DIM])                       # (KEEP, 2*RED_DIM)
    sa = jnp.dot(qk[:, :RED_DIM].astype(CDT), qk[:, RED_DIM:].astype(CDT).T,
                 preferred_element_type=jnp.float32)
    va_out[...] = jnp.mean(_softmax(sa), axis=0, keepdims=True)[None]        # (1, 1, KEEP)

    # ---- text projection + text ATRM scores (independent of the visual branch) ----
    t = (jnp.dot(emb_ref[0], tw_ref[...], preferred_element_type=jnp.float32)
         + bias_ref[ROW_TXT:ROW_TXT + 1, :DIM])                              # (TXT_LEN, DIM)
    tf_out[...] = t.astype(CDT)[None]
    tc = t.astype(CDT)
    qkt = (jnp.dot(tc, ta_ref[...], preferred_element_type=jnp.float32)
           + bias_ref[ROW_TA:ROW_TA + 1, :2 * RED_DIM])
    st = jnp.dot(qkt[:, :RED_DIM].astype(CDT), qkt[:, RED_DIM:].astype(CDT).T,
                 preferred_element_type=jnp.float32)
    ta_out[...] = jnp.mean(_softmax(st), axis=0, keepdims=True)[None]        # (1, 1, TXT_LEN)


def _clim_maskhead_kernel(q_ref, tok_ref, voh_ref, tf_ref, toh_ref,
                          s_ref, w1_ref, w2_ref, g_ref, misc_ref,
                          seg_ref, clim_ref):
    # misc rows: 0=conv1_b(:CTX), 1=conv2_b(:C2), 2=conv3_w(:C2), 3[0]=conv3_b, 4[0]=up_b
    # ---- CrossModalLateInteraction (refined tokens gathered via one-hot matmuls) ----
    rv = jnp.dot(voh_ref[0], tok_ref[0], preferred_element_type=jnp.float32)  # (RED_V, DIM)
    rt = jnp.dot(toh_ref[0], tf_ref[0], preferred_element_type=jnp.float32)   # (RED_T, DIM)
    vn = rv * jax.lax.rsqrt(jnp.sum(rv * rv, axis=-1, keepdims=True) + 1e-12)
    tn = rt * jax.lax.rsqrt(jnp.sum(rt * rt, axis=-1, keepdims=True) + 1e-12)
    sim = jnp.dot(vn.astype(CDT), tn.astype(CDT).T, preferred_element_type=jnp.float32)
    i2t = jnp.mean(jnp.max(sim, axis=1, keepdims=True), axis=0, keepdims=True)
    t2i = jnp.mean(jnp.max(sim, axis=0, keepdims=True), axis=1, keepdims=True)
    clim_ref[...] = ((i2t + t2i) * 0.5)[None]

    # ---- MaskHeadSmallConv ----
    h0 = q_ref[0]                                                            # (NQ, DIM) bf16
    # conv1 3x3: one wide weight matmul (DIM, 9*CTX) + 9 tiny spatial-shift matmuls
    t1 = jnp.dot(h0, w1_ref[...], preferred_element_type=jnp.float32).astype(CDT)
    acc1 = jnp.zeros((NQ, CTX), jnp.float32)
    for k in range(9):
        acc1 = acc1 + jnp.dot(s_ref[k], t1[:, k * CTX:(k + 1) * CTX],
                              preferred_element_type=jnp.float32)
    h1 = jnp.maximum(acc1 + misc_ref[0:1, :CTX], 0.0).astype(CDT)
    # conv2 3x3: same scheme with (CTX, 9*C2)
    t2 = jnp.dot(h1, w2_ref[...], preferred_element_type=jnp.float32).astype(CDT)
    acc2 = jnp.zeros((NQ, C2), jnp.float32)
    for k in range(9):
        acc2 = acc2 + jnp.dot(s_ref[k], t2[:, k * C2:(k + 1) * C2],
                              preferred_element_type=jnp.float32)
    h2 = jnp.maximum(acc2 + misc_ref[1:2, :C2], 0.0)
    # conv3 1x1 (single output channel) as a lane-reduce
    h3 = jnp.sum(h2 * misc_ref[2:3, :C2], axis=-1, keepdims=True) + misc_ref[3:4, 0:1]
    # ConvTranspose2d(1,1,4,2,1) + bilinear->(OUT,OUT) + NQ->(QH,QW) unflatten, all folded on the
    # host into one (NQ, OUT*OUT) matrix: seg row is a single lane-dense (1,256) matmul output.
    seg = (jnp.dot(h3.T.astype(CDT), g_ref[...], preferred_element_type=jnp.float32)
           + misc_ref[4:5, 0:1])
    seg_ref[...] = seg[None]


# =========================== host-side precompute ===========================

def _bilinear_matrix(out_size, in_size):
    # matches F.interpolate(mode='bilinear', align_corners=False)
    w = np.zeros((out_size, in_size), np.float32)
    scale = in_size / out_size
    for i in range(out_size):
        src = max((i + 0.5) * scale - 0.5, 0.0)
        x0 = int(np.floor(src))
        x1 = min(x0 + 1, in_size - 1)
        lam = src - x0
        w[i, x0] += 1.0 - lam
        w[i, x1] += lam
    return w


def _conv3x3_shift_mats(h, w):
    # S_k[(y,x),(y',x')] = 1 iff (y',x') = (y+dy-1, x+dx-1) is in-bounds (zero padding)
    mats = np.zeros((9, h * w, h * w), np.float32)
    k = 0
    for dy in (-1, 0, 1):
        for dx in (-1, 0, 1):
            for y in range(h):
                for x in range(w):
                    yy, xx = y + dy, x + dx
                    if 0 <= yy < h and 0 <= xx < w:
                        mats[k, y * w + x, yy * w + xx] = 1.0
            k += 1
    return mats


def _convT_scatter_mats(in_size):
    # ConvTranspose2d(stride=2, pad=1, kernel=4): out[o] += in[i]*w[k] with o = 2*i + k - 1
    out_size = 2 * in_size
    R = np.zeros((4, out_size, in_size), np.float32)
    for k in range(4):
        for i in range(in_size):
            o = 2 * i + k - 1
            if 0 <= o < out_size:
                R[k, o, i] = 1.0
    return R


def init_params(key):
    keys = iter(jax.random.split(key, 64))
    nrm = lambda shape, s=0.02: jax.random.normal(next(keys), shape, jnp.float32) * s
    bf = lambda a: jnp.asarray(a, CDT)
    p = {}

    # ---- visual backbone stand-in (patch embed) + TokenSelector, params packed in one slab ----
    p['patch_w'] = bf(nrm((3 * PATCH * PATCH, DIM)))
    patch_b = jnp.zeros((DIM,))
    ts_gamma = jnp.ones((DIM,))
    ts_beta = jnp.zeros((DIM,))
    ts_w = nrm((DIM,))
    ts_b = jnp.zeros(())
    sel_misc = jnp.zeros((8, DIM), jnp.float32)
    sel_misc = sel_misc.at[0].set(patch_b).at[1].set(ts_gamma).at[2].set(ts_beta).at[3].set(ts_w)
    sel_misc = sel_misc.at[4, 0].set(ts_b)
    p['sel_misc'] = sel_misc

    # ---- QueryGenerator (MHA): Q projection of the fixed query embedding precomputed on the
    #      host (scale + bias folded in); K/V weights concatenated into one wide slab ----
    scale = 1.0 / np.sqrt(HEAD_DIM)
    qg_embed = nrm((NQ, DIM), 1.0)
    wq, wk, wv, wo = nrm((DIM, DIM)), nrm((DIM, DIM)), nrm((DIM, DIM)), nrm((DIM, DIM))
    bq = jnp.zeros((DIM,)); bk = jnp.zeros((DIM,)); bv = jnp.zeros((DIM,)); bo = jnp.zeros((DIM,))
    p['qg_q'] = bf((qg_embed @ wq + bq) * scale)
    p['qg_wkv'] = bf(jnp.concatenate([wk, wv], axis=1))        # (DIM, 2*DIM)
    p['qg_wo'] = bf(wo)
    p['qg_w1'] = bf(nrm((DIM, CTX))); b1 = jnp.zeros((CTX,))
    p['qg_w2'] = bf(nrm((CTX, DIM))); b2 = jnp.zeros((DIM,))

    # ---- ATRMs (1/temperature folded into the query projection at init) ----
    temp = 0.1
    va_wq, va_wk = nrm((DIM, RED_DIM)), nrm((DIM, RED_DIM))
    ta_wq, ta_wk = nrm((DIM, RED_DIM)), nrm((DIM, RED_DIM))
    va_bq = jnp.zeros((RED_DIM,)); va_bk = jnp.zeros((RED_DIM,))
    ta_bq = jnp.zeros((RED_DIM,)); ta_bk = jnp.zeros((RED_DIM,))
    p['va_wqk'] = bf(jnp.concatenate([va_wq / temp, va_wk], axis=1))
    p['ta_wqk'] = bf(jnp.concatenate([ta_wq / temp, ta_wk], axis=1))
    va_bqk = jnp.concatenate([va_bq / temp, va_bk])
    ta_bqk = jnp.concatenate([ta_bq / temp, ta_bk])

    # ---- text encoder stand-in + projection ----
    p['txt_tok_emb'] = nrm((VOCAB, TXT_HID), 1.0)
    p['txt_pos_emb'] = nrm((248, TXT_HID), 0.02)
    p['txt_proj_w'] = bf(nrm((TXT_HID, DIM))); txt_b = jnp.zeros((DIM,))

    # single bias slab for the fused qgen/text kernel (one operand instead of eight)
    qb = jnp.zeros((8, 4 * DIM), jnp.float32)
    qb = qb.at[ROW_BK, :DIM].set(bk).at[ROW_BV, :DIM].set(bv).at[ROW_BO, :DIM].set(bo)
    qb = qb.at[ROW_B1, :CTX].set(b1).at[ROW_B2, :DIM].set(b2)
    qb = qb.at[ROW_VA, :2 * RED_DIM].set(va_bqk).at[ROW_TA, :2 * RED_DIM].set(ta_bqk)
    qb = qb.at[ROW_TXT, :DIM].set(txt_b)
    p['qg_bias'] = qb

    # ---- MaskHeadSmallConv ----
    c1_w = nrm((9, DIM, CTX)); b1m = jnp.zeros((CTX,))
    c2_w = nrm((9, CTX, C2));  b2m = jnp.zeros((C2,))
    c3_w = nrm((C2,));         b3m = jnp.zeros(())
    up_w = np.asarray(jax.device_get(nrm((4, 4))), np.float32)   # ConvTranspose2d(1,1,4,2,1)
    up_b = 0.0
    # wide per-conv weight slabs: W_cat[:, k*C:(k+1)*C] = W_k
    p['mh_w1cat'] = bf(jnp.concatenate([c1_w[k] for k in range(9)], axis=1))   # (DIM, 9*CTX)
    p['mh_w2cat'] = bf(jnp.concatenate([c2_w[k] for k in range(9)], axis=1))   # (CTX, 9*C2)
    p['mh_S'] = bf(_conv3x3_shift_mats(QH, QW))                                # (9, NQ, NQ)
    # host fold: ConvTranspose2d + bilinear(OUT_SZ) + NQ->(QH,QW) unflatten into one matrix G
    R = _convT_scatter_mats(QH)
    C = _convT_scatter_mats(QW)
    Wr = _bilinear_matrix(OUT_SZ, UP_SZ)
    Wc = _bilinear_matrix(OUT_SZ, UP_SZ)
    A = np.stack([Wr @ R[ky] for ky in range(4)])                              # (4, OUT, QH)
    BT = np.stack([(Wc @ sum(up_w[ky, kx] * C[kx] for kx in range(4))).T
                   for ky in range(4)])                                        # (4, QW, OUT)
    G = np.einsum('kry,kxc->yxrc', A, BT).reshape(NQ, OUT_SZ * OUT_SZ)
    p['mh_G'] = bf(G)
    mm = jnp.zeros((8, CTX), jnp.float32)
    mm = mm.at[0, :CTX].set(b1m).at[1, :C2].set(b2m).at[2, :C2].set(c3_w)
    mm = mm.at[3, 0].set(b3m).at[4, 0].set(up_b)
    p['mh_misc'] = mm
    return p


# =========================== forward ===========================

def uninext_finelip_forward(p, images, text_ids):
    Bn = images.shape[0]
    par = pltpu.CompilerParams(dimension_semantics=("parallel",))

    # ---- visual backbone stand-in: NCHW -> per-token patch vectors (layout glue, host XLA) ----
    x = images.reshape(Bn, 3, FH, PATCH, FW, PATCH)
    patches = jnp.transpose(x, (0, 2, 4, 1, 3, 5)).reshape(Bn, N_TOK, 3 * PATCH * PATCH)
    patches = patches.astype(CDT)

    # ---- kernel 1: fused patch embed + TokenSelector ----
    tokens, ts_scores = pl.pallas_call(
        _embed_select_kernel,
        grid=(Bn,),
        in_specs=[pl.BlockSpec((1, N_TOK, 3 * PATCH * PATCH), lambda i: (i, 0, 0)),
                  _full(p['patch_w']), _full(p['sel_misc'])],
        out_specs=(pl.BlockSpec((1, N_TOK, DIM), lambda i: (i, 0, 0)),
                   pl.BlockSpec((1, 1, N_TOK), lambda i: (i, 0, 0))),
        out_shape=(jax.ShapeDtypeStruct((Bn, N_TOK, DIM), CDT),
                   jax.ShapeDtypeStruct((Bn, 1, N_TOK), jnp.float32)),
        compiler_params=par,
    )(patches, p['patch_w'], p['sel_misc'])

    _, ts_idx = jax.lax.top_k(ts_scores[:, 0, :], KEEP)
    ts_idx = jnp.sort(ts_idx, axis=-1)
    sel_oh = jax.nn.one_hot(ts_idx, N_TOK, dtype=CDT)                       # (B, KEEP, N_TOK)

    # text encoder stand-in (embedding lookup stays in plain JAX)
    txt = (p['txt_tok_emb'][text_ids] + p['txt_pos_emb'][:TXT_LEN][None]).astype(CDT)

    # ---- kernel 2: fused QueryGenerator + visual ATRM + text projection + text ATRM ----
    w_args = (p['qg_q'], p['qg_wkv'], p['qg_wo'], p['qg_w1'], p['qg_w2'],
              p['va_wqk'], p['ta_wqk'], p['txt_proj_w'], p['qg_bias'])
    queries, text_feat, va_scores, ta_scores = pl.pallas_call(
        _qgen_text_kernel,
        grid=(Bn,),
        in_specs=[pl.BlockSpec((1, N_TOK, DIM), lambda i: (i, 0, 0)),
                  pl.BlockSpec((1, KEEP, N_TOK), lambda i: (i, 0, 0)),
                  pl.BlockSpec((1, TXT_LEN, TXT_HID), lambda i: (i, 0, 0))]
                 + [_full(a) for a in w_args],
        out_specs=(pl.BlockSpec((1, NQ, DIM), lambda i: (i, 0, 0)),
                   pl.BlockSpec((1, TXT_LEN, DIM), lambda i: (i, 0, 0)),
                   pl.BlockSpec((1, 1, KEEP), lambda i: (i, 0, 0)),
                   pl.BlockSpec((1, 1, TXT_LEN), lambda i: (i, 0, 0))),
        out_shape=(jax.ShapeDtypeStruct((Bn, NQ, DIM), CDT),
                   jax.ShapeDtypeStruct((Bn, TXT_LEN, DIM), CDT),
                   jax.ShapeDtypeStruct((Bn, 1, KEEP), jnp.float32),
                   jax.ShapeDtypeStruct((Bn, 1, TXT_LEN), jnp.float32)),
        scratch_shapes=[pltpu.VMEM((NQ, DIM), jnp.float32)],
        compiler_params=par,
    )(tokens, sel_oh, txt, *w_args)

    _, va_idx = jax.lax.top_k(va_scores[:, 0, :], RED_V)
    va_idx = jnp.sort(va_idx, axis=-1)
    vis_idx = jnp.take_along_axis(ts_idx, va_idx, axis=1)                   # compose selections
    vis_oh = jax.nn.one_hot(vis_idx, N_TOK, dtype=CDT)                      # (B, RED_V, N_TOK)

    _, ta_idx = jax.lax.top_k(ta_scores[:, 0, :], RED_T)
    ta_idx = jnp.sort(ta_idx, axis=-1)
    txt_oh = jax.nn.one_hot(ta_idx, TXT_LEN, dtype=CDT)                     # (B, RED_T, TXT_LEN)

    # ---- kernel 3: fused CrossModalLateInteraction + MaskHeadSmallConv ----
    mh_args = (p['mh_S'], p['mh_w1cat'], p['mh_w2cat'], p['mh_G'], p['mh_misc'])
    seg_flat, clim = pl.pallas_call(
        _clim_maskhead_kernel,
        grid=(Bn,),
        in_specs=[pl.BlockSpec((1, NQ, DIM), lambda i: (i, 0, 0)),
                  pl.BlockSpec((1, N_TOK, DIM), lambda i: (i, 0, 0)),
                  pl.BlockSpec((1, RED_V, N_TOK), lambda i: (i, 0, 0)),
                  pl.BlockSpec((1, TXT_LEN, DIM), lambda i: (i, 0, 0)),
                  pl.BlockSpec((1, RED_T, TXT_LEN), lambda i: (i, 0, 0))]
                 + [_full(a) for a in mh_args],
        out_specs=(pl.BlockSpec((1, 1, OUT_SZ * OUT_SZ), lambda i: (i, 0, 0)),
                   pl.BlockSpec((1, 1, 1), lambda i: (i, 0, 0))),
        out_shape=(jax.ShapeDtypeStruct((Bn, 1, OUT_SZ * OUT_SZ), jnp.float32),
                   jax.ShapeDtypeStruct((Bn, 1, 1), jnp.float32)),
        compiler_params=par,
    )(queries, tokens, vis_oh, text_feat, txt_oh, *mh_args)

    seg_pred = seg_flat.reshape(Bn, 1, OUT_SZ, OUT_SZ)                       # NCHW
    clim_score = clim[:, 0, 0]
    return seg_pred, clim_score


if __name__ == "__main__":
    key = jax.random.PRNGKey(0)
    pkey, ikey, tkey = jax.random.split(key, 3)
    params = init_params(pkey)
    images = jax.random.normal(ikey, (B, 3, IMG, IMG), jnp.float32)
    text_ids = jax.random.randint(tkey, (B, TXT_LEN), 0, VOCAB)

    seg_pred, clim_score = jax.jit(uninext_finelip_forward)(params, images, text_ids)
    jax.block_until_ready((seg_pred, clim_score))

    assert seg_pred.shape == (B, 1, OUT_SZ, OUT_SZ)
    assert clim_score.shape == (B,)
    assert jnp.all(jnp.isfinite(seg_pred)) and jnp.all(jnp.isfinite(clim_score))
    print("KERNEL_OK")
</pallas_src>

<mosaic_0001>
module attributes {stable_mosaic.version = 11 : i64} {
  func.func @_embed_select_kernel(%arg0: i32, %arg1: memref<1x64x48xbf16, #tpu.memory_space<vmem>>, %arg2: memref<48x64xbf16, #tpu.memory_space<vmem>>, %arg3: memref<8x64xf32, #tpu.memory_space<vmem>>, %arg4: memref<1x64x64xbf16, #tpu.memory_space<vmem>>, %arg5: memref<1x1x64xf32, #tpu.memory_space<vmem>>) attributes {dimension_semantics = [#tpu.dimension_semantics<parallel>], iteration_bounds = array<i64: 2>, scalar_prefetch = 0 : i64, scratch_operands = 0 : i64, tpu.core_type = #tpu.core_type<tc>, window_params = [{transform_indices = @transform_0, window_bounds = array<i64: 1, 64, 48>}, {pipeline_mode = #tpu.pipeline_mode<synchronous>, transform_indices = @transform_1, window_bounds = array<i64: 48, 64>}, {pipeline_mode = #tpu.pipeline_mode<synchronous>, transform_indices = @transform_2, window_bounds = array<i64: 8, 64>}, {transform_indices = @transform_3, window_bounds = array<i64: 1, 64, 64>}, {transform_indices = @transform_4, window_bounds = array<i64: 1, 1, 64>}]} {
    %c0 = arith.constant 0 : index
    %c0_0 = arith.constant 0 : index
    %c0_1 = arith.constant 0 : index
    %0 = vector.load %arg1[%c0, %c0_0, %c0_1] : memref<1x64x48xbf16, #tpu.memory_space<vmem>>, vector<1x64x48xbf16>
    %1 = vector.shape_cast %0 : vector<1x64x48xbf16> to vector<64x48xbf16>
    %c0_2 = arith.constant 0 : index
    %c0_3 = arith.constant 0 : index
    %2 = vector.load %arg2[%c0_2, %c0_3] : memref<48x64xbf16, #tpu.memory_space<vmem>>, vector<48x64xbf16>
    %cst = arith.constant dense<0.000000e+00> : vector<64x64xf32>
    %3 = tpu.matmul %1, %2, %cst {dimension_numbers = #tpu.dot_dimension_numbers<[1], [0], [0], [1], [0, 0, 1, 1], [], []>} : vector<64x48xbf16>, vector<48x64xbf16>, vector<64x64xf32> -> vector<64x64xf32>
    %c0_4 = arith.constant 0 : index
    %c0_5 = arith.constant 0 : index
    %4 = vector.load %arg3[%c0_4, %c0_5] : memref<8x64xf32, #tpu.memory_space<vmem>>, vector<1x64xf32>
    %5 = vector.broadcast %4 : vector<1x64xf32> to vector<64x64xf32>
    %6 = arith.addf %3, %5 : vector<64x64xf32>
    %7 = arith.truncf %6 : vector<64x64xf32> to vector<64x64xbf16>
    %8 = vector.shape_cast %7 : vector<64x64xbf16> to vector<1x64x64xbf16>
    %c0_6 = arith.constant 0 : index
    %c0_7 = arith.constant 0 : index
    %c0_8 = arith.constant 0 : index
    %9 = vector.load %arg4[%c0_6, %c0_7, %c0_8] : memref<1x64x64xbf16, #tpu.memory_space<vmem>>, vector<1x64x64xbf16>
    tpu.vector_store %arg4[%c0_6, %c0_7, %c0_8], %8 {strides = array<i32>} : memref<1x64x64xbf16, #tpu.memory_space<vmem>>, vector<1x64x64xbf16>,
    %cst_9 = arith.constant dense<0.000000e+00> : vector<64xf32>
    %10 = vector.multi_reduction <add>, %6, %cst_9 [1] : vector<64x64xf32> to vector<64xf32>
    %11 = vector.shape_cast %10 : vector<64xf32> to vector<64x1xf32>
    %cst_10 = arith.constant 6.400000e+01 : f32
    %12 = vector.broadcast %cst_10 : f32 to vector<64x1xf32>
    %13 = arith.divf %11, %12 : vector<64x1xf32>
    %14 = vector.broadcast %13 : vector<64x1xf32> to vector<64x64xf32>
    %15 = arith.subf %6, %14 : vector<64x64xf32>
    %16 = arith.mulf %15, %15 : vector<64x64xf32>
    %cst_11 = arith.constant dense<0.000000e+00> : vector<64xf32>
    %17 = vector.multi_reduction <add>, %16, %cst_11 [1] : vector<64x64xf32> to vector<64xf32>
    %18 = vector.shape_cast %17 : vector<64xf32> to vector<64x1xf32>
    %cst_12 = arith.constant 6.400000e+01 : f32
    %19 = vector.broadcast %cst_12 : f32 to vector<64x1xf32>
    %20 = arith.divf %18, %19 : vector<64x1xf32>
    %21 = vector.broadcast %13 : vector<64x1xf32> to vector<64x64xf32>
    %22 = arith.subf %6, %21 : vector<64x64xf32>
    %cst_13 = arith.constant 9.99999974E-6 : f32
    %23 = vector.broadcast %cst_13 : f32 to vector<64x1xf32>
    %24 = arith.addf %20, %23 : vector<64x1xf32>
    %25 = math.rsqrt %24 : vector<64x1xf32>
    %26 = vector.broadcast %25 : vector<64x1xf32> to vector<64x64xf32>
    %27 = arith.mulf %22, %26 : vector<64x64xf32>
    %c1 = arith.constant 1 : index
    %c0_14 = arith.constant 0 : index
    %28 = vector.load %arg3[%c1, %c0_14] : memref<8x64xf32, #tpu.memory_space<vmem>>, vector<1x64xf32>
    %29 = vector.broadcast %28 : vector<1x64xf32> to vector<64x64xf32>
    %30 = arith.mulf %27, %29 : vector<64x64xf32>
    %c2 = arith.constant 2 : index
    %c0_15 = arith.constant 0 : index
    %31 = vector.load %arg3[%c2, %c0_15] : memref<8x64xf32, #tpu.memory_space<vmem>>, vector<1x64xf32>
    %32 = vector.broadcast %31 : vector<1x64xf32> to vector<64x64xf32>
    %33 = arith.addf %30, %32 : vector<64x64xf32>
    %c3 = arith.constant 3 : index
    %c0_16 = arith.constant 0 : index
    %34 = vector.load %arg3[%c3, %c0_16] : memref<8x64xf32, #tpu.memory_space<vmem>>, vector<1x64xf32>
    %35 = vector.broadcast %34 : vector<1x64xf32> to vector<64x64xf32>
    %36 = arith.mulf %33, %35 : vector<64x64xf32>
    %cst_17 = arith.constant dense<0.000000e+00> : vector<64xf32>
    %37 = vector.multi_reduction <add>, %36, %cst_17 [1] : vector<64x64xf32> to vector<64xf32>
    %38 = vector.shape_cast %37 : vector<64xf32> to vector<64x1xf32>
    %c4 = arith.constant 4 : index
    %c0_18 = arith.constant 0 : index
    %39 = vector.load %arg3[%c4, %c0_18] : memref<8x64xf32, #tpu.memory_space<vmem>>, vector<1x1xf32>
    %40 = vector.broadcast %39 : vector<1x1xf32> to vector<64x1xf32>
    %41 = arith.addf %38, %40 : vector<64x1xf32>
    %42 = tpu.transpose %41, [1, 0] : vector<64x1xf32> -> vector<1x64xf32>
    %cst_19 = arith.constant dense<0xFF800000> : vector<1xf32>
    %43 = vector.multi_reduction <maximumf>, %42, %cst_19 [1] : vector<1x64xf32> to vector<1xf32>
    %44 = vector.shape_cast %43 : vector<1xf32> to vector<1x1xf32>
    %45 = vector.broadcast %44 : vector<1x1xf32> to vector<1x64xf32>
    %46 = arith.subf %42, %45 : vector<1x64xf32>
    %47 = math.exp %46 : vector<1x64xf32>
    %cst_20 = arith.constant dense<0.000000e+00> : vector<1xf32>
    %48 = vector.multi_reduction <add>, %47, %cst_20 [1] : vector<1x64xf32> to vector<1xf32>
    %49 = vector.shape_cast %48 : vector<1xf32> to vector<1x1xf32>
    %50 = vector.broadcast %49 : vector<1x1xf32> to vector<1x64xf32>
    %51 = arith.divf %47, %50 : vector<1x64xf32>
    %52 = vector.shape_cast %51 : vector<1x64xf32> to vector<1x1x64xf32>
    %c0_21 = arith.constant 0 : index
    %c0_22 = arith.constant 0 : index
    %c0_23 = arith.constant 0 : index
    %53 = vector.load %arg5[%c0_21, %c0_22, %c0_23] : memref<1x1x64xf32, #tpu.memory_space<vmem>>, vector<1x1x64xf32>
    tpu.vector_store %arg5[%c0_21, %c0_22, %c0_23], %52 {strides = array<i32>} : memref<1x1x64xf32, #tpu.memory_space<vmem>>, vector<1x1x64xf32>,
    return
  }
  func.func @transform_0(%arg0: i32) -> (i32, i32, i32) {
    %c0_i32 = arith.constant 0 : i32
    %c0_i32_0 = arith.constant 0 : i32
    %c0_i32_1 = arith.constant 0 : i32
    return %arg0, %c0_i32, %c0_i32_0 : i32, i32, i32
  }
  func.func @transform_1(%arg0: i32) -> (i32, i32) {
    %c0_i32 = arith.constant 0 : i32
    %c0_i32_0 = arith.constant 0 : i32
    %c0_i32_1 = arith.constant 0 : i32
    return %c0_i32, %c0_i32_0 : i32, i32
  }
  func.func @transform_2(%arg0: i32) -> (i32, i32) {
    %c0_i32 = arith.constant 0 : i32
    %c0_i32_0 = arith.constant 0 : i32
    %c0_i32_1 = arith.constant 0 : i32
    return %c0_i32, %c0_i32_0 : i32, i32
  }
  func.func @transform_3(%arg0: i32) -> (i32, i32, i32) {
    %c0_i32 = arith.constant 0 : i32
    %c0_i32_0 = arith.constant 0 : i32
    %c0_i32_1 = arith.constant 0 : i32
    return %arg0, %c0_i32, %c0_i32_0 : i32, i32, i32
  }
  func.func @transform_4(%arg0: i32) -> (i32, i32, i32) {
    %c0_i32 = arith.constant 0 : i32
    %c0_i32_0 = arith.constant 0 : i32
    %c0_i32_1 = arith.constant 0 : i32
    return %arg0, %c0_i32, %c0_i32_0 : i32, i32, i32
  }
}

module attributes {stable_mosaic.version = 11 : i64} {
  func.func @_qgen_text_kernel(%arg0: i32, %arg1: memref<1x64x64xbf16, #tpu.memory_space<vmem>>, %arg2: memref<1x32x64xbf16, #tpu.memory_space<vmem>>, %arg3: memref<1x8x32xbf16, #tpu.memory_space<vmem>>, %arg4: memref<16x64xbf16, #tpu.memory_space<vmem>>, %arg5: memref<64x128xbf16, #tpu.memory_space<vmem>>, %arg6: memref<64x64xbf16, #tpu.memory_space<vmem>>, %arg7: memref<64x32xbf16, #tpu.memory_space<vmem>>, %arg8: memref<32x64xbf16, #tpu.memory_space<vmem>>, %arg9: memref<64x64xbf16, #tpu.memory_space<vmem>>, %arg10: memref<64x64xbf16, #tpu.memory_space<vmem>>, %arg11: memref<32x64xbf16, #tpu.memory_space<vmem>>, %arg12: memref<8x256xf32, #tpu.memory_space<vmem>>, %arg13: memref<1x16x64xbf16, #tpu.memory_space<vmem>>, %arg14: memref<1x8x64xbf16, #tpu.memory_space<vmem>>, %arg15: memref<1x1x32xf32, #tpu.memory_space<vmem>>, %arg16: memref<1x1x8xf32, #tpu.memory_space<vmem>>, %arg17: memref<16x64xf32, #tpu.memory_space<vmem>>) attributes {dimension_semantics = [#tpu.dimension_semantics<parallel>], iteration_bounds = array<i64: 2>, scalar_prefetch = 0 : i64, scratch_operands = 1 : i64, tpu.core_type = #tpu.core_type<tc>, window_params = [{transform_indices = @transform_0, window_bounds = array<i64: 1, 64, 64>}, {transform_indices = @transform_1, window_bounds = array<i64: 1, 32, 64>}, {transform_indices = @transform_2, window_bounds = array<i64: 1, 8, 32>}, {pipeline_mode = #tpu.pipeline_mode<synchronous>, transform_indices = @transform_3, window_bounds = array<i64: 16, 64>}, {pipeline_mode = #tpu.pipeline_mode<synchronous>, transform_indices = @transform_4, window_bounds = array<i64: 64, 128>}, {pipeline_mode = #tpu.pipeline_mode<synchronous>, transform_indices = @transform_5, window_bounds = array<i64: 64, 64>}, {pipeline_mode = #tpu.pipeline_mode<synchronous>, transform_indices = @transform_6, window_bounds = array<i64: 64, 32>}, {pipeline_mode = #tpu.pipeline_mode<synchronous>, transform_indices = @transform_7, window_bounds = array<i64: 32, 64>}, {pipeline_mode = #tpu.pipeline_mode<synchronous>, transform_indices = @transform_8, window_bounds = array<i64: 64, 64>}, {pipeline_mode = #tpu.pipeline_mode<synchronous>, transform_indices = @transform_9, window_bounds = array<i64: 64, 64>}, {pipeline_mode = #tpu.pipeline_mode<synchronous>, transform_indices = @transform_10, window_bounds = array<i64: 32, 64>}, {pipeline_mode = #tpu.pipeline_mode<synchronous>, transform_indices = @transform_11, window_bounds = array<i64: 8, 256>}, {transform_indices = @transform_12, window_bounds = array<i64: 1, 16, 64>}, {transform_indices = @transform_13, window_bounds = array<i64: 1, 8, 64>}, {transform_indices = @transform_14, window_bounds = array<i64: 1, 1, 32>}, {transform_indices = @transform_15, window_bounds = array<i64: 1, 1, 8>}]} {
    %c0 = arith.constant 0 : index
    %c0_0 = arith.constant 0 : index
    %c0_1 = arith.constant 0 : index
    %0 = vector.load %arg1[%c0, %c0_0, %c0_1] : memref<1x64x64xbf16, #tpu.memory_space<vmem>>, vector<1x64x64xbf16>
    %1 = vector.shape_cast %0 : vector<1x64x64xbf16> to vector<64x64xbf16>
    %c0_2 = arith.constant 0 : index
    %c0_3 = arith.constant 0 : index
    %c0_4 = arith.constant 0 : index
    %2 = vector.load %arg2[%c0_2, %c0_3, %c0_4] : memref<1x32x64xbf16, #tpu.memory_space<vmem>>, vector<1x32x64xbf16>
    %3 = vector.shape_cast %2 : vector<1x32x64xbf16> to vector<32x64xbf16>
    %cst = arith.constant dense<0.000000e+00> : vector<32x64xf32>
    %4 = tpu.matmul %3, %1, %cst {dimension_numbers = #tpu.dot_dimension_numbers<[1], [0], [0], [1], [0, 0, 1, 1], [], []>} : vector<32x64xbf16>, vector<64x64xbf16>, vector<32x64xf32> -> vector<32x64xf32>
    %5 = arith.truncf %4 : vector<32x64xf32> to vector<32x64xbf16>
    %c0_5 = arith.constant 0 : index
    %c0_6 = arith.constant 0 : index
    %6 = vector.load %arg5[%c0_5, %c0_6] : memref<64x128xbf16, #tpu.memory_space<vmem>>, vector<64x128xbf16>
    %cst_7 = arith.constant dense<0.000000e+00> : vector<32x128xf32>
    %7 = tpu.matmul %5, %6, %cst_7 {dimension_numbers = #tpu.dot_dimension_numbers<[1], [0], [0], [1], [0, 0, 1, 1], [], []>} : vector<32x64xbf16>, vector<64x128xbf16>, vector<32x128xf32> -> vector<32x128xf32>
    %8 = vector.extract_strided_slice %7 {offsets = [0, 0], sizes = [32, 64], strides = [1, 1]} : vector<32x128xf32> to vector<32x64xf32>
    %c0_8 = arith.constant 0 : index
    %c0_9 = arith.constant 0 : index
    %9 = vector.load %arg12[%c0_8, %c0_9] : memref<8x256xf32, #tpu.memory_space<vmem>>, vector<1x64xf32>
    %10 = vector.broadcast %9 : vector<1x64xf32> to vector<32x64xf32>
    %11 = arith.addf %8, %10 : vector<32x64xf32>
    %12 = arith.truncf %11 : vector<32x64xf32> to vector<32x64xbf16>
    %13 = vector.extract_strided_slice %7 {offsets = [0, 64], sizes = [32, 64], strides = [1, 1]} : vector<32x128xf32> to vector<32x64xf32>
    %c1 = arith.constant 1 : index
    %c0_10 = arith.constant 0 : index
    %14 = vector.load %arg12[%c1, %c0_10] : memref<8x256xf32, #tpu.memory_space<vmem>>, vector<1x64xf32>
    %15 = vector.broadcast %14 : vector<1x64xf32> to vector<32x64xf32>
    %16 = arith.addf %13, %15 : vector<32x64xf32>
    %17 = arith.truncf %16 : vector<32x64xf32> to vector<32x64xbf16>
    %c0_11 = arith.constant 0 : index
    %c0_12 = arith.constant 0 : index
    %18 = vector.load %arg4[%c0_11, %c0_12] : memref<16x64xbf16, #tpu.memory_space<vmem>>, vector<16x64xbf16>
    %19 = vector.extract_strided_slice %18 {offsets = [0, 0], sizes = [16, 16], strides = [1, 1]} : vector<16x64xbf16> to vector<16x16xbf16>
    %20 = vector.extract_strided_slice %12 {offsets = [0, 0], sizes = [32, 16], strides = [1, 1]} : vector<32x64xbf16> to vector<32x16xbf16>
    %21 = tpu.transpose %20, [1, 0] : vector<32x16xbf16> -> vector<16x32xbf16>
    %cst_13 = arith.constant dense<0.000000e+00> : vector<16x32xf32>
    %22 = tpu.matmul %19, %21, %cst_13 {dimension_numbers = #tpu.dot_dimension_numbers<[1], [0], [0], [1], [0, 0, 1, 1], [], []>} : vector<16x16xbf16>, vector<16x32xbf16>, vector<16x32xf32> -> vector<16x32xf32>
    %cst_14 = arith.constant dense<0xFF800000> : vector<16xf32>
    %23 = vector.multi_reduction <maximumf>, %22, %cst_14 [1] : vector<16x32xf32> to vector<16xf32>
    %24 = vector.shape_cast %23 : vector<16xf32> to vector<16x1xf32>
    %25 = vector.broadcast %24 : vector<16x1xf32> to vector<16x32xf32>
    %26 = arith.subf %22, %25 : vector<16x32xf32>
    %27 = math.exp %26 : vector<16x32xf32>
    %cst_15 = arith.constant dense<0.000000e+00> : vector<16xf32>
    %28 = vector.multi_reduction <add>, %27, %cst_15 [1] : vector<16x32xf32> to vector<16xf32>
    %29 = vector.shape_cast %28 : vector<16xf32> to vector<16x1xf32>
    %30 = vector.broadcast %29 : vector<16x1xf32> to vector<16x32xf32>
    %31 = arith.divf %27, %30 : vector<16x32xf32>
    %32 = arith.truncf %31 : vector<16x32xf32> to vector<16x32xbf16>
    %33 = vector.extract_strided_slice %17 {offsets = [0, 0], sizes = [32, 16], strides = [1, 1]} : vector<32x64xbf16> to vector<32x16xbf16>
    %cst_16 = arith.constant dense<0.000000e+00> : vector<16x16xf32>
    %34 = tpu.matmul %32, %33, %cst_16 {dimension_numbers = #tpu.dot_dimension_numbers<[1], [0], [0], [1], [0, 0, 1, 1], [], []>} : vector<16x32xbf16>, vector<32x16xbf16>, vector<16x16xf32> -> vector<16x16xf32>
    %c0_17 = arith.constant 0 : index
    %c0_18 = arith.constant 0 : index
    %35 = vector.load %arg17[%c0_17, %c0_18] : memref<16x64xf32, #tpu.memory_space<vmem>>, vector<16x16xf32>
    tpu.vector_store %arg17[%c0_17, %c0_18], %34 {strides = array<i32>} : memref<16x64xf32, #tpu.memory_space<vmem>>, vector<16x16xf32>,
    %36 = vector.extract_strided_slice %18 {offsets = [0, 16], sizes = [16, 16], strides = [1, 1]} : vector<16x64xbf16> to vector<16x16xbf16>
    %37 = vector.extract_strided_slice %12 {offsets = [0, 16], sizes = [32, 16], strides = [1, 1]} : vector<32x64xbf16> to vector<32x16xbf16>
    %38 = tpu.transpose %37, [1, 0] : vector<32x16xbf16> -> vector<16x32xbf16>
    %cst_19 = arith.constant dense<0.000000e+00> : vector<16x32xf32>
    %39 = tpu.matmul %36, %38, %cst_19 {dimension_numbers = #tpu.dot_dimension_numbers<[1], [0], [0], [1], [0, 0, 1, 1], [], []>} : vector<16x16xbf16>, vector<16x32xbf16>, vector<16x32xf32> -> vector<16x32xf32>
    %cst_20 = arith.constant dense<0xFF800000> : vector<16xf32>
    %40 = vector.multi_reduction <maximumf>, %39, %cst_20 [1] : vector<16x32xf32> to vector<16xf32>
    %41 = vector.shape_cast %40 : vector<16xf32> to vector<16x1xf32>
    %42 = vector.broadcast %41 : vector<16x1xf32> to vector<16x32xf32>
    %43 = arith.subf %39, %42 : vector<16x32xf32>
    %44 = math.exp %43 : vector<16x32xf32>
    %cst_21 = arith.constant dense<0.000000e+00> : vector<16xf32>
    %45 = vector.multi_reduction <add>, %44, %cst_21 [1] : vector<16x32xf32> to vector<16xf32>
    %46 = vector.shape_cast %45 : vector<16xf32> to vector<16x1xf32>
    %47 = vector.broadcast %46 : vector<16x1xf32> to vector<16x32xf32>
    %48 = arith.divf %44, %47 : vector<16x32xf32>
    %49 = arith.truncf %48 : vector<16x32xf32> to vector<16x32xbf16>
    %50 = vector.extract_strided_slice %17 {offsets = [0, 16], sizes = [32, 16], strides = [1, 1]} : vector<32x64xbf16> to vector<32x16xbf16>
    %cst_22 = arith.constant dense<0.000000e+00> : vector<16x16xf32>
    %51 = tpu.matmul %49, %50, %cst_22 {dimension_numbers = #tpu.dot_dimension_numbers<[1], [0], [0], [1], [0, 0, 1, 1], [], []>} : vector<16x32xbf16>, vector<32x16xbf16>, vector<16x16xf32> -> vector<16x16xf32>
    %c0_23 = arith.constant 0 : index
    %c16 = arith.constant 16 : index
    %52 = vector.load %arg17[%c0_23, %c16] : memref<16x64xf32, #tpu.memory_space<vmem>>, vector<16x16xf32>
    tpu.vector_store %arg17[%c0_23, %c16], %51 {strides = array<i32>} : memref<16x64xf32, #tpu.memory_space<vmem>>, vector<16x16xf32>,
    %53 = vector.extract_strided_slice %18 {offsets = [0, 32], sizes = [16, 16], strides = [1, 1]} : vector<16x64xbf16> to vector<16x16xbf16>
    %54 = vector.extract_strided_slice %12 {offsets = [0, 32], sizes = [32, 16], strides = [1, 1]} : vector<32x64xbf16> to vector<32x16xbf16>
    %55 = tpu.transpose %54, [1, 0] : vector<32x16xbf16> -> vector<16x32xbf16>
    %cst_24 = arith.constant dense<0.000000e+00> : vector<16x32xf32>
    %56 = tpu.matmul %53, %55, %cst_24 {dimension_numbers = #tpu.dot_dimension_numbers<[1], [0], [0], [1], [0, 0, 1, 1], [], []>} : vector<16x16xbf16>, vector<16x32xbf16>, vector<16x32xf32> -> vector<16x32xf32>
    %cst_25 = arith.constant dense<0xFF800000> : vector<16xf32>
    %57 = vector.multi_reduction <maximumf>, %56, %cst_25 [1] : vector<16x32xf32> to vector<16xf32>
    %58 = vector.shape_cast %57 : vector<16xf32> to vector<16x1xf32>
    %59 = vector.broadcast %58 : vector<16x1xf32> to vector<16x32xf32>
    %60 = arith.subf %56, %59 : vector<16x32xf32>
    %61 = math.exp %60 : vector<16x32xf32>
    %cst_26 = arith.constant dense<0.000000e+00> : vector<16xf32>
    %62 = vector.multi_reduction <add>, %61, %cst_26 [1] : vector<16x32xf32> to vector<16xf32>
    %63 = vector.shape_cast %62 : vector<16xf32> to vector<16x1xf32>
    %64 = vector.broadcast %63 : vector<16x1xf32> to vector<16x32xf32>
    %65 = arith.divf %61, %64 : vector<16x32xf32>
    %66 = arith.truncf %65 : vector<16x32xf32> to vector<16x32xbf16>
    %67 = vector.extract_strided_slice %17 {offsets = [0, 32], sizes = [32, 16], strides = [1, 1]} : vector<32x64xbf16> to vector<32x16xbf16>
    %cst_27 = arith.constant dense<0.000000e+00> : vector<16x16xf32>
    %68 = tpu.matmul %66, %67, %cst_27 {dimension_numbers = #tpu.dot_dimension_numbers<[1], [0], [0], [1], [0, 0, 1, 1], [], []>} : vector<16x32xbf16>, vector<32x16xbf16>, vector<16x16xf32> -> vector<16x16xf32>
    %c0_28 = arith.constant 0 : index
    %c32 = arith.constant 32 : index
    %69 = vector.load %arg17[%c0_28, %c32] : memref<16x64xf32, #tpu.memory_space<vmem>>, vector<16x16xf32>
    tpu.vector_store %arg17[%c0_28, %c32], %68 {strides = array<i32>} : memref<16x64xf32, #tpu.memory_space<vmem>>, vector<16x16xf32>,
    %70 = vector.extract_strided_slice %18 {offsets = [0, 48], sizes = [16, 16], strides = [1, 1]} : vector<16x64xbf16> to vector<16x16xbf16>
    %71 = vector.extract_strided_slice %12 {offsets = [0, 48], sizes = [32, 16], strides = [1, 1]} : vector<32x64xbf16> to vector<32x16xbf16>
    %72 = tpu.transpose %71, [1, 0] : vector<32x16xbf16> -> vector<16x32xbf16>
    %cst_29 = arith.constant dense<0.000000e+00> : vector<16x32xf32>
    %73 = tpu.matmul %70, %72, %cst_29 {dimension_numbers = #tpu.dot_dimension_numbers<[1], [0], [0], [1], [0, 0, 1, 1], [], []>} : vector<16x16xbf16>, vector<16x32xbf16>, vector<16x32xf32> -> vector<16x32xf32>
    %cst_30 = arith.constant dense<0xFF800000> : vector<16xf32>
    %74 = vector.multi_reduction <maximumf>, %73, %cst_30 [1] : vector<16x32xf32> to vector<16xf32>
    %75 = vector.shape_cast %74 : vector<16xf32> to vector<16x1xf32>
    %76 = vector.broadcast %75 : vector<16x1xf32> to vector<16x32xf32>
    %77 = arith.subf %73, %76 : vector<16x32xf32>
    %78 = math.exp %77 : vector<16x32xf32>
    %cst_31 = arith.constant dense<0.000000e+00> : vector<16xf32>
    %79 = vector.multi_reduction <add>, %78, %cst_31 [1] : vector<16x32xf32> to vector<16xf32>
    %80 = vector.shape_cast %79 : vector<16xf32> to vector<16x1xf32>
    %81 = vector.broadcast %80 : vector<16x1xf32> to vector<16x32xf32>
    %82 = arith.divf %78, %81 : vector<16x32xf32>
    %83 = arith.truncf %82 : vector<16x32xf32> to vector<16x32xbf16>
    %84 = vector.extract_strided_slice %17 {offsets = [0, 48], sizes = [32, 16], strides = [1, 1]} : vector<32x64xbf16> to vector<32x16xbf16>
    %cst_32 = arith.constant dense<0.000000e+00> : vector<16x16xf32>
    %85 = tpu.matmul %83, %84, %cst_32 {dimension_numbers = #tpu.dot_dimension_numbers<[1], [0], [0], [1], [0, 0, 1, 1], [], []>} : vector<16x32xbf16>, vector<32x16xbf16>, vector<16x16xf32> -> vector<16x16xf32>
    %c0_33 = arith.constant 0 : index
    %c48 = arith.constant 48 : index
    %86 = vector.load %arg17[%c0_33, %c48] : memref<16x64xf32, #tpu.memory_space<vmem>>, vector<16x16xf32>
    tpu.vector_store %arg17[%c0_33, %c48], %85 {strides = array<i32>} : memref<16x64xf32, #tpu.memory_space<vmem>>, vector<16x16xf32>,
    %c0_34 = arith.constant 0 : index
    %c0_35 = arith.constant 0 : index
    %87 = vector.load %arg17[%c0_34, %c0_35] : memref<16x64xf32, #tpu.memory_space<vmem>>, vector<16x64xf32>
    %88 = arith.truncf %87 : vector<16x64xf32> to vector<16x64xbf16>
    %c0_36 = arith.constant 0 : index
    %c0_37 = arith.constant 0 : index
    %89 = vector.load %arg6[%c0_36, %c0_37] : memref<64x64xbf16, #tpu.memory_space<vmem>>, vector<64x64xbf16>
    %cst_38 = arith.constant dense<0.000000e+00> : vector<16x64xf32>
    %90 = tpu.matmul %88, %89, %cst_38 {dimension_numbers = #tpu.dot_dimension_numbers<[1], [0], [0], [1], [0, 0, 1, 1], [], []>} : vector<16x64xbf16>, vector<64x64xbf16>, vector<16x64xf32> -> vector<16x64xf32>
    %c2 = arith.constant 2 : index
    %c0_39 = arith.constant 0 : index
    %91 = vector.load %arg12[%c2, %c0_39] : memref<8x256xf32, #tpu.memory_space<vmem>>, vector<1x64xf32>
    %92 = vector.broadcast %91 : vector<1x64xf32> to vector<16x64xf32>
    %93 = arith.addf %90, %92 : vector<16x64xf32>
    %94 = arith.truncf %93 : vector<16x64xf32> to vector<16x64xbf16>
    %c0_40 = arith.constant 0 : index
    %c0_41 = arith.constant 0 : index
    %95 = vector.load %arg7[%c0_40, %c0_41] : memref<64x32xbf16, #tpu.memory_space<vmem>>, vector<64x32xbf16>
    %cst_42 = arith.constant dense<0.000000e+00> : vector<16x32xf32>
    %96 = tpu.matmul %94, %95, %cst_42 {dimension_numbers = #tpu.dot_dimension_numbers<[1], [0], [0], [1], [0, 0, 1, 1], [], []>} : vector<16x64xbf16>, vector<64x32xbf16>, vector<16x32xf32> -> vector<16x32xf32>
    %c3 = arith.constant 3 : index
    %c0_43 = arith.constant 0 : index
    %97 = vector.load %arg12[%c3, %c0_43] : memref<8x256xf32, #tpu.memory_space<vmem>>, vector<1x32xf32>
    %98 = vector.broadcast %97 : vector<1x32xf32> to vector<16x32xf32>
    %99 = arith.addf %96, %98 : vector<16x32xf32>
    %cst_44 = arith.constant 0.000000e+00 : f32
    %100 = vector.broadcast %cst_44 : f32 to vector<16x32xf32>
    %101 = arith.maximumf %99, %100 : vector<16x32xf32>
    %102 = arith.truncf %101 : vector<16x32xf32> to vector<16x32xbf16>
    %c0_45 = arith.constant 0 : index
    %c0_46 = arith.constant 0 : index
    %103 = vector.load %arg8[%c0_45, %c0_46] : memref<32x64xbf16, #tpu.memory_space<vmem>>, vector<32x64xbf16>
    %cst_47 = arith.constant dense<0.000000e+00> : vector<16x64xf32>
    %104 = tpu.matmul %102, %103, %cst_47 {dimension_numbers = #tpu.dot_dimension_numbers<[1], [0], [0], [1], [0, 0, 1, 1], [], []>} : vector<16x32xbf16>, vector<32x64xbf16>, vector<16x64xf32> -> vector<16x64xf32>
    %c4 = arith.constant 4 : index
    %c0_48 = arith.constant 0 : index
    %105 = vector.load %arg12[%c4, %c0_48] : memref<8x256xf32, #tpu.memory_space<vmem>>, vector<1x64xf32>
    %106 = vector.broadcast %105 : vector<1x64xf32> to vector<16x64xf32>
    %107 = arith.addf %104, %106 : vector<16x64xf32>
    %108 = arith.addf %93, %107 : vector<16x64xf32>
    %109 = arith.truncf %108 : vector<16x64xf32> to vector<16x64xbf16>
    %110 = vector.shape_cast %109 : vector<16x64xbf16> to vector<1x16x64xbf16>
    %c0_49 = arith.constant 0 : index
    %c0_50 = arith.constant 0 : index
    %c0_51 = arith.constant 0 : index
    %111 = vector.load %arg13[%c0_49, %c0_50, %c0_51] : memref<1x16x64xbf16, #tpu.memory_space<vmem>>, vector<1x16x64xbf16>
    tpu.vector_store %arg13[%c0_49, %c0_50, %c0_51], %110 {strides = array<i32>} : memref<1x16x64xbf16, #tpu.memory_space<vmem>>, vector<1x16x64xbf16>,
    %c0_52 = arith.constant 0 : index
    %c0_53 = arith.constant 0 : index
    %112 = vector.load %arg9[%c0_52, %c0_53] : memref<64x64xbf16, #tpu.memory_space<vmem>>, vector<64x64xbf16>
    %cst_54 = arith.constant dense<0.000000e+00> : vector<32x64xf32>
    %113 = tpu.matmul %5, %112, %cst_54 {dimension_numbers = #tpu.dot_dimension_numbers<[1], [0], [0], [1], [0, 0, 1, 1], [], []>} : vector<32x64xbf16>, vector<64x64xbf16>, vector<32x64xf32> -> vector<32x64xf32>
    %c5 = arith.constant 5 : index
    %c0_55 = arith.constant 0 : index
    %114 = vector.load %arg12[%c5, %c0_55] : memref<8x256xf32, #tpu.memory_space<vmem>>, vector<1x64xf32>
    %115 = vector.broadcast %114 : vector<1x64xf32> to vector<32x64xf32>
    %116 = arith.addf %113, %115 : vector<32x64xf32>
    %117 = vector.extract_strided_slice %116 {offsets = [0, 0], sizes = [32, 32], strides = [1, 1]} : vector<32x64xf32> to vector<32x32xf32>
    %118 = arith.truncf %117 : vector<32x32xf32> to vector<32x32xbf16>
    %119 = vector.extract_strided_slice %116 {offsets = [0, 32], sizes = [32, 32], strides = [1, 1]} : vector<32x64xf32> to vector<32x32xf32>
    %120 = arith.truncf %119 : vector<32x32xf32> to vector<32x32xbf16>
    %121 = tpu.transpose %120, [1, 0] : vector<32x32xbf16> -> vector<32x32xbf16>
    %cst_56 = arith.constant dense<0.000000e+00> : vector<32x32xf32>
    %122 = tpu.matmul %118, %121, %cst_56 {dimension_numbers = #tpu.dot_dimension_numbers<[1], [0], [0], [1], [0, 0, 1, 1], [], []>} : vector<32x32xbf16>, vector<32x32xbf16>, vector<32x32xf32> -> vector<32x32xf32>
    %cst_57 = arith.constant dense<0xFF800000> : vector<32xf32>
    %123 = vector.multi_reduction <maximumf>, %122, %cst_57 [1] : vector<32x32xf32> to vector<32xf32>
    %124 = vector.shape_cast %123 : vector<32xf32> to vector<32x1xf32>
    %125 = vector.broadcast %124 : vector<32x1xf32> to vector<32x32xf32>
    %126 = arith.subf %122, %125 : vector<32x32xf32>
    %127 = math.exp %126 : vector<32x32xf32>
    %cst_58 = arith.constant dense<0.000000e+00> : vector<32xf32>
    %128 = vector.multi_reduction <add>, %127, %cst_58 [1] : vector<32x32xf32> to vector<32xf32>
    %129 = vector.shape_cast %128 : vector<32xf32> to vector<32x1xf32>
    %130 = vector.broadcast %129 : vector<32x1xf32> to vector<32x32xf32>
    %131 = arith.divf %127, %130 : vector<32x32xf32>
    %cst_59 = arith.constant dense<0.000000e+00> : vector<32xf32>
    %132 = vector.multi_reduction <add>, %131, %cst_59 [0] : vector<32x32xf32> to vector<32xf32>
    %133 = vector.shape_cast %132 : vector<32xf32> to vector<1x32xf32>
    %cst_60 = arith.constant 3.200000e+01 : f32
    %134 = vector.broadcast %cst_60 : f32 to vector<1x32xf32>
    %135 = arith.divf %133, %134 : vector<1x32xf32>
    %136 = vector.shape_cast %135 : vector<1x32xf32> to vector<1x1x32xf32>
    %c0_61 = arith.constant 0 : index
    %c0_62 = arith.constant 0 : index
    %c0_63 = arith.constant 0 : index
    %137 = vector.load %arg15[%c0_61, %c0_62, %c0_63] : memref<1x1x32xf32, #tpu.memory_space<vmem>>, vector<1x1x32xf32>
    tpu.vector_store %arg15[%c0_61, %c0_62, %c0_63], %136 {strides = array<i32>} : memref<1x1x32xf32, #tpu.memory_space<vmem>>, vector<1x1x32xf32>,
    %c0_64 = arith.constant 0 : index
    %c0_65 = arith.constant 0 : index
    %c0_66 = arith.constant 0 : index
    %138 = vector.load %arg3[%c0_64, %c0_65, %c0_66] : memref<1x8x32xbf16, #tpu.memory_space<vmem>>, vector<1x8x32xbf16>
    %139 = vector.shape_cast %138 : vector<1x8x32xbf16> to vector<8x32xbf16>
    %c0_67 = arith.constant 0 : index
    %c0_68 = arith.constant 0 : index
    %140 = vector.load %arg11[%c0_67, %c0_68] : memref<32x64xbf16, #tpu.memory_space<vmem>>, vector<32x64xbf16>
    %cst_69 = arith.constant dense<0.000000e+00> : vector<8x64xf32>
    %141 = tpu.matmul %139, %140, %cst_69 {dimension_numbers = #tpu.dot_dimension_numbers<[1], [0], [0], [1], [0, 0, 1, 1], [], []>} : vector<8x32xbf16>, vector<32x64xbf16>, vector<8x64xf32> -> vector<8x64xf32>
    %c7 = arith.constant 7 : index
    %c0_70 = arith.constant 0 : index
    %142 = vector.load %arg12[%c7, %c0_70] : memref<8x256xf32, #tpu.memory_space<vmem>>, vector<1x64xf32>
    %143 = vector.broadcast %142 : vector<1x64xf32> to vector<8x64xf32>
    %144 = arith.addf %141, %143 : vector<8x64xf32>
    %145 = arith.truncf %144 : vector<8x64xf32> to vector<8x64xbf16>
    %146 = vector.shape_cast %145 : vector<8x64xbf16> to vector<1x8x64xbf16>
    %c0_71 = arith.constant 0 : index
    %c0_72 = arith.constant 0 : index
    %c0_73 = arith.constant 0 : index
    %147 = vector.load %arg14[%c0_71, %c0_72, %c0_73] : memref<1x8x64xbf16, #tpu.memory_space<vmem>>, vector<1x8x64xbf16>
    tpu.vector_store %arg14[%c0_71, %c0_72, %c0_73], %146 {strides = array<i32>} : memref<1x8x64xbf16, #tpu.memory_space<vmem>>, vector<1x8x64xbf16>,
    %148 = arith.truncf %144 : vector<8x64xf32> to vector<8x64xbf16>
    %c0_74 = arith.constant 0 : index
    %c0_75 = arith.constant 0 : index
    %149 = vector.load %arg10[%c0_74, %c0_75] : memref<64x64xbf16, #tpu.memory_space<vmem>>, vector<64x64xbf16>
    %cst_76 = arith.constant dense<0.000000e+00> : vector<8x64xf32>
    %150 = tpu.matmul %148, %149, %cst_76 {dimension_numbers = #tpu.dot_dimension_numbers<[1], [0], [0], [1], [0, 0, 1, 1], [], []>} : vector<8x64xbf16>, vector<64x64xbf16>, vector<8x64xf32> -> vector<8x64xf32>
    %c6 = arith.constant 6 : index
    %c0_77 = arith.constant 0 : index
    %151 = vector.load %arg12[%c6, %c0_77] : memref<8x256xf32, #tpu.memory_space<vmem>>, vector<1x64xf32>
    %152 = vector.broadcast %151 : vector<1x64xf32> to vector<8x64xf32>
    %153 = arith.addf %150, %152 : vector<8x64xf32>
    %154 = vector.extract_strided_slice %153 {offsets = [0, 0], sizes = [8, 32], strides = [1, 1]} : vector<8x64xf32> to vector<8x32xf32>
    %155 = arith.truncf %154 : vector<8x32xf32> to vector<8x32xbf16>
    %156 = vector.extract_strided_slice %153 {offsets = [0, 32], sizes = [8, 32], strides = [1, 1]} : vector<8x64xf32> to vector<8x32xf32>
    %157 = arith.truncf %156 : vector<8x32xf32> to vector<8x32xbf16>
    %158 = tpu.transpose %157, [1, 0] : vector<8x32xbf16> -> vector<32x8xbf16>
    %cst_78 = arith.constant dense<0.000000e+00> : vector<8x8xf32>
    %159 = tpu.matmul %155, %158, %cst_78 {dimension_numbers = #tpu.dot_dimension_numbers<[1], [0], [0], [1], [0, 0, 1, 1], [], []>} : vector<8x32xbf16>, vector<32x8xbf16>, vector<8x8xf32> -> vector<8x8xf32>
    %cst_79 = arith.constant dense<0xFF800000> : vector<8xf32>
    %160 = vector.multi_reduction <maximumf>, %159, %cst_79 [1] : vector<8x8xf32> to vector<8xf32>
    %161 = vector.shape_cast %160 : vector<8xf32> to vector<8x1xf32>
    %162 = vector.broadcast %161 : vector<8x1xf32> to vector<8x8xf32>
    %163 = arith.subf %159, %162 : vector<8x8xf32>
    %164 = math.exp %163 : vector<8x8xf32>
    %cst_80 = arith.constant dense<0.000000e+00> : vector<8xf32>
    %165 = vector.multi_reduction <add>, %164, %cst_80 [1] : vector<8x8xf32> to vector<8xf32>
    %166 = vector.shape_cast %165 : vector<8xf32> to vector<8x1xf32>
    %167 = vector.broadcast %166 : vector<8x1xf32> to vector<8x8xf32>
    %168 = arith.divf %164, %167 : vector<8x8xf32>
    %cst_81 = arith.constant dense<0.000000e+00> : vector<8xf32>
    %169 = vector.multi_reduction <add>, %168, %cst_81 [0] : vector<8x8xf32> to vector<8xf32>
    %170 = vector.shape_cast %169 : vector<8xf32> to vector<1x8xf32>
    %cst_82 = arith.constant 8.000000e+00 : f32
    %171 = vector.broadcast %cst_82 : f32 to vector<1x8xf32>
    %172 = arith.divf %170, %171 : vector<1x8xf32>
    %173 = vector.shape_cast %172 : vector<1x8xf32> to vector<1x1x8xf32>
    %c0_83 = arith.constant 0 : index
    %c0_84 = arith.constant 0 : index
    %c0_85 = arith.constant 0 : index
    %174 = vector.load %arg16[%c0_83, %c0_84, %c0_85] : memref<1x1x8xf32, #tpu.memory_space<vmem>>, vector<1x1x8xf32>
    tpu.vector_store %arg16[%c0_83, %c0_84, %c0_85], %173 {strides = array<i32>} : memref<1x1x8xf32, #tpu.memory_space<vmem>>, vector<1x1x8xf32>,
    return
  }
  func.func @transform_0(%arg0: i32) -> (i32, i32, i32) {
    %c0_i32 = arith.constant 0 : i32
    %c0_i32_0 = arith.constant 0 : i32
    %c0_i32_1 = arith.constant 0 : i32
    return %arg0, %c0_i32, %c0_i32_0 : i32, i32, i32
  }
  func.func @transform_1(%arg0: i32) -> (i32, i32, i32) {
    %c0_i32 = arith.constant 0 : i32
    %c0_i32_0 = arith.constant 0 : i32
    %c0_i32_1 = arith.constant 0 : i32
    return %arg0, %c0_i32, %c0_i32_0 : i32, i32, i32
  }
  func.func @transform_2(%arg0: i32) -> (i32, i32, i32) {
    %c0_i32 = arith.constant 0 : i32
    %c0_i32_0 = arith.constant 0 : i32
    %c0_i32_1 = arith.constant 0 : i32
    return %arg0, %c0_i32, %c0_i32_0 : i32, i32, i32
  }
  func.func @transform_3(%arg0: i32) -> (i32, i32) {
    %c0_i32 = arith.constant 0 : i32
    %c0_i32_0 = arith.constant 0 : i32
    %c0_i32_1 = arith.constant 0 : i32
    return %c0_i32, %c0_i32_0 : i32, i32
  }
  func.func @transform_4(%arg0: i32) -> (i32, i32) {
    %c0_i32 = arith.constant 0 : i32
    %c0_i32_0 = arith.constant 0 : i32
    %c0_i32_1 = arith.constant 0 : i32
    return %c0_i32, %c0_i32_0 : i32, i32
  }
  func.func @transform_5(%arg0: i32) -> (i32, i32) {
    %c0_i32 = arith.constant 0 : i32
    %c0_i32_0 = arith.constant 0 : i32
    %c0_i32_1 = arith.constant 0 : i32
    return %c0_i32, %c0_i32_0 : i32, i32
  }
  func.func @transform_6(%arg0: i32) -> (i32, i32) {
    %c0_i32 = arith.constant 0 : i32
    %c0_i32_0 = arith.constant 0 : i32
    %c0_i32_1 = arith.constant 0 : i32
    return %c0_i32, %c0_i32_0 : i32, i32
  }
  func.func @transform_7(%arg0: i32) -> (i32, i32) {
    %c0_i32 = arith.constant 0 : i32
    %c0_i32_0 = arith.constant 0 : i32
    %c0_i32_1 = arith.constant 0 : i32
    return %c0_i32, %c0_i32_0 : i32, i32
  }
  func.func @transform_8(%arg0: i32) -> (i32, i32) {
    %c0_i32 = arith.constant 0 : i32
    %c0_i32_0 = arith.constant 0 : i32
    %c0_i32_1 = arith.constant 0 : i32
    return %c0_i32, %c0_i32_0 : i32, i32
  }
  func.func @transform_9(%arg0: i32) -> (i32, i32) {
    %c0_i32 = arith.constant 0 : i32
    %c0_i32_0 = arith.constant 0 : i32
    %c0_i32_1 = arith.constant 0 : i32
    return %c0_i32, %c0_i32_0 : i32, i32
  }
  func.func @transform_10(%arg0: i32) -> (i32, i32) {
    %c0_i32 = arith.constant 0 : i32
    %c0_i32_0 = arith.constant 0 : i32
    %c0_i32_1 = arith.constant 0 : i32
    return %c0_i32, %c0_i32_0 : i32, i32
  }
  func.func @transform_11(%arg0: i32) -> (i32, i32) {
    %c0_i32 = arith.constant 0 : i32
    %c0_i32_0 = arith.constant 0 : i32
    %c0_i32_1 = arith.constant 0 : i32
    return %c0_i32, %c0_i32_0 : i32, i32
  }
  func.func @transform_12(%arg0: i32) -> (i32, i32, i32) {
    %c0_i32 = arith.constant 0 : i32
    %c0_i32_0 = arith.constant 0 : i32
    %c0_i32_1 = arith.constant 0 : i32
    return %arg0, %c0_i32, %c0_i32_0 : i32, i32, i32
  }
  func.func @transform_13(%arg0: i32) -> (i32, i32, i32) {
    %c0_i32 = arith.constant 0 : i32
    %c0_i32_0 = arith.constant 0 : i32
    %c0_i32_1 = arith.constant 0 : i32
    return %arg0, %c0_i32, %c0_i32_0 : i32, i32, i32
  }
  func.func @transform_14(%arg0: i32) -> (i32, i32, i32) {
    %c0_i32 = arith.constant 0 : i32
    %c0_i32_0 = arith.constant 0 : i32
    %c0_i32_1 = arith.constant 0 : i32
    return %arg0, %c0_i32, %c0_i32_0 : i32, i32, i32
  }
  func.func @transform_15(%arg0: i32) -> (i32, i32, i32) {
    %c0_i32 = arith.constant 0 : i32
    %c0_i32_0 = arith.constant 0 : i32
    %c0_i32_1 = arith.constant 0 : i32
    return %arg0, %c0_i32, %c0_i32_0 : i32, i32, i32
  }
}

module attributes {stable_mosaic.version = 11 : i64} {
  func.func @_clim_maskhead_kernel(%arg0: i32, %arg1: memref<1x16x64xbf16, #tpu.memory_space<vmem>>, %arg2: memref<1x64x64xbf16, #tpu.memory_space<vmem>>, %arg3: memref<1x6x64xbf16, #tpu.memory_space<vmem>>, %arg4: memref<1x8x64xbf16, #tpu.memory_space<vmem>>, %arg5: memref<1x1x8xbf16, #tpu.memory_space<vmem>>, %arg6: memref<9x16x16xbf16, #tpu.memory_space<vmem>>, %arg7: memref<64x288xbf16, #tpu.memory_space<vmem>>, %arg8: memref<32x144xbf16, #tpu.memory_space<vmem>>, %arg9: memref<16x256xbf16, #tpu.memory_space<vmem>>, %arg10: memref<8x32xf32, #tpu.memory_space<vmem>>, %arg11: memref<1x1x256xf32, #tpu.memory_space<vmem>>, %arg12: memref<1x1x1xf32, #tpu.memory_space<vmem>>) attributes {dimension_semantics = [#tpu.dimension_semantics<parallel>], iteration_bounds = array<i64: 2>, scalar_prefetch = 0 : i64, scratch_operands = 0 : i64, tpu.core_type = #tpu.core_type<tc>, window_params = [{transform_indices = @transform_0, window_bounds = array<i64: 1, 16, 64>}, {transform_indices = @transform_1, window_bounds = array<i64: 1, 64, 64>}, {transform_indices = @transform_2, window_bounds = array<i64: 1, 6, 64>}, {transform_indices = @transform_3, window_bounds = array<i64: 1, 8, 64>}, {transform_indices = @transform_4, window_bounds = array<i64: 1, 1, 8>}, {pipeline_mode = #tpu.pipeline_mode<synchronous>, transform_indices = @transform_5, window_bounds = array<i64: 9, 16, 16>}, {pipeline_mode = #tpu.pipeline_mode<synchronous>, transform_indices = @transform_6, window_bounds = array<i64: 64, 288>}, {pipeline_mode = #tpu.pipeline_mode<synchronous>, transform_indices = @transform_7, window_bounds = array<i64: 32, 144>}, {pipeline_mode = #tpu.pipeline_mode<synchronous>, transform_indices = @transform_8, window_bounds = array<i64: 16, 256>}, {pipeline_mode = #tpu.pipeline_mode<synchronous>, transform_indices = @transform_9, window_bounds = array<i64: 8, 32>}, {transform_indices = @transform_10, window_bounds = array<i64: 1, 1, 256>}, {transform_indices = @transform_11, window_bounds = array<i64: 1, 1, 1>}]} {
    %c0 = arith.constant 0 : index
    %c0_0 = arith.constant 0 : index
    %c0_1 = arith.constant 0 : index
    %0 = vector.load %arg3[%c0, %c0_0, %c0_1] : memref<1x6x64xbf16, #tpu.memory_space<vmem>>, vector<1x6x64xbf16>
    %1 = vector.shape_cast %0 : vector<1x6x64xbf16> to vector<6x64xbf16>
    %c0_2 = arith.constant 0 : index
    %c0_3 = arith.constant 0 : index
    %c0_4 = arith.constant 0 : index
    %2 = vector.load %arg2[%c0_2, %c0_3, %c0_4] : memref<1x64x64xbf16, #tpu.memory_space<vmem>>, vector<1x64x64xbf16>
    %3 = vector.shape_cast %2 : vector<1x64x64xbf16> to vector<64x64xbf16>
    %cst = arith.constant dense<0.000000e+00> : vector<6x64xf32>
    %4 = tpu.matmul %1, %3, %cst {dimension_numbers = #tpu.dot_dimension_numbers<[1], [0], [0], [1], [0, 0, 1, 1], [], []>} : vector<6x64xbf16>, vector<64x64xbf16>, vector<6x64xf32> -> vector<6x64xf32>
    %c0_5 = arith.constant 0 : index
    %c0_6 = arith.constant 0 : index
    %c0_7 = arith.constant 0 : index
    %5 = vector.load %arg5[%c0_5, %c0_6, %c0_7] : memref<1x1x8xbf16, #tpu.memory_space<vmem>>, vector<1x1x8xbf16>
    %6 = vector.shape_cast %5 : vector<1x1x8xbf16> to vector<1x8xbf16>
    %c0_8 = arith.constant 0 : index
    %c0_9 = arith.constant 0 : index
    %c0_10 = arith.constant 0 : index
    %7 = vector.load %arg4[%c0_8, %c0_9, %c0_10] : memref<1x8x64xbf16, #tpu.memory_space<vmem>>, vector<1x8x64xbf16>
    %8 = vector.shape_cast %7 : vector<1x8x64xbf16> to vector<8x64xbf16>
    %cst_11 = arith.constant dense<0.000000e+00> : vector<1x64xf32>
    %9 = tpu.matmul %6, %8, %cst_11 {dimension_numbers = #tpu.dot_dimension_numbers<[1], [0], [0], [1], [0, 0, 1, 1], [], []>} : vector<1x8xbf16>, vector<8x64xbf16>, vector<1x64xf32> -> vector<1x64xf32>
    %10 = arith.mulf %4, %4 : vector<6x64xf32>
    %cst_12 = arith.constant dense<0.000000e+00> : vector<6xf32>
    %11 = vector.multi_reduction <add>, %10, %cst_12 [1] : vector<6x64xf32> to vector<6xf32>
    %12 = vector.shape_cast %11 : vector<6xf32> to vector<6x1xf32>
    %cst_13 = arith.constant 9.99999996E-13 : f32
    %13 = vector.broadcast %cst_13 : f32 to vector<6x1xf32>
    %14 = arith.addf %12, %13 : vector<6x1xf32>
    %15 = math.rsqrt %14 : vector<6x1xf32>
    %16 = vector.broadcast %15 : vector<6x1xf32> to vector<6x64xf32>
    %17 = arith.mulf %4, %16 : vector<6x64xf32>
    %18 = arith.mulf %9, %9 : vector<1x64xf32>
    %cst_14 = arith.constant dense<0.000000e+00> : vector<1xf32>
    %19 = vector.multi_reduction <add>, %18, %cst_14 [1] : vector<1x64xf32> to vector<1xf32>
    %20 = vector.shape_cast %19 : vector<1xf32> to vector<1x1xf32>
    %cst_15 = arith.constant 9.99999996E-13 : f32
    %21 = vector.broadcast %cst_15 : f32 to vector<1x1xf32>
    %22 = arith.addf %20, %21 : vector<1x1xf32>
    %23 = math.rsqrt %22 : vector<1x1xf32>
    %24 = vector.broadcast %23 : vector<1x1xf32> to vector<1x64xf32>
    %25 = arith.mulf %9, %24 : vector<1x64xf32>
    %26 = arith.truncf %17 : vector<6x64xf32> to vector<6x64xbf16>
    %27 = arith.truncf %25 : vector<1x64xf32> to vector<1x64xbf16>
    %28 = tpu.transpose %27, [1, 0] : vector<1x64xbf16> -> vector<64x1xbf16>
    %cst_16 = arith.constant dense<0.000000e+00> : vector<6x1xf32>
    %29 = tpu.matmul %26, %28, %cst_16 {dimension_numbers = #tpu.dot_dimension_numbers<[1], [0], [0], [1], [0, 0, 1, 1], [], []>} : vector<6x64xbf16>, vector<64x1xbf16>, vector<6x1xf32> -> vector<6x1xf32>
    %cst_17 = arith.constant dense<0xFF800000> : vector<6xf32>
    %30 = vector.multi_reduction <maximumf>, %29, %cst_17 [1] : vector<6x1xf32> to vector<6xf32>
    %31 = vector.shape_cast %30 : vector<6xf32> to vector<6x1xf32>
    %cst_18 = arith.constant dense<0.000000e+00> : vector<1xf32>
    %32 = vector.multi_reduction <add>, %31, %cst_18 [0] : vector<6x1xf32> to vector<1xf32>
    %33 = vector.shape_cast %32 : vector<1xf32> to vector<1x1xf32>
    %cst_19 = arith.constant 6.000000e+00 : f32
    %34 = vector.broadcast %cst_19 : f32 to vector<1x1xf32>
    %35 = arith.divf %33, %34 : vector<1x1xf32>
    %cst_20 = arith.constant dense<0xFF800000> : vector<1xf32>
    %36 = vector.multi_reduction <maximumf>, %29, %cst_20 [0] : vector<6x1xf32> to vector<1xf32>
    %37 = vector.shape_cast %36 : vector<1xf32> to vector<1x1xf32>
    %cst_21 = arith.constant dense<0.000000e+00> : vector<1xf32>
    %38 = vector.multi_reduction <add>, %37, %cst_21 [1] : vector<1x1xf32> to vector<1xf32>
    %39 = vector.shape_cast %38 : vector<1xf32> to vector<1x1xf32>
    %cst_22 = arith.constant 1.000000e+00 : f32
    %40 = vector.broadcast %cst_22 : f32 to vector<1x1xf32>
    %41 = arith.divf %39, %40 : vector<1x1xf32>
    %42 = arith.addf %35, %41 : vector<1x1xf32>
    %cst_23 = arith.constant 5.000000e-01 : f32
    %43 = vector.broadcast %cst_23 : f32 to vector<1x1xf32>
    %44 = arith.mulf %42, %43 : vector<1x1xf32>
    %45 = vector.shape_cast %44 : vector<1x1xf32> to vector<1x1x1xf32>
    %c0_24 = arith.constant 0 : index
    %c0_25 = arith.constant 0 : index
    %c0_26 = arith.constant 0 : index
    %46 = vector.load %arg12[%c0_24, %c0_25, %c0_26] : memref<1x1x1xf32, #tpu.memory_space<vmem>>, vector<1x1x1xf32>
    tpu.vector_store %arg12[%c0_24, %c0_25, %c0_26], %45 {strides = array<i32>} : memref<1x1x1xf32, #tpu.memory_space<vmem>>, vector<1x1x1xf32>,
    %c0_27 = arith.constant 0 : index
    %c0_28 = arith.constant 0 : index
    %c0_29 = arith.constant 0 : index
    %47 = vector.load %arg1[%c0_27, %c0_28, %c0_29] : memref<1x16x64xbf16, #tpu.memory_space<vmem>>, vector<1x16x64xbf16>
    %48 = vector.shape_cast %47 : vector<1x16x64xbf16> to vector<16x64xbf16>
    %c0_30 = arith.constant 0 : index
    %c0_31 = arith.constant 0 : index
    %49 = vector.load %arg7[%c0_30, %c0_31] : memref<64x288xbf16, #tpu.memory_space<vmem>>, vector<64x288xbf16>
    %cst_32 = arith.constant dense<0.000000e+00> : vector<16x288xf32>
    %50 = tpu.matmul %48, %49, %cst_32 {dimension_numbers = #tpu.dot_dimension_numbers<[1], [0], [0], [1], [0, 0, 1, 1], [], []>} : vector<16x64xbf16>, vector<64x288xbf16>, vector<16x288xf32> -> vector<16x288xf32>
    %51 = arith.truncf %50 : vector<16x288xf32> to vector<16x288xbf16>
    %cst_33 = arith.constant 0.000000e+00 : f32
    %52 = vector.broadcast %cst_33 : f32 to vector<16x32xf32>
    %c0_34 = arith.constant 0 : index
    %c0_35 = arith.constant 0 : index
    %c0_36 = arith.constant 0 : index
    %53 = vector.load %arg6[%c0_34, %c0_35, %c0_36] : memref<9x16x16xbf16, #tpu.memory_space<vmem>>, vector<1x16x16xbf16>
    %54 = vector.shape_cast %53 : vector<1x16x16xbf16> to vector<16x16xbf16>
    %55 = vector.extract_strided_slice %51 {offsets = [0, 0], sizes = [16, 32], strides = [1, 1]} : vector<16x288xbf16> to vector<16x32xbf16>
    %cst_37 = arith.constant dense<0.000000e+00> : vector<16x32xf32>
    %56 = tpu.matmul %54, %55, %cst_37 {dimension_numbers = #tpu.dot_dimension_numbers<[1], [0], [0], [1], [0, 0, 1, 1], [], []>} : vector<16x16xbf16>, vector<16x32xbf16>, vector<16x32xf32> -> vector<16x32xf32>
    %57 = arith.addf %52, %56 : vector<16x32xf32>
    %c1 = arith.constant 1 : index
    %c0_38 = arith.constant 0 : index
    %c0_39 = arith.constant 0 : index
    %58 = vector.load %arg6[%c1, %c0_38, %c0_39] : memref<9x16x16xbf16, #tpu.memory_space<vmem>>, vector<1x16x16xbf16>
    %59 = vector.shape_cast %58 : vector<1x16x16xbf16> to vector<16x16xbf16>
    %60 = vector.extract_strided_slice %51 {offsets = [0, 32], sizes = [16, 32], strides = [1, 1]} : vector<16x288xbf16> to vector<16x32xbf16>
    %cst_40 = arith.constant dense<0.000000e+00> : vector<16x32xf32>
    %61 = tpu.matmul %59, %60, %cst_40 {dimension_numbers = #tpu.dot_dimension_numbers<[1], [0], [0], [1], [0, 0, 1, 1], [], []>} : vector<16x16xbf16>, vector<16x32xbf16>, vector<16x32xf32> -> vector<16x32xf32>
    %62 = arith.addf %57, %61 : vector<16x32xf32>
    %c2 = arith.constant 2 : index
    %c0_41 = arith.constant 0 : index
    %c0_42 = arith.constant 0 : index
    %63 = vector.load %arg6[%c2, %c0_41, %c0_42] : memref<9x16x16xbf16, #tpu.memory_space<vmem>>, vector<1x16x16xbf16>
    %64 = vector.shape_cast %63 : vector<1x16x16xbf16> to vector<16x16xbf16>
    %65 = vector.extract_strided_slice %51 {offsets = [0, 64], sizes = [16, 32], strides = [1, 1]} : vector<16x288xbf16> to vector<16x32xbf16>
    %cst_43 = arith.constant dense<0.000000e+00> : vector<16x32xf32>
    %66 = tpu.matmul %64, %65, %cst_43 {dimension_numbers = #tpu.dot_dimension_numbers<[1], [0], [0], [1], [0, 0, 1, 1], [], []>} : vector<16x16xbf16>, vector<16x32xbf16>, vector<16x32xf32> -> vector<16x32xf32>
    %67 = arith.addf %62, %66 : vector<16x32xf32>
    %c3 = arith.constant 3 : index
    %c0_44 = arith.constant 0 : index
    %c0_45 = arith.constant 0 : index
    %68 = vector.load %arg6[%c3, %c0_44, %c0_45] : memref<9x16x16xbf16, #tpu.memory_space<vmem>>, vector<1x16x16xbf16>
    %69 = vector.shape_cast %68 : vector<1x16x16xbf16> to vector<16x16xbf16>
    %70 = vector.extract_strided_slice %51 {offsets = [0, 96], sizes = [16, 32], strides = [1, 1]} : vector<16x288xbf16> to vector<16x32xbf16>
    %cst_46 = arith.constant dense<0.000000e+00> : vector<16x32xf32>
    %71 = tpu.matmul %69, %70, %cst_46 {dimension_numbers = #tpu.dot_dimension_numbers<[1], [0], [0], [1], [0, 0, 1, 1], [], []>} : vector<16x16xbf16>, vector<16x32xbf16>, vector<16x32xf32> -> vector<16x32xf32>
    %72 = arith.addf %67, %71 : vector<16x32xf32>
    %c4 = arith.constant 4 : index
    %c0_47 = arith.constant 0 : index
    %c0_48 = arith.constant 0 : index
    %73 = vector.load %arg6[%c4, %c0_47, %c0_48] : memref<9x16x16xbf16, #tpu.memory_space<vmem>>, vector<1x16x16xbf16>
    %74 = vector.shape_cast %73 : vector<1x16x16xbf16> to vector<16x16xbf16>
    %75 = vector.extract_strided_slice %51 {offsets = [0, 128], sizes = [16, 32], strides = [1, 1]} : vector<16x288xbf16> to vector<16x32xbf16>
    %cst_49 = arith.constant dense<0.000000e+00> : vector<16x32xf32>
    %76 = tpu.matmul %74, %75, %cst_49 {dimension_numbers = #tpu.dot_dimension_numbers<[1], [0], [0], [1], [0, 0, 1, 1], [], []>} : vector<16x16xbf16>, vector<16x32xbf16>, vector<16x32xf32> -> vector<16x32xf32>
    %77 = arith.addf %72, %76 : vector<16x32xf32>
    %c5 = arith.constant 5 : index
    %c0_50 = arith.constant 0 : index
    %c0_51 = arith.constant 0 : index
    %78 = vector.load %arg6[%c5, %c0_50, %c0_51] : memref<9x16x16xbf16, #tpu.memory_space<vmem>>, vector<1x16x16xbf16>
    %79 = vector.shape_cast %78 : vector<1x16x16xbf16> to vector<16x16xbf16>
    %80 = vector.extract_strided_slice %51 {offsets = [0, 160], sizes = [16, 32], strides = [1, 1]} : vector<16x288xbf16> to vector<16x32xbf16>
    %cst_52 = arith.constant dense<0.000000e+00> : vector<16x32xf32>
    %81 = tpu.matmul %79, %80, %cst_52 {dimension_numbers = #tpu.dot_dimension_numbers<[1], [0], [0], [1], [0, 0, 1, 1], [], []>} : vector<16x16xbf16>, vector<16x32xbf16>, vector<16x32xf32> -> vector<16x32xf32>
    %82 = arith.addf %77, %81 : vector<16x32xf32>
    %c6 = arith.constant 6 : index
    %c0_53 = arith.constant 0 : index
    %c0_54 = arith.constant 0 : index
    %83 = vector.load %arg6[%c6, %c0_53, %c0_54] : memref<9x16x16xbf16, #tpu.memory_space<vmem>>, vector<1x16x16xbf16>
    %84 = vector.shape_cast %83 : vector<1x16x16xbf16> to vector<16x16xbf16>
    %85 = vector.extract_strided_slice %51 {offsets = [0, 192], sizes = [16, 32], strides = [1, 1]} : vector<16x288xbf16> to vector<16x32xbf16>
    %cst_55 = arith.constant dense<0.000000e+00> : vector<16x32xf32>
    %86 = tpu.matmul %84, %85, %cst_55 {dimension_numbers = #tpu.dot_dimension_numbers<[1], [0], [0], [1], [0, 0, 1, 1], [], []>} : vector<16x16xbf16>, vector<16x32xbf16>, vector<16x32xf32> -> vector<16x32xf32>
    %87 = arith.addf %82, %86 : vector<16x32xf32>
    %c7 = arith.constant 7 : index
    %c0_56 = arith.constant 0 : index
    %c0_57 = arith.constant 0 : index
    %88 = vector.load %arg6[%c7, %c0_56, %c0_57] : memref<9x16x16xbf16, #tpu.memory_space<vmem>>, vector<1x16x16xbf16>
    %89 = vector.shape_cast %88 : vector<1x16x16xbf16> to vector<16x16xbf16>
    %90 = vector.extract_strided_slice %51 {offsets = [0, 224], sizes = [16, 32], strides = [1, 1]} : vector<16x288xbf16> to vector<16x32xbf16>
    %cst_58 = arith.constant dense<0.000000e+00> : vector<16x32xf32>
    %91 = tpu.matmul %89, %90, %cst_58 {dimension_numbers = #tpu.dot_dimension_numbers<[1], [0], [0], [1], [0, 0, 1, 1], [], []>} : vector<16x16xbf16>, vector<16x32xbf16>, vector<16x32xf32> -> vector<16x32xf32>
    %92 = arith.addf %87, %91 : vector<16x32xf32>
    %c8 = arith.constant 8 : index
    %c0_59 = arith.constant 0 : index
    %c0_60 = arith.constant 0 : index
    %93 = vector.load %arg6[%c8, %c0_59, %c0_60] : memref<9x16x16xbf16, #tpu.memory_space<vmem>>, vector<1x16x16xbf16>
    %94 = vector.shape_cast %93 : vector<1x16x16xbf16> to vector<16x16xbf16>
    %95 = vector.extract_strided_slice %51 {offsets = [0, 256], sizes = [16, 32], strides = [1, 1]} : vector<16x288xbf16> to vector<16x32xbf16>
    %cst_61 = arith.constant dense<0.000000e+00> : vector<16x32xf32>
    %96 = tpu.matmul %94, %95, %cst_61 {dimension_numbers = #tpu.dot_dimension_numbers<[1], [0], [0], [1], [0, 0, 1, 1], [], []>} : vector<16x16xbf16>, vector<16x32xbf16>, vector<16x32xf32> -> vector<16x32xf32>
    %97 = arith.addf %92, %96 : vector<16x32xf32>
    %c0_62 = arith.constant 0 : index
    %c0_63 = arith.constant 0 : index
    %98 = vector.load %arg10[%c0_62, %c0_63] : memref<8x32xf32, #tpu.memory_space<vmem>>, vector<1x32xf32>
    %99 = vector.broadcast %98 : vector<1x32xf32> to vector<16x32xf32>
    %100 = arith.addf %97, %99 : vector<16x32xf32>
    %cst_64 = arith.constant 0.000000e+00 : f32
    %101 = vector.broadcast %cst_64 : f32 to vector<16x32xf32>
    %102 = arith.maximumf %100, %101 : vector<16x32xf32>
    %103 = arith.truncf %102 : vector<16x32xf32> to vector<16x32xbf16>
    %c0_65 = arith.constant 0 : index
    %c0_66 = arith.constant 0 : index
    %104 = vector.load %arg8[%c0_65, %c0_66] : memref<32x144xbf16, #tpu.memory_space<vmem>>, vector<32x144xbf16>
    %cst_67 = arith.constant dense<0.000000e+00> : vector<16x144xf32>
    %105 = tpu.matmul %103, %104, %cst_67 {dimension_numbers = #tpu.dot_dimension_numbers<[1], [0], [0], [1], [0, 0, 1, 1], [], []>} : vector<16x32xbf16>, vector<32x144xbf16>, vector<16x144xf32> -> vector<16x144xf32>
    %106 = arith.truncf %105 : vector<16x144xf32> to vector<16x144xbf16>
    %cst_68 = arith.constant 0.000000e+00 : f32
    %107 = vector.broadcast %cst_68 : f32 to vector<16x16xf32>
    %c0_69 = arith.constant 0 : index
    %c0_70 = arith.constant 0 : index
    %c0_71 = arith.constant 0 : index
    %108 = vector.load %arg6[%c0_69, %c0_70, %c0_71] : memref<9x16x16xbf16, #tpu.memory_space<vmem>>, vector<1x16x16xbf16>
    %109 = vector.shape_cast %108 : vector<1x16x16xbf16> to vector<16x16xbf16>
    %110 = vector.extract_strided_slice %106 {offsets = [0, 0], sizes = [16, 16], strides = [1, 1]} : vector<16x144xbf16> to vector<16x16xbf16>
    %cst_72 = arith.constant dense<0.000000e+00> : vector<16x16xf32>
    %111 = tpu.matmul %109, %110, %cst_72 {dimension_numbers = #tpu.dot_dimension_numbers<[1], [0], [0], [1], [0, 0, 1, 1], [], []>} : vector<16x16xbf16>, vector<16x16xbf16>, vector<16x16xf32> -> vector<16x16xf32>
    %112 = arith.addf %107, %111 : vector<16x16xf32>
    %c1_73 = arith.constant 1 : index
    %c0_74 = arith.constant 0 : index
    %c0_75 = arith.constant 0 : index
    %113 = vector.load %arg6[%c1_73, %c0_74, %c0_75] : memref<9x16x16xbf16, #tpu.memory_space<vmem>>, vector<1x16x16xbf16>
    %114 = vector.shape_cast %113 : vector<1x16x16xbf16> to vector<16x16xbf16>
    %115 = vector.extract_strided_slice %106 {offsets = [0, 16], sizes = [16, 16], strides = [1, 1]} : vector<16x144xbf16> to vector<16x16xbf16>
    %cst_76 = arith.constant dense<0.000000e+00> : vector<16x16xf32>
    %116 = tpu.matmul %114, %115, %cst_76 {dimension_numbers = #tpu.dot_dimension_numbers<[1], [0], [0], [1], [0, 0, 1, 1], [], []>} : vector<16x16xbf16>, vector<16x16xbf16>, vector<16x16xf32> -> vector<16x16xf32>
    %117 = arith.addf %112, %116 : vector<16x16xf32>
    %c2_77 = arith.constant 2 : index
    %c0_78 = arith.constant 0 : index
    %c0_79 = arith.constant 0 : index
    %118 = vector.load %arg6[%c2_77, %c0_78, %c0_79] : memref<9x16x16xbf16, #tpu.memory_space<vmem>>, vector<1x16x16xbf16>
    %119 = vector.shape_cast %118 : vector<1x16x16xbf16> to vector<16x16xbf16>
    %120 = vector.extract_strided_slice %106 {offsets = [0, 32], sizes = [16, 16], strides = [1, 1]} : vector<16x144xbf16> to vector<16x16xbf16>
    %cst_80 = arith.constant dense<0.000000e+00> : vector<16x16xf32>
    %121 = tpu.matmul %119, %120, %cst_80 {dimension_numbers = #tpu.dot_dimension_numbers<[1], [0], [0], [1], [0, 0, 1, 1], [], []>} : vector<16x16xbf16>, vector<16x16xbf16>, vector<16x16xf32> -> vector<16x16xf32>
    %122 = arith.addf %117, %121 : vector<16x16xf32>
    %c3_81 = arith.constant 3 : index
    %c0_82 = arith.constant 0 : index
    %c0_83 = arith.constant 0 : index
    %123 = vector.load %arg6[%c3_81, %c0_82, %c0_83] : memref<9x16x16xbf16, #tpu.memory_space<vmem>>, vector<1x16x16xbf16>
    %124 = vector.shape_cast %123 : vector<1x16x16xbf16> to vector<16x16xbf16>
    %125 = vector.extract_strided_slice %106 {offsets = [0, 48], sizes = [16, 16], strides = [1, 1]} : vector<16x144xbf16> to vector<16x16xbf16>
    %cst_84 = arith.constant dense<0.000000e+00> : vector<16x16xf32>
    %126 = tpu.matmul %124, %125, %cst_84 {dimension_numbers = #tpu.dot_dimension_numbers<[1], [0], [0], [1], [0, 0, 1, 1], [], []>} : vector<16x16xbf16>, vector<16x16xbf16>, vector<16x16xf32> -> vector<16x16xf32>
    %127 = arith.addf %122, %126 : vector<16x16xf32>
    %c4_85 = arith.constant 4 : index
    %c0_86 = arith.constant 0 : index
    %c0_87 = arith.constant 0 : index
    %128 = vector.load %arg6[%c4_85, %c0_86, %c0_87] : memref<9x16x16xbf16, #tpu.memory_space<vmem>>, vector<1x16x16xbf16>
    %129 = vector.shape_cast %128 : vector<1x16x16xbf16> to vector<16x16xbf16>
    %130 = vector.extract_strided_slice %106 {offsets = [0, 64], sizes = [16, 16], strides = [1, 1]} : vector<16x144xbf16> to vector<16x16xbf16>
    %cst_88 = arith.constant dense<0.000000e+00> : vector<16x16xf32>
    %131 = tpu.matmul %129, %130, %cst_88 {dimension_numbers = #tpu.dot_dimension_numbers<[1], [0], [0], [1], [0, 0, 1, 1], [], []>} : vector<16x16xbf16>, vector<16x16xbf16>, vector<16x16xf32> -> vector<16x16xf32>
    %132 = arith.addf %127, %131 : vector<16x16xf32>
    %c5_89 = arith.constant 5 : index
    %c0_90 = arith.constant 0 : index
    %c0_91 = arith.constant 0 : index
    %133 = vector.load %arg6[%c5_89, %c0_90, %c0_91] : memref<9x16x16xbf16, #tpu.memory_space<vmem>>, vector<1x16x16xbf16>
    %134 = vector.shape_cast %133 : vector<1x16x16xbf16> to vector<16x16xbf16>
    %135 = vector.extract_strided_slice %106 {offsets = [0, 80], sizes = [16, 16], strides = [1, 1]} : vector<16x144xbf16> to vector<16x16xbf16>
    %cst_92 = arith.constant dense<0.000000e+00> : vector<16x16xf32>
    %136 = tpu.matmul %134, %135, %cst_92 {dimension_numbers = #tpu.dot_dimension_numbers<[1], [0], [0], [1], [0, 0, 1, 1], [], []>} : vector<16x16xbf16>, vector<16x16xbf16>, vector<16x16xf32> -> vector<16x16xf32>
    %137 = arith.addf %132, %136 : vector<16x16xf32>
    %c6_93 = arith.constant 6 : index
    %c0_94 = arith.constant 0 : index
    %c0_95 = arith.constant 0 : index
    %138 = vector.load %arg6[%c6_93, %c0_94, %c0_95] : memref<9x16x16xbf16, #tpu.memory_space<vmem>>, vector<1x16x16xbf16>
    %139 = vector.shape_cast %138 : vector<1x16x16xbf16> to vector<16x16xbf16>
    %140 = vector.extract_strided_slice %106 {offsets = [0, 96], sizes = [16, 16], strides = [1, 1]} : vector<16x144xbf16> to vector<16x16xbf16>
    %cst_96 = arith.constant dense<0.000000e+00> : vector<16x16xf32>
    %141 = tpu.matmul %139, %140, %cst_96 {dimension_numbers = #tpu.dot_dimension_numbers<[1], [0], [0], [1], [0, 0, 1, 1], [], []>} : vector<16x16xbf16>, vector<16x16xbf16>, vector<16x16xf32> -> vector<16x16xf32>
    %142 = arith.addf %137, %141 : vector<16x16xf32>
    %c7_97 = arith.constant 7 : index
    %c0_98 = arith.constant 0 : index
    %c0_99 = arith.constant 0 : index
    %143 = vector.load %arg6[%c7_97, %c0_98, %c0_99] : memref<9x16x16xbf16, #tpu.memory_space<vmem>>, vector<1x16x16xbf16>
    %144 = vector.shape_cast %143 : vector<1x16x16xbf16> to vector<16x16xbf16>
    %145 = vector.extract_strided_slice %106 {offsets = [0, 112], sizes = [16, 16], strides = [1, 1]} : vector<16x144xbf16> to vector<16x16xbf16>
    %cst_100 = arith.constant dense<0.000000e+00> : vector<16x16xf32>
    %146 = tpu.matmul %144, %145, %cst_100 {dimension_numbers = #tpu.dot_dimension_numbers<[1], [0], [0], [1], [0, 0, 1, 1], [], []>} : vector<16x16xbf16>, vector<16x16xbf16>, vector<16x16xf32> -> vector<16x16xf32>
    %147 = arith.addf %142, %146 : vector<16x16xf32>
    %c8_101 = arith.constant 8 : index
    %c0_102 = arith.constant 0 : index
    %c0_103 = arith.constant 0 : index
    %148 = vector.load %arg6[%c8_101, %c0_102, %c0_103] : memref<9x16x16xbf16, #tpu.memory_space<vmem>>, vector<1x16x16xbf16>
    %149 = vector.shape_cast %148 : vector<1x16x16xbf16> to vector<16x16xbf16>
    %150 = vector.extract_strided_slice %106 {offsets = [0, 128], sizes = [16, 16], strides = [1, 1]} : vector<16x144xbf16> to vector<16x16xbf16>
    %cst_104 = arith.constant dense<0.000000e+00> : vector<16x16xf32>
    %151 = tpu.matmul %149, %150, %cst_104 {dimension_numbers = #tpu.dot_dimension_numbers<[1], [0], [0], [1], [0, 0, 1, 1], [], []>} : vector<16x16xbf16>, vector<16x16xbf16>, vector<16x16xf32> -> vector<16x16xf32>
    %152 = arith.addf %147, %151 : vector<16x16xf32>
    %c1_105 = arith.constant 1 : index
    %c0_106 = arith.constant 0 : index
    %153 = vector.load %arg10[%c1_105, %c0_106] : memref<8x32xf32, #tpu.memory_space<vmem>>, vector<1x16xf32>
    %154 = vector.broadcast %153 : vector<1x16xf32> to vector<16x16xf32>
    %155 = arith.addf %152, %154 : vector<16x16xf32>
    %cst_107 = arith.constant 0.000000e+00 : f32
    %156 = vector.broadcast %cst_107 : f32 to vector<16x16xf32>
    %157 = arith.maximumf %155, %156 : vector<16x16xf32>
    %c2_108 = arith.constant 2 : index
    %c0_109 = arith.constant 0 : index
    %158 = vector.load %arg10[%c2_108, %c0_109] : memref<8x32xf32, #tpu.memory_space<vmem>>, vector<1x16xf32>
    %159 = vector.broadcast %158 : vector<1x16xf32> to vector<16x16xf32>
    %160 = arith.mulf %157, %159 : vector<16x16xf32>
    %cst_110 = arith.constant dense<0.000000e+00> : vector<16xf32>
    %161 = vector.multi_reduction <add>, %160, %cst_110 [1] : vector<16x16xf32> to vector<16xf32>
    %162 = vector.shape_cast %161 : vector<16xf32> to vector<16x1xf32>
    %c3_111 = arith.constant 3 : index
    %c0_112 = arith.constant 0 : index
    %163 = vector.load %arg10[%c3_111, %c0_112] : memref<8x32xf32, #tpu.memory_space<vmem>>, vector<1x1xf32>
    %164 = vector.broadcast %163 : vector<1x1xf32> to vector<16x1xf32>
    %165 = arith.addf %162, %164 : vector<16x1xf32>
    %166 = tpu.transpose %165, [1, 0] : vector<16x1xf32> -> vector<1x16xf32>
    %167 = arith.truncf %166 : vector<1x16xf32> to vector<1x16xbf16>
    %c0_113 = arith.constant 0 : index
    %c0_114 = arith.constant 0 : index
    %168 = vector.load %arg9[%c0_113, %c0_114] : memref<16x256xbf16, #tpu.memory_space<vmem>>, vector<16x256xbf16>
    %cst_115 = arith.constant dense<0.000000e+00> : vector<1x256xf32>
    %169 = tpu.matmul %167, %168, %cst_115 {dimension_numbers = #tpu.dot_dimension_numbers<[1], [0], [0], [1], [0, 0, 1, 1], [], []>} : vector<1x16xbf16>, vector<16x256xbf16>, vector<1x256xf32> -> vector<1x256xf32>
    %c4_116 = arith.constant 4 : index
    %c0_117 = arith.constant 0 : index
    %170 = vector.load %arg10[%c4_116, %c0_117] : memref<8x32xf32, #tpu.memory_space<vmem>>, vector<1x1xf32>
    %171 = vector.broadcast %170 : vector<1x1xf32> to vector<1x256xf32>
    %172 = arith.addf %169, %171 : vector<1x256xf32>
    %173 = vector.shape_cast %172 : vector<1x256xf32> to vector<1x1x256xf32>
    %c0_118 = arith.constant 0 : index
    %c0_119 = arith.constant 0 : index
    %c0_120 = arith.constant 0 : index
    %174 = vector.load %arg11[%c0_118, %c0_119, %c0_120] : memref<1x1x256xf32, #tpu.memory_space<vmem>>, vector<1x1x256xf32>
    tpu.vector_store %arg11[%c0_118, %c0_119, %c0_120], %173 {strides = array<i32>} : memref<1x1x256xf32, #tpu.memory_space<vmem>>, vector<1x1x256xf32>,
    return
  }
  func.func @transform_0(%arg0: i32) -> (i32, i32, i32) {
    %c0_i32 = arith.constant 0 : i32
    %c0_i32_0 = arith.constant 0 : i32
    %c0_i32_1 = arith.constant 0 : i32
    return %arg0, %c0_i32, %c0_i32_0 : i32, i32, i32
  }
  func.func @transform_1(%arg0: i32) -> (i32, i32, i32) {
    %c0_i32 = arith.constant 0 : i32
    %c0_i32_0 = arith.constant 0 : i32
    %c0_i32_1 = arith.constant 0 : i32
    return %arg0, %c0_i32, %c0_i32_0 : i32, i32, i32
  }
  func.func @transform_2(%arg0: i32) -> (i32, i32, i32) {
    %c0_i32 = arith.constant 0 : i32
    %c0_i32_0 = arith.constant 0 : i32
    %c0_i32_1 = arith.constant 0 : i32
    return %arg0, %c0_i32, %c0_i32_0 : i32, i32, i32
  }
  func.func @transform_3(%arg0: i32) -> (i32, i32, i32) {
    %c0_i32 = arith.constant 0 : i32
    %c0_i32_0 = arith.constant 0 : i32
    %c0_i32_1 = arith.constant 0 : i32
    return %arg0, %c0_i32, %c0_i32_0 : i32, i32, i32
  }
  func.func @transform_4(%arg0: i32) -> (i32, i32, i32) {
    %c0_i32 = arith.constant 0 : i32
    %c0_i32_0 = arith.constant 0 : i32
    %c0_i32_1 = arith.constant 0 : i32
    return %arg0, %c0_i32, %c0_i32_0 : i32, i32, i32
  }
  func.func @transform_5(%arg0: i32) -> (i32, i32, i32) {
    %c0_i32 = arith.constant 0 : i32
    %c0_i32_0 = arith.constant 0 : i32
    %c0_i32_1 = arith.constant 0 : i32
    %c0_i32_2 = arith.constant 0 : i32
    return %c0_i32, %c0_i32_0, %c0_i32_1 : i32, i32, i32
  }
  func.func @transform_6(%arg0: i32) -> (i32, i32) {
    %c0_i32 = arith.constant 0 : i32
    %c0_i32_0 = arith.constant 0 : i32
    %c0_i32_1 = arith.constant 0 : i32
    return %c0_i32, %c0_i32_0 : i32, i32
  }
  func.func @transform_7(%arg0: i32) -> (i32, i32) {
    %c0_i32 = arith.constant 0 : i32
    %c0_i32_0 = arith.constant 0 : i32
    %c0_i32_1 = arith.constant 0 : i32
    return %c0_i32, %c0_i32_0 : i32, i32
  }
  func.func @transform_8(%arg0: i32) -> (i32, i32) {
    %c0_i32 = arith.constant 0 : i32
    %c0_i32_0 = arith.constant 0 : i32
    %c0_i32_1 = arith.constant 0 : i32
    return %c0_i32, %c0_i32_0 : i32, i32
  }
  func.func @transform_9(%arg0: i32) -> (i32, i32) {
    %c0_i32 = arith.constant 0 : i32
    %c0_i32_0 = arith.constant 0 : i32
    %c0_i32_1 = arith.constant 0 : i32
    return %c0_i32, %c0_i32_0 : i32, i32
  }
  func.func @transform_10(%arg0: i32) -> (i32, i32, i32) {
    %c0_i32 = arith.constant 0 : i32
    %c0_i32_0 = arith.constant 0 : i32
    %c0_i32_1 = arith.constant 0 : i32
    return %arg0, %c0_i32, %c0_i32_0 : i32, i32, i32
  }
  func.func @transform_11(%arg0: i32) -> (i32, i32, i32) {
    %c0_i32 = arith.constant 0 : i32
    %c0_i32_0 = arith.constant 0 : i32
    %c0_i32_1 = arith.constant 0 : i32
    return %arg0, %c0_i32, %c0_i32_0 : i32, i32, i32
  }
}

</mosaic_0001>

<llo_original>
// kernel: uninext_finelip_forward.3
$region0: #{uninext_finelip_forward.3}
  #allocation0 [shape = 'u32[]', space=smem, size = 0x4, offset = 0x4, fixed_abs, tag = 'smem constant byte address 0x4 - core index']
  #allocation1 [shape = 'u32[72,128]{1,0:T(1,128)}', space=vmem, size = 0x9000, scoped, tag = 'internal scratch']
  %s0 = inlined_call_operand.vmem [shape: bf16[2,64,48], index: 0, kind: input, shape index: {}]
  %s1 = inlined_call_operand.vmem [shape: bf16[48,64], index: 1, kind: input, shape index: {}]
  %s2 = inlined_call_operand.vmem [shape: f32[8,64], index: 2, kind: input, shape index: {}]
  %s3 = inlined_call_operand.vmem [shape: bf16[2,64,64], index: 3, kind: output, shape index: {0}]
  %s4 = inlined_call_operand.vmem [shape: f32[2,1,64], index: 4, kind: output, shape index: {1}]
  %5 = xla_tuple %s3, %s4
  %s6 = sld [smem:[#allocation0]]
  $region53: #{uninext_finelip_forward.3} parent=0
    _
  %s8 = ssub.s32 1, %s6
  %s9 = scalar_select 0, %s8, %s6
  loop: start=0, step=1, limit=4
  $region2: #{uninext_finelip_forward.3} parent=0 // loop_pre_header
    _
  $region3: #{uninext_finelip_forward.3} parent=0 // loop_header
    %s11 = sphi 0, %s15
    %p12 = scmp.ge.s32.totalorder %s11, 4
    %s21 = sphi 0, %s23
    %s24 = sphi 0, %s21
    %s25 = sphi 0, %s24
    %s41 = sphi 0, %s25
    %s45 = sphi 0, %s45
    %s47 = sphi 0, %s45
    %s48 = sphi 0, %s47
    %s62 = sphi 0, %s48
    %s66 = sphi 0, %s66
    %s68 = sphi 0, %s66
    %s69 = sphi 0, %s68
    %s83 = sphi 0, %s69
    %s89 = sphi 0, %s91
    %s92 = sphi 0, %s89
    %s93 = sphi 0, %s92
    %s109 = sphi 0, %s93
    %s115 = sphi 0, %s117
    %s118 = sphi 0, %s115
    %s119 = sphi 0, %s118
    %s135 = sphi 0, %s119
  $region4: #{uninext_finelip_forward.3} parent=0 // loop_header_branch
    %14 = sbr.rel (%p12) target = $region8
  $region5: #{uninext_finelip_forward.3} parent=0 // loop_body
    %s16 = ssub.s32 %s11, 1
    %s17 = ssub.s32 %s11, 2
    %s18 = sadd.s32 %s11, 1
    %s19 = ssub.s32 %s11, %s18
    %p20 = scmp.eq.s32.totalorder %s19, 0
    %s22 = sadd.s32 %s21, 1
    %s23 = scalar_select %p20, %s21, %s22
    %p26 = pneg %p20
    %p27 = scmp.eq.s32.totalorder %s11, 1
    %p28 = por %p26, %p27
    %p29 = scmp.ne.s32.totalorder %s21, %s24
    %p30 = scmp.eq.s32.totalorder %s11, 0
    %p31 = por %p29, %p30
    %p32 = scmp.ne.s32.totalorder %s21, %s24
    %p33 = scmp.eq.s32.totalorder %s16, 1
    %p34 = por %p32, %p33
    %p35 = scmp.ne.s32.totalorder %s24, %s25
    %p36 = scmp.eq.s32.totalorder %s16, 0
    %p37 = por %p35, %p36
    %p38 = scmp.ne.s32.totalorder %s24, %s25
    %p39 = scmp.eq.s32.totalorder %s17, 1
    %p40 = por %p38, %p39
    %p42 = scmp.ne.s32.totalorder %s25, %s41
    %p43 = scmp.eq.s32.totalorder %s17, 0
    %p44 = por %p42, %p43
    %s46 = sadd.s32 %s45, 1
    %p49 = scmp.eq.s32.totalorder %s11, 1
    %p50 = scmp.ne.s32.totalorder %s45, %s47
    %p51 = scmp.eq.s32.totalorder %s11, 0
    %p52 = por %p50, %p51
    %p53 = scmp.ne.s32.totalorder %s45, %s47
    %p54 = scmp.eq.s32.totalorder %s16, 1
    %p55 = por %p53, %p54
    %p56 = scmp.ne.s32.totalorder %s47, %s48
    %p57 = scmp.eq.s32.totalorder %s16, 0
    %p58 = por %p56, %p57
    %p59 = scmp.ne.s32.totalorder %s47, %s48
    %p60 = scmp.eq.s32.totalorder %s17, 1
    %p61 = por %p59, %p60
    %p63 = scmp.ne.s32.totalorder %s48, %s62
    %p64 = scmp.eq.s32.totalorder %s17, 0
    %p65 = por %p63, %p64
    %s67 = sadd.s32 %s66, 1
    %p70 = scmp.eq.s32.totalorder %s11, 1
    %p71 = scmp.ne.s32.totalorder %s66, %s68
    %p72 = scmp.eq.s32.totalorder %s11, 0
    %p73 = por %p71, %p72
    %p74 = scmp.ne.s32.totalorder %s66, %s68
    %p75 = scmp.eq.s32.totalorder %s16, 1
    %p76 = por %p74, %p75
    %p77 = scmp.ne.s32.totalorder %s68, %s69
    %p78 = scmp.eq.s32.totalorder %s16, 0
    %p79 = por %p77, %p78
    %p80 = scmp.ne.s32.totalorder %s68, %s69
    %p81 = scmp.eq.s32.totalorder %s17, 1
    %p82 = por %p80, %p81
    %p84 = scmp.ne.s32.totalorder %s69, %s83
    %p85 = scmp.eq.s32.totalorder %s17, 0
    %p86 = por %p84, %p85
    %s87 = ssub.s32 %s11, %s18
    %p88 = scmp.eq.s32.totalorder %s87, 0
    %s90 = sadd.s32 %s89, 1
    %s91 = scalar_select %p88, %s89, %s90
    %p94 = pneg %p88
    %p95 = scmp.eq.s32.totalorder %s11, 1
    %p96 = por %p94, %p95
    %p97 = scmp.ne.s32.totalorder %s89, %s92
    %p98 = scmp.eq.s32.totalorder %s11, 0
    %p99 = por %p97, %p98
    %p100 = scmp.ne.s32.totalorder %s89, %s92
    %p101 = scmp.eq.s32.totalorder %s16, 1
    %p102 = por %p100, %p101
    %p103 = scmp.ne.s32.totalorder %s92, %s93
    %p104 = scmp.eq.s32.totalorder %s16, 0
    %p105 = por %p103, %p104
    %p106 = scmp.ne.s32.totalorder %s92, %s93
    %p107 = scmp.eq.s32.totalorder %s17, 1
    %p108 = por %p106, %p107
    %p110 = scmp.ne.s32.totalorder %s93, %s109
    %p111 = scmp.eq.s32.totalorder %s17, 0
    %p112 = por %p110, %p111
    %s113 = ssub.s32 %s11, %s18
    %p114 = scmp.eq.s32.totalorder %s113, 0
    %s116 = sadd.s32 %s115, 1
    %s117 = scalar_select %p114, %s115, %s116
    %p120 = pneg %p114
    %p121 = scmp.eq.s32.totalorder %s11, 1
    %p122 = por %p120, %p121
    %p123 = scmp.ne.s32.totalorder %s115, %s118
    %p124 = scmp.eq.s32.totalorder %s11, 0
    %p125 = por %p123, %p124
    %p126 = scmp.ne.s32.totalorder %s115, %s118
    %p127 = scmp.eq.s32.totalorder %s16, 1
    %p128 = por %p126, %p127
    %p129 = scmp.ne.s32.totalorder %s118, %s119
    %p130 = scmp.eq.s32.totalorder %s16, 0
    %p131 = por %p129, %p130
    %p132 = scmp.ne.s32.totalorder %s118, %s119
    %p133 = scmp.eq.s32.totalorder %s17, 1
    %p134 = por %p132, %p133
    %p136 = scmp.ne.s32.totalorder %s119, %s135
    %p137 = scmp.eq.s32.totalorder %s17, 0
    %p138 = por %p136, %p137
    %p139 = scmp.le.s32.totalorder 1, %s11
    %p140 = scmp.lt.s32.totalorder %s11, 3
    %p141 = pnand %p139, %p140
    %p142 = pneg %p141
    // Predicated region
    $region9: #{uninext_finelip_forward.3} parent=5 // pred_check
      _
    $region10: #{uninext_finelip_forward.3} parent=5 // pred_check_branch
      %144 = sbr.rel (%p141) target = $region12
    $region11: #{uninext_finelip_forward.3} parent=5 // pred_region
      %s145 = ssub.s32 %s11, 1
      // Predicated region
      $region13: #{uninext_finelip_forward.3} parent=11 // pred_check
        %p146 = pneg %p58
      $region14: #{uninext_finelip_forward.3} parent=11 // pred_check_branch
        %148 = sbr.rel (%p146) target = $region16
      $region15: #{uninext_finelip_forward.3} parent=11 // pred_region
        _
      $region16: #{uninext_finelip_forward.3} parent=11 // pred_fallthru
        _
      // Predicated region
      $region17: #{uninext_finelip_forward.3} parent=11 // pred_check
        %p149 = pneg %p79
      $region18: #{uninext_finelip_forward.3} parent=11 // pred_check_branch
        %151 = sbr.rel (%p149) target = $region20
      $region19: #{uninext_finelip_forward.3} parent=11 // pred_region
        _
      $region20: #{uninext_finelip_forward.3} parent=11 // pred_fallthru
        _
    $region12: #{uninext_finelip_forward.3} parent=5 // pred_fallthru
      _
    %p152 = scmp.lt.s32.totalorder %s11, 2
    // Predicated region
    $region21: #{uninext_finelip_forward.3} parent=5 // pred_check
      %p153 = pneg %p152
    $region22: #{uninext_finelip_forward.3} parent=5 // pred_check_branch
      %155 = sbr.rel (%p153) target = $region24
    $region23: #{uninext_finelip_forward.3} parent=5 // pred_region
      // Predicated region
      $region25: #{uninext_finelip_forward.3} parent=23 // pred_check
        %p156 = pneg %p31
      $region26: #{uninext_finelip_forward.3} parent=23 // pred_check_branch
        %158 = sbr.rel (%p156) target = $region28
      $region27: #{uninext_finelip_forward.3} parent=23 // pred_region
        %p159 = scmp.lt.s32.totalorder %s11, 1
        %s160 = scalar_select %p159, %s11, 1
        %s161 = smul.addr %s160, 8
        %s162 = smul.addr %s161, 4
        %s163 = scalar_lea.vmem %s0, %s162
      $region28: #{uninext_finelip_forward.3} parent=23 // pred_fallthru
        _
    $region24: #{uninext_finelip_forward.3} parent=5 // pred_fallthru
      _
    %p164 = scmp.le.s32.totalorder 1, %s11
    %p165 = scmp.lt.s32.totalorder %s11, 3
    %p166 = pnand %p164, %p165
    %p167 = pneg %p166
    // Predicated region
    $region29: #{uninext_finelip_forward.3} parent=5 // pred_check
      _
    $region30: #{uninext_finelip_forward.3} parent=5 // pred_check_branch
      %169 = sbr.rel (%p166) target = $region32
    $region31: #{uninext_finelip_forward.3} parent=5 // pred_region
      %s170 = ssub.s32 %s11, 1
      %p171 = scmp.lt.s32.totalorder %s16, 1
      %s172 = scalar_select %p171, %s16, 1
      %s173 = smul.addr %s172, 8
      %s174 = smul.addr %s173, 4
      %s175 = scalar_lea.vmem %s0, %s174
      %p176 = pneg %p37
      %p177 = pneg %p34
      %p178 = pneg %p58
      %p179 = pneg %p55
      %p180 = pneg %p79
      %p181 = pneg %p76
      %p182 = pneg %p105
      %p183 = pneg %p102
      %p184 = scmp.lt.s32.totalorder %s16, 1
      %s185 = scalar_select %p184, %s16, 1
      %s186 = smul.addr %s185, 8
      %s187 = smul.addr %s186, 4
      %s188 = scalar_lea.vmem %s3, %s187
      %p189 = pneg %p131
      %p190 = pneg %p128
      %p191 = scmp.lt.s32.totalorder %s16, 1
      %s192 = scalar_select %p191, %s16, 1
      %s193 = scalar_lea.vmem %s4, %s192
      %p194 = scmp.lt.s32.totalorder %s16, 1
      %s195 = scalar_select %p194, %s16, 1
      %s196 = smul.addr %s195, 8
      %s197 = smul.addr %s196, 4
      %s198 = scalar_lea.vmem %s0, %s197
      %p199 = scmp.lt.s32.totalorder %s16, 1
      %s200 = scalar_select %p199, %s16, 1
      %s201 = smul.addr %s200, 8
      %s202 = smul.addr %s201, 4
      %s203 = scalar_lea.vmem %s3, %s202
      %p204 = scmp.lt.s32.totalorder %s16, 1
      %s205 = scalar_select %p204, %s16, 1
      %s206 = scalar_lea.vmem %s4, %s205
      %v208 = vld [vmem:[%s198] sm:$0xf]
      %v209 = vld [vmem:[%s198 + $0x4] sm:$0xf]
      %v210 = vld [vmem:[%s198 + $0x8] sm:$0xf]
      %v211 = vld [vmem:[%s198 + $0xc] sm:$0xf]
      %v212 = vld [vmem:[%s198 + $0x10] sm:$0xf]
      %v213 = vld [vmem:[%s198 + $0x14] sm:$0xf]
      %v214 = vld [vmem:[%s198 + $0x18] sm:$0xf]
      %v215 = vld [vmem:[%s198 + $0x1c] sm:$0xf]
      %v216 = vld [vmem:[%s1] sm:$0xf]
      %v217 = vld [vmem:[%s1 + $0x4] sm:$0xf]
      %v218 = vld [vmem:[%s1 + $0x8] sm:$0xf]
      %v219 = vld [vmem:[%s1 + $0xc] sm:$0xf]
      %v220 = vld [vmem:[%s1 + $0x10] sm:$0xf]
      %v221 = vld [vmem:[%s1 + $0x14] sm:$0xf]
      %v222 = vld [vmem:[%s2] sm:$0x1]
      %v223 = vperm.slane %v222, 0
      %v232 = vunpack.c.l.b16 %v208
      %v233 = vunpack.c.l.b16 %v209
      %v234 = vunpack.c.l.b16 %v210
      %v235 = vunpack.c.l.b16 %v211
      %v236 = vunpack.c.l.b16 %v212
      %v237 = vunpack.c.l.b16 %v213
      %v238 = vunpack.c.l.b16 %v214
      %v239 = vunpack.c.l.b16 %v215
      %v240 = vpack.c.b16 %v233, %v232
      %v241 = vpack.c.b16 %v235, %v234
      %v242 = vpack.c.b16 %v237, %v236
      %v243 = vpack.c.b16 %v239, %v238
      %v250 = vunpack.c.l.b16 %v216
      %v251 = vunpack.c.l.b16 %v217
      %v252 = vunpack.c.l.b16 %v218
      %v253 = vunpack.c.l.b16 %v219
      %v254 = vunpack.c.l.b16 %v220
      %v255 = vunpack.c.l.b16 %v221
      %v256 = vpack.c.b16 %v251, %v250
      %v257 = vpack.c.b16 %v253, %v252
      %v258 = vpack.c.b16 %v255, %v254
      %vm262 = vcmask 392192
      %v264 = vsel %vm262, %v240, 0
      %v267 = vsel %vm262, %v241, 0
      %v270 = vsel %vm262, %v242, 0
      %v273 = vsel %vm262, %v243, 0
      %275 = vmatpush.bf16.msra.mxu0 0
      %276 = vmatpush.bf16.msra.mxu0 0
      %277 = vmatpush.bf16.msra.mxu0 0
      %278 = vmatpush.bf16.msra.mxu0 0
      %279 = vmatpush.bf16.msra.mxu0 0
      %280 = vmatpush.bf16.msra.mxu0 %v258
      %281 = vmatpush.bf16.msra.mxu0 %v257
      %282 = vmatpush.bf16.msra.mxu0 %v256
      %283 = vmatmul.bf16.gmra.mxu0 %v264
      %v284 = vpop.f32.mrf.mxu0
      %v285 = vadd.f32 %v223, %v284
      %v286 = vpop.f32.mrf.mxu0
      %v287 = vadd.f32 %v223, %v286
      %288 = vmatmul.bf16.gmra.mxu0 %v267
      %v289 = vpop.f32.mrf.mxu0
      %v290 = vadd.f32 %v223, %v289
      %v291 = vpop.f32.mrf.mxu0
      %v292 = vadd.f32 %v223, %v291
      %293 = vmatmul.bf16.gmra.mxu0 %v270
      %v294 = vpop.f32.mrf.mxu0
      %v295 = vadd.f32 %v223, %v294
      %v296 = vpop.f32.mrf.mxu0
      %v297 = vadd.f32 %v223, %v296
      %298 = vmatmul.bf16.gmra.mxu0 %v273
      %v299 = vpop.f32.mrf.mxu0
      %v300 = vadd.f32 %v223, %v299
      %v301 = vpop.f32.mrf.mxu0
      %v302 = vadd.f32 %v223, %v301
      %303 = vdwg.mxu0
      %v304 = vpack.c.bf16 %v285, %v285
      %v305 = vpack.c.bf16 %v287, %v287
      %v306 = vpack.c.bf16 %v290, %v290
      %v307 = vpack.c.bf16 %v292, %v292
      %v308 = vpack.c.bf16 %v295, %v295
      %v309 = vpack.c.bf16 %v297, %v297
      %v310 = vpack.c.bf16 %v300, %v300
      %v311 = vpack.c.bf16 %v302, %v302
      %vm312 = vcmask 519168
      %313 = vst.msk [vmem:[%s203] sm:$0xf] %vm312, %v304
      %314 = vst.msk [vmem:[%s203 + $0x4] sm:$0xf] %vm312, %v305
      %315 = vst.msk [vmem:[%s203 + $0x8] sm:$0xf] %vm312, %v306
      %316 = vst.msk [vmem:[%s203 + $0xc] sm:$0xf] %vm312, %v307
      %317 = vst.msk [vmem:[%s203 + $0x10] sm:$0xf] %vm312, %v308
      %318 = vst.msk [vmem:[%s203 + $0x14] sm:$0xf] %vm312, %v309
      %319 = vst.msk [vmem:[%s203 + $0x18] sm:$0xf] %vm312, %v310
      %320 = vst.msk [vmem:[%s203 + $0x1c] sm:$0xf] %vm312, %v311
      %vm321 = vcmask 523264
      %v322 = vsel %vm321, %v285, 0.0
      %323 = vadd.xlane.f32.xlu0 %v322
      %v324 = vpop.xlane.xlu0 %323
      %v325 = vsel %vm321, %v287, 0.0
      %326 = vadd.xlane.f32.xlu0 %v325
      %v327 = vpop.xlane.xlu0 %326
      %v328 = vsel %vm321, %v290, 0.0
      %329 = vadd.xlane.f32.xlu0 %v328
      %v330 = vpop.xlane.xlu0 %329
      %v331 = vsel %vm321, %v292, 0.0
      %332 = vadd.xlane.f32.xlu0 %v331
      %v333 = vpop.xlane.xlu0 %332
      %v334 = vsel %vm321, %v295, 0.0
      %335 = vadd.xlane.f32.xlu0 %v334
      %v336 = vpop.xlane.xlu0 %335
      %v337 = vsel %vm321, %v297, 0.0
      %338 = vadd.xlane.f32.xlu0 %v337
      %v339 = vpop.xlane.xlu0 %338
      %v340 = vsel %vm321, %v300, 0.0
      %341 = vadd.xlane.f32.xlu0 %v340
      %v342 = vpop.xlane.xlu0 %341
      %v343 = vsel %vm321, %v302, 0.0
      %344 = vadd.xlane.f32.xlu0 %v343
      %v345 = vpop.xlane.xlu0 %344
      %v346 = vrcp.pop 64.0
      %v347 = vmul.f32 64.0, %v346
      %v348 = vsub.f32 1.0, %v347
      %v349 = vmul.f32 %v346, %v348
      %v350 = vadd.f32 %v346, %v349
      %vm351 = vweird.f32 %v346
      %v352 = vsel %vm351, %v346, %v350
      %v353 = vmul.f32 %v324, %v352
      %v354 = vmul.f32 %v327, %v352
      %v355 = vmul.f32 %v330, %v352
      %v356 = vmul.f32 %v333, %v352
      %v357 = vmul.f32 %v336, %v352
      %v358 = vmul.f32 %v339, %v352
      %v359 = vmul.f32 %v342, %v352
      %v360 = vmul.f32 %v345, %v352
      %v361 = vsub.f32 %v285, %v353
      %v362 = vsub.f32 %v287, %v354
      %v363 = vsub.f32 %v290, %v355
      %v364 = vsub.f32 %v292, %v356
      %v365 = vsub.f32 %v295, %v357
      %v366 = vsub.f32 %v297, %v358
      %v367 = vsub.f32 %v300, %v359
      %v368 = vsub.f32 %v302, %v360
      %v369 = vmul.f32 %v361, %v361
      %v370 = vmul.f32 %v362, %v362
      %v371 = vmul.f32 %v363, %v363
      %v372 = vmul.f32 %v364, %v364
      %v373 = vmul.f32 %v365, %v365
      %v374 = vmul.f32 %v366, %v366
      %v375 = vmul.f32 %v367, %v367
      %v376 = vmul.f32 %v368, %v368
      %v377 = vsel %vm321, %v369, 0.0
      %378 = vadd.xlane.f32.xlu0 %v377
      %v379 = vpop.xlane.xlu0 %378
      %v380 = vsel %vm321, %v370, 0.0
      %381 = vadd.xlane.f32.xlu0 %v380
      %v382 = vpop.xlane.xlu0 %381
      %v383 = vsel %vm321, %v371, 0.0
      %384 = vadd.xlane.f32.xlu0 %v383
      %v385 = vpop.xlane.xlu0 %384
      %v386 = vsel %vm321, %v372, 0.0
      %387 = vadd.xlane.f32.xlu0 %v386
      %v388 = vpop.xlane.xlu0 %387
      %v389 = vsel %vm321, %v373, 0.0
      %390 = vadd.xlane.f32.xlu0 %v389
      %v391 = vpop.xlane.xlu0 %390
      %v392 = vsel %vm321, %v374, 0.0
      %393 = vadd.xlane.f32.xlu0 %v392
      %v394 = vpop.xlane.xlu0 %393
      %v395 = vsel %vm321, %v375, 0.0
      %396 = vadd.xlane.f32.xlu0 %v395
      %v397 = vpop.xlane.xlu0 %396
      %v398 = vsel %vm321, %v376, 0.0
      %399 = vadd.xlane.f32.xlu0 %v398
      %v400 = vpop.xlane.xlu0 %399
      %v401 = vmul.f32 %v379, %v352
      %v402 = vmul.f32 %v382, %v352
      %v403 = vmul.f32 %v385, %v352
      %v404 = vmul.f32 %v388, %v352
      %v405 = vmul.f32 %v391, %v352
      %v406 = vmul.f32 %v394, %v352
      %v407 = vmul.f32 %v397, %v352
      %v408 = vmul.f32 %v400, %v352
      %v409 = vadd.f32 %v401, 1e-05
      %v410 = vadd.f32 %v402, 1e-05
      %v411 = vadd.f32 %v403, 1e-05
      %v412 = vadd.f32 %v404, 1e-05
      %v413 = vadd.f32 %v405, 1e-05
      %v414 = vadd.f32 %v406, 1e-05
      %v415 = vadd.f32 %v407, 1e-05
      %v416 = vadd.f32 %v408, 1e-05
      %v417 = vrsqrt.pop %v409
      %v418 = vmul.f32 %v417, %v409
      %v419 = vmul.f32 %v418, %v417
      %v420 = vmul.f32 0.5, %v419
      %v421 = vsub.f32 1.5, %v420
      %v422 = vmul.f32 %v417, %v421
      %vm423 = vweird.f32 %v409
      %vm424 = vweird.f32 %v417
      %vm425 = vmor %vm423, %vm424
      %v426 = vsel %vm425, %v417, %v422
      %v427 = vrsqrt.pop %v410
      %v428 = vmul.f32 %v427, %v410
      %v429 = vmul.f32 %v428, %v427
      %v430 = vmul.f32 0.5, %v429
      %v431 = vsub.f32 1.5, %v430
      %v432 = vmul.f32 %v427, %v431
      %vm433 = vweird.f32 %v410
      %vm434 = vweird.f32 %v427
      %vm435 = vmor %vm433, %vm434
      %v436 = vsel %vm435, %v427, %v432
      %v437 = vrsqrt.pop %v411
      %v438 = vmul.f32 %v437, %v411
      %v439 = vmul.f32 %v438, %v437
      %v440 = vmul.f32 0.5, %v439
      %v441 = vsub.f32 1.5, %v440
      %v442 = vmul.f32 %v437, %v441
      %vm443 = vweird.f32 %v411
      %vm444 = vweird.f32 %v437
      %vm445 = vmor %vm443, %vm444
      %v446 = vsel %vm445, %v437, %v442
      %v447 = vrsqrt.pop %v412
      %v448 = vmul.f32 %v447, %v412
      %v449 = vmul.f32 %v448, %v447
      %v450 = vmul.f32 0.5, %v449
      %v451 = vsub.f32 1.5, %v450
      %v452 = vmul.f32 %v447, %v451
      %vm453 = vweird.f32 %v412
      %vm454 = vweird.f32 %v447
      %vm455 = vmor %vm453, %vm454
      %v456 = vsel %vm455, %v447, %v452
      %v457 = vrsqrt.pop %v413
      %v458 = vmul.f32 %v457, %v413
      %v459 = vmul.f32 %v458, %v457
      %v460 = vmul.f32 0.5, %v459
      %v461 = vsub.f32 1.5, %v460
      %v462 = vmul.f32 %v457, %v461
      %vm463 = vweird.f32 %v413
      %vm464 = vweird.f32 %v457
      %vm465 = vmor %vm463, %vm464
      %v466 = vsel %vm465, %v457, %v462
      %v467 = vrsqrt.pop %v414
      %v468 = vmul.f32 %v467, %v414
      %v469 = vmul.f32 %v468, %v467
      %v470 = vmul.f32 0.5, %v469
      %v471 = vsub.f32 1.5, %v470
      %v472 = vmul.f32 %v467, %v471
      %vm473 = vweird.f32 %v414
      %vm474 = vweird.f32 %v467
      %vm475 = vmor %vm473, %vm474
      %v476 = vsel %vm475, %v467, %v472
      %v477 = vrsqrt.pop %v415
      %v478 = vmul.f32 %v477, %v415
      %v479 = vmul.f32 %v478, %v477
      %v480 = vmul.f32 0.5, %v479
      %v481 = vsub.f32 1.5, %v480
      %v482 = vmul.f32 %v477, %v481
      %vm483 = vweird.f32 %v415
      %vm484 = vweird.f32 %v477
      %vm485 = vmor %vm483, %vm484
      %v486 = vsel %vm485, %v477, %v482
      %v487 = vrsqrt.pop %v416
      %v488 = vmul.f32 %v487, %v416
      %v489 = vmul.f32 %v488, %v487
      %v490 = vmul.f32 0.5, %v489
      %v491 = vsub.f32 1.5, %v490
      %v492 = vmul.f32 %v487, %v491
      %vm493 = vweird.f32 %v416
      %vm494 = vweird.f32 %v487
      %vm495 = vmor %vm493, %vm494
      %v496 = vsel %vm495, %v487, %v492
      %v497 = vmul.f32 %v361, %v426
      %v498 = vmul.f32 %v362, %v436
      %v499 = vmul.f32 %v363, %v446
      %v500 = vmul.f32 %v364, %v456
      %v501 = vmul.f32 %v365, %v466
      %v502 = vmul.f32 %v366, %v476
      %v503 = vmul.f32 %v367, %v486
      %v504 = vmul.f32 %v368, %v496
      %v505 = vld [vmem:[%s2 + $0x1] sm:$0x1]
      %v506 = vperm.slane %v505, 0
      %v507 = vmul.f32 %v497, %v506
      %v508 = vmul.f32 %v498, %v506
      %v509 = vmul.f32 %v499, %v506
      %v510 = vmul.f32 %v500, %v506
      %v511 = vmul.f32 %v501, %v506
      %v512 = vmul.f32 %v502, %v506
      %v513 = vmul.f32 %v503, %v506
      %v514 = vmul.f32 %v504, %v506
      %v515 = vld [vmem:[%s2 + $0x2] sm:$0x1]
      %v516 = vperm.slane %v515, 0
      %v517 = vadd.f32 %v507, %v516
      %v518 = vadd.f32 %v508, %v516
      %v519 = vadd.f32 %v509, %v516
      %v520 = vadd.f32 %v510, %v516
      %v521 = vadd.f32 %v511, %v516
      %v522 = vadd.f32 %v512, %v516
      %v523 = vadd.f32 %v513, %v516
      %v524 = vadd.f32 %v514, %v516
      %v525 = vld [vmem:[%s2 + $0x3] sm:$0x1]
      %v526 = vperm.slane %v525, 0
      %v527 = vmul.f32 %v517, %v526
      %v528 = vmul.f32 %v518, %v526
      %v529 = vmul.f32 %v519, %v526
      %v530 = vmul.f32 %v520, %v526
      %v531 = vmul.f32 %v521, %v526
      %v532 = vmul.f32 %v522, %v526
      %v533 = vmul.f32 %v523, %v526
      %v534 = vmul.f32 %v524, %v526
      %v535 = vsel %vm321, %v527, 0.0
      %536 = vadd.xlane.f32.xlu0 %v535
      %v537 = vpop.xlane.xlu0 %536
      %v538 = vsel %vm321, %v528, 0.0
      %539 = vadd.xlane.f32.xlu0 %v538
      %v540 = vpop.xlane.xlu0 %539
      %v541 = vsel %vm321, %v529, 0.0
      %542 = vadd.xlane.f32.xlu0 %v541
      %v543 = vpop.xlane.xlu0 %542
      %v544 = vsel %vm321, %v530, 0.0
      %545 = vadd.xlane.f32.xlu0 %v544
      %v546 = vpop.xlane.xlu0 %545
      %v547 = vsel %vm321, %v531, 0.0
      %548 = vadd.xlane.f32.xlu0 %v547
      %v549 = vpop.xlane.xlu0 %548
      %v550 = vsel %vm321, %v532, 0.0
      %551 = vadd.xlane.f32.xlu0 %v550
      %v552 = vpop.xlane.xlu0 %551
      %v553 = vsel %vm321, %v533, 0.0
      %554 = vadd.xlane.f32.xlu0 %v553
      %v555 = vpop.xlane.xlu0 %554
      %v556 = vsel %vm321, %v534, 0.0
      %557 = vadd.xlane.f32.xlu0 %v556
      %v558 = vpop.xlane.xlu0 %557
      %v559 = vld [vmem:[%s2 + $0x4] sm:$0x1]
      %v560 = vperm.slane %v559, 0
      %v561 = vadd.f32 %v537, %v560
      %v562 = vadd.f32 %v540, %v560
      %v563 = vadd.f32 %v543, %v560
      %v564 = vadd.f32 %v546, %v560
      %v565 = vadd.f32 %v549, %v560
      %v566 = vadd.f32 %v552, %v560
      %v567 = vadd.f32 %v555, %v560
      %v568 = vadd.f32 %v558, %v560
      %569 = vxpose.xlu0.b32.start [1/16] %v561, 128
      %570 = vxpose.xlu0.b32.cont [2/16] %v562, 128
      %571 = vxpose.xlu0.b32.cont [3/16] %v563, 128
      %572 = vxpose.xlu0.b32.cont [4/16] %v564, 128
      %573 = vxpose.xlu0.b32.cont [5/16] %v565, 128
      %574 = vxpose.xlu0.b32.cont [6/16] %v566, 128
      %575 = vxpose.xlu0.b32.cont [7/16] %v567, 128
      %576 = vxpose.xlu0.b32.cont [8/16] %v568, 128
      %577 = vxpose.xlu0.b32.cont [9/16] 0.0, 128
      %578 = vxpose.xlu0.b32.cont [10/16] 0.0, 128
      %579 = vxpose.xlu0.b32.cont [11/16] 0.0, 128
      %580 = vxpose.xlu0.b32.cont [12/16] 0.0, 128
      %581 = vxpose.xlu0.b32.cont [13/16] 0.0, 128
      %582 = vxpose.xlu0.b32.cont [14/16] 0.0, 128
      %583 = vxpose.xlu0.b32.cont [15/16] 0.0, 128
      %584 = vxpose.xlu0.b32.end [16/16] 0.0, 128
      %v585 = vpop.trf.xlu0
      %v586 = vpop.trf.xlu0
      %v587 = vpop.trf.xlu0
      %v588 = vpop.trf.xlu0
      %v589 = vpop.trf.xlu0
      %v590 = vpop.trf.xlu0
      %v591 = vpop.trf.xlu0
      %v592 = vpop.trf.xlu0
      %v593 = vpop.trf.xlu0
      %v594 = vpop.trf.xlu0
      %v595 = vpop.trf.xlu0
      %v596 = vpop.trf.xlu0
      %v597 = vpop.trf.xlu0
      %v598 = vpop.trf.xlu0
      %v599 = vpop.trf.xlu0
      %v600 = vpop.trf.xlu0
      %vm601 = vcmask 516096
      %v602 = vsel %vm601, %v585, -inf
      %603 = vmax.xlane.f32.xlu0 %v602
      %v604 = vpop.xlane.xlu0 %603
      %v605 = vsub.f32 %v585, %v604
      %v606 = vmul.f32 %v605, 1.442695
      %v607 = vpow.pop %v606
      %v608 = vsel %vm601, %v607, 0.0
      %609 = vadd.xlane.f32.xlu0 %v608
      %v610 = vpop.xlane.xlu0 %609
      %v611 = vrcp.pop %v610
      %v612 = vmul.f32 %v610, %v611
      %v613 = vsub.f32 1.0, %v612
      %v614 = vmul.f32 %v611, %v613
      %v615 = vadd.f32 %v611, %v614
      %vm616 = vweird.f32 %v610
      %vm617 = vweird.f32 %v611
      %vm618 = vmor %vm616, %vm617
      %v619 = vsel %vm618, %v611, %v615
      %v620 = vand.u32 2147483647, %v610
      %vm621 = vcmp.eq.f32.partialorder %v620, 8.507059e+37
      %v622 = vand.u32 %v610, 2147483648
      %v623 = vor.u32 1.1754944e-38, %v622
      %v624 = vsel %vm621, %v623, %v619
      %v625 = vmul.f32 %v607, %v624
      %626 = vst.msk [vmem:[%s206] sm:$0x1] %vm601, %v625
      %p627 = scmp.lt.s32.totalorder %s16, 1
      %s628 = scalar_select %p627, %s16, 1
      %s629 = smul.addr %s628, 8
      %s630 = smul.addr %s629, 4
      %s631 = scalar_lea.vmem %s3, %s630
      %p632 = scmp.lt.s32.totalorder %s16, 1
      %s633 = scalar_select %p632, %s16, 1
      %s634 = scalar_lea.vmem %s4, %s633
      // Predicated region
      $region33: #{uninext_finelip_forward.3} parent=31 // pred_check
        %p635 = pneg %p102
      $region34: #{uninext_finelip_forward.3} parent=31 // pred_check_branch
        %637 = sbr.rel (%p635) target = $region36
      $region35: #{uninext_finelip_forward.3} parent=31 // pred_region
        _
      $region36: #{uninext_finelip_forward.3} parent=31 // pred_fallthru
        _
      // Predicated region
      $region37: #{uninext_finelip_forward.3} parent=31 // pred_check
        %p638 = pneg %p128
      $region38: #{uninext_finelip_forward.3} parent=31 // pred_check_branch
        %640 = sbr.rel (%p638) target = $region40
      $region39: #{uninext_finelip_forward.3} parent=31 // pred_region
        _
      $region40: #{uninext_finelip_forward.3} parent=31 // pred_fallthru
        _
    $region32: #{uninext_finelip_forward.3} parent=5 // pred_fallthru
      _
    %p641 = scmp.le.s32.totalorder 2, %s11
    // Predicated region
    $region41: #{uninext_finelip_forward.3} parent=5 // pred_check
      %p642 = pneg %p641
    $region42: #{uninext_finelip_forward.3} parent=5 // pred_check_branch
      %644 = sbr.rel (%p642) target = $region44
    $region43: #{uninext_finelip_forward.3} parent=5 // pred_region
      %s645 = ssub.s32 %s11, 2
      // Predicated region
      $region45: #{uninext_finelip_forward.3} parent=43 // pred_check
        %p646 = pneg %p108
      $region46: #{uninext_finelip_forward.3} parent=43 // pred_check_branch
        %648 = sbr.rel (%p646) target = $region48
      $region47: #{uninext_finelip_forward.3} parent=43 // pred_region
        %p649 = scmp.lt.s32.totalorder %s17, 1
        %s650 = scalar_select %p649, %s17, 1
        %s651 = smul.addr %s650, 8
        %s652 = smul.addr %s651, 4
        %s653 = scalar_lea.vmem %s3, %s652
      $region48: #{uninext_finelip_forward.3} parent=43 // pred_fallthru
        _
      // Predicated region
      $region49: #{uninext_finelip_forward.3} parent=43 // pred_check
        %p654 = pneg %p134
      $region50: #{uninext_finelip_forward.3} parent=43 // pred_check_branch
        %656 = sbr.rel (%p654) target = $region52
      $region51: #{uninext_finelip_forward.3} parent=43 // pred_region
        %p657 = scmp.lt.s32.totalorder %s17, 1
        %s658 = scalar_select %p657, %s17, 1
        %s659 = scalar_lea.vmem %s4, %s658
      $region52: #{uninext_finelip_forward.3} parent=43 // pred_fallthru
        _
    $region44: #{uninext_finelip_forward.3} parent=5 // pred_fallthru
      _
  $region6: #{uninext_finelip_forward.3} parent=0 // loop_footer
    %s15 = sadd.s32 1, %s11
  $region7: #{uninext_finelip_forward.3} parent=0 // loop_footer_branch
    %10 = sbr.rel target = $region3
  $region8: #{uninext_finelip_forward.3} parent=0 // loop_exit
    _

// kernel: custom-call
$region0: #{custom-call}
  #allocation0 [shape = 'u32[8,128]{1,0}', space=vmem, size = 0x1000, scoped, tag = 'scratch']
  #allocation1 [shape = 'u32[8,128]{1,0}', space=vmem, size = 0x1000, scoped, tag = 'scratch']
  #allocation2 [shape = 'u32[8,128]{1,0}', space=vmem, size = 0x1000, scoped, tag = 'scratch']
  #allocation3 [shape = 'u32[8,128]{1,0}', space=vmem, size = 0x1000, scoped, tag = 'scratch']
  #allocation4 [shape = 'u32[8,128]{1,0}', space=vmem, size = 0x1000, scoped, tag = 'scratch']
  #allocation5 [shape = 'u32[8,128]{1,0}', space=vmem, size = 0x1000, scoped, tag = 'scratch']
  #allocation6 [shape = 'u32[8,128]{1,0}', space=vmem, size = 0x1000, scoped, tag = 'scratch']
  %s0 = inlined_call_operand.vmem [shape: f32[2,8], index: 0, kind: input, shape index: {}]
  %s1 = inlined_call_operand.hbm [shape: f32[2,1], index: 1, kind: output, shape index: {0}]
  %s2 = inlined_call_operand.vmem [shape: s32[2,1], index: 2, kind: output, shape index: {1}]
  %3 = xla_tuple %s1, %s2
  %4 = xla_tuple 2147483648, 2147483647
  $region1: #{custom-call} parent=0
    #allocation7 [shape = 'u8[4096]{0}', space=vmem, size = 0x1000, scoped, tag = 'operand span for operand 1']
    #allocation8 [shape = 'u8[1024]{0}', space=vmem, size = 0x400, scoped, tag = 'packed  for operand 1']
    #allocation9 [shape = 's32[1]{0}', space=sflag, size = 0x4, scoped, tag = 'scoped memory for custom-call']
    #allocation10 [shape = 'u8[4096]{0}', space=vmem, size = 0x1000, scoped, tag = 'operand span for operand 2']
    #allocation11 [shape = 'u8[1024]{0}', space=vmem, size = 0x400, scoped, tag = 'packed  for operand 2']
    #allocation12 [shape = 'f32[1,2]{1,0:T(8,128)}', space=vmem, size = 0x1000, scoped, tag = 'scoped memory for custom-call']
    #allocation13 [shape = 'f32[1,2]{1,0:T(8,128)}', space=vmem, size = 0x1000, scoped, tag = 'scoped memory for custom-call']
    #allocation14 [shape = 's32[1,2]{1,0:T(8,128)}', space=vmem, size = 0x1000, scoped, tag = 'scoped memory for custom-call']
    #allocation15 [shape = 's32[1,2]{1,0:T(8,128)}', space=vmem, size = 0x1000, scoped, tag = 'scoped memory for custom-call']
    %5 = vsyncpa [#allocation9], 0
    %6 = xla_tuple [#allocation7], [#allocation10]
    %7 = vst [vmem:[#allocation12] sm:$0xff] 2147483648
    %8 = vst [vmem:[#allocation14] sm:$0xff] 2147483647
    %9 = xla_tuple [#allocation12], [#allocation14]
    %10 = xla_tuple [#allocation13], [#allocation15]
    $region2: #{custom-call} parent=1
      #allocation16 [shape = 'u8[4096]{0}', space=vmem, size = 0x1000, scoped, tag = 'operand span for operand 0']
      #allocation17 [shape = 's32[1024]{0}', space=vmem, size = 0x1000, scoped, tag = 'scoped memory for custom-call']
      // Predicated region
      $region3: #{custom-call} parent=2 // pred_check
        _
      $region4: #{custom-call} parent=2 // pred_check_branch
        %12 = sbr.rel (0) target = $region6
      $region5: #{custom-call} parent=2 // pred_region
        // Predicated region
        $region7: #{custom-call} parent=5 // pred_check
          _
        $region8: #{custom-call} parent=5 // pred_check_branch
          %14 = sbr.rel (0) target = $region10
        $region9: #{custom-call} parent=5 // pred_region
          // Predicated region
          $region11: #{custom-call} parent=9 // pred_check
            _
          $region12: #{custom-call} parent=9 // pred_check_branch
            %16 = sbr.rel target = $region14
          $region13: #{custom-call} parent=9 // pred_region
            // Predicated region
            $region26: #{custom-call} parent=13 // pred_check
              _
            $region27: #{custom-call} parent=13 // pred_check_branch
              %32 = sbr.rel (0) target = $region29
            $region28: #{custom-call} parent=13 // pred_region
              %s34 = ssub.s32 4, 1
              loop: start=0, step=1, limit=1
              $region30: #{custom-call} parent=28 // loop_pre_header
                _
              $region31: #{custom-call} parent=28 // loop_header
                %s36 = sphi 0, %s40
                %p37 = scmp.ge.s32.totalorder %s36, 1
                %s41 = sphi %s0, %s0
                %s42 = sphi [#allocation16], [#allocation16]
              $region32: #{custom-call} parent=28 // loop_header_branch
                %39 = sbr.rel (%p37) target = $region36
              $region33: #{custom-call} parent=28 // loop_body
                %v43 = vld [vmem:[%s41] sm:%s34]
                %44 = vst [vmem:[%s42] sm:%s34] %v43
              $region34: #{custom-call} parent=28 // loop_footer
                %s40 = sadd.s32 1, %s36
              $region35: #{custom-call} parent=28 // loop_footer_branch
                %35 = sbr.rel target = $region31
              $region36: #{custom-call} parent=28 // loop_exit
                _
            $region29: #{custom-call} parent=13 // pred_fallthru
              _
          $region14: #{custom-call} parent=9 // pred_fallthru
            _
          // Predicated region
          $region15: #{custom-call} parent=9 // pred_check
            _
          $region16: #{custom-call} parent=9 // pred_check_branch
            %18 = sbr.rel (0) target = $region18
          $region17: #{custom-call} parent=9 // pred_region
            %s20 = ssub.s32 4, 1
            loop: start=0, step=1, limit=1
            $region19: #{custom-call} parent=17 // loop_pre_header
              _
            $region20: #{custom-call} parent=17 // loop_header
              %s22 = sphi 0, %s26
              %p23 = scmp.ge.s32.totalorder %s22, 1
              %s27 = sphi %s0, %s0
              %s28 = sphi [#allocation16], [#allocation16]
            $region21: #{custom-call} parent=17 // loop_header_branch
              %25 = sbr.rel (%p23) target = $region25
            $region22: #{custom-call} parent=17 // loop_body
              %v29 = vld [vmem:[%s27] sm:%s20]
              %30 = vst [vmem:[%s28] sm:%s20] %v29
            $region23: #{custom-call} parent=17 // loop_footer
              %s26 = sadd.s32 1, %s22
            $region24: #{custom-call} parent=17 // loop_footer_branch
              %21 = sbr.rel target = $region20
            $region25: #{custom-call} parent=17 // loop_exit
              _
          $region18: #{custom-call} parent=9 // pred_fallthru
            _
        $region10: #{custom-call} parent=5 // pred_fallthru
          _
        %45 = vnop
      $region6: #{custom-call} parent=2 // pred_fallthru
        _
      // Predicated region
      $region37: #{custom-call} parent=2 // pred_check
        _
      $region38: #{custom-call} parent=2 // pred_check_branch
        %47 = sbr.rel (0) target = $region40
      $region39: #{custom-call} parent=2 // pred_region
        _
      $region40: #{custom-call} parent=2 // pred_fallthru
        _
      %v48 = vlaneseq
      %v49 = vand.u32 %v48, 127
      %v50 = vlaneseq
      %v51 = vshrl.u32 %v50, 7
      %v52 = vshrl.u32 %v51, 1
      %v53 = vand.u32 %v51, 1
      %v54 = vmul.u32 %v52, 128
      %v55 = vadd.s32 %v49, %v54
      %v57 = vld [vmem:[#allocation16] sm:$0xff]
      %vm58 = vcmp.lt.s32.totalorder %v57, 0
      %v59 = vsub.s32 2147483647, %v57
      %v60 = vsel %vm58, %v59, %v57
      %vm62 = vcmp.lt.s32.totalorder %v55, 8
      %v63 = vsel %vm62, %v60, 2147483648
      %64 = vst [vmem:[#allocation16] sm:$0xff] %v63
      %v65 = vlaneseq
      %v66 = vand.u32 %v65, 127
      %v67 = vlaneseq
      %v68 = vshrl.u32 %v67, 7
      %v69 = vshrl.u32 %v68, 1
      %v70 = vand.u32 %v68, 1
      %v71 = vmul.u32 %v69, 128
      %v72 = vadd.s32 %v66, %v71
      %75 = vst [vmem:[#allocation17] sm:$0xff] %v72
      %76 = xla_tuple [#allocation16], [#allocation17]
      %77 = vst [vmem:[#allocation13] sm:$0xff] 2147483648
      %78 = vst [vmem:[#allocation15] sm:$0xff] 2147483647
      %79 = xla_tuple [#allocation13], [#allocation15]
      loop: start=0, step=1, limit=1
      $region41: #{custom-call} parent=2 // loop_pre_header
        _
      $region42: #{custom-call} parent=2 // loop_header
        %s81 = sphi 0, %s85
        %p82 = scmp.ge.s32.totalorder %s81, 1
      $region43: #{custom-call} parent=2 // loop_header_branch
        %84 = sbr.rel (%p82) target = $region47
      $region44: #{custom-call} parent=2 // loop_body
        %v86 = vld [vmem:[#allocation16] sm:$0xff]
        %v87 = vld [vmem:[#allocation17] sm:$0xff]
        %88 = xla_tuple %v86, %v87
        %v89 = vrot.slane %v86, 2
        %v90 = vrot.slane %v87, 2
        %91 = xla_tuple %v89, %v90
        %vm92 = vcmp.gt.s32.totalorder %v89, %v86
        %vm93 = vcmp.eq.s32.totalorder %v89, %v86
        %vm94 = vcmp.lt.s32.totalorder %v90, %v87
        %vm95 = vmand %vm93, %vm94
        %vm96 = vmor %vm92, %vm95
        %v97 = vsel %vm96, %v89, %v86
        %v98 = vsel %vm96, %v90, %v87
        %99 = xla_tuple %v97, %v98
        %v100 = vrot.slane %v97, 2
        %v101 = vrot.slane %v98, 2
        %102 = xla_tuple %v100, %v101
        %vm103 = vcmp.gt.s32.totalorder %v100, %v97
        %vm104 = vcmp.eq.s32.totalorder %v100, %v97
        %vm105 = vcmp.lt.s32.totalorder %v101, %v98
        %vm106 = vmand %vm104, %vm105
        %vm107 = vmor %vm103, %vm106
        %v108 = vsel %vm107, %v100, %v97
        %v109 = vsel %vm107, %v101, %v98
        %110 = xla_tuple %v108, %v109
        %v111 = vrot.slane %v108, 2
        %v112 = vrot.slane %v109, 2
        %113 = xla_tuple %v111, %v112
        %vm114 = vcmp.gt.s32.totalorder %v111, %v108
        %vm115 = vcmp.eq.s32.totalorder %v111, %v108
        %vm116 = vcmp.lt.s32.totalorder %v112, %v109
        %vm117 = vmand %vm115, %vm116
        %vm118 = vmor %vm114, %vm117
        %v119 = vsel %vm118, %v111, %v108
        %v120 = vsel %vm118, %v112, %v109
        %121 = xla_tuple %v119, %v120
        %122 = vxpose.xlu0.b32.start [1/16] %v119, 128
        %123 = vxpose.xlu0.b32.cont [2/16] %v119, 128
        %124 = vxpose.xlu0.b32.cont [3/16] %v119, 128
        %125 = vxpose.xlu0.b32.cont [4/16] %v119, 128
        %126 = vxpose.xlu0.b32.cont [5/16] %v119, 128
        %127 = vxpose.xlu0.b32.cont [6/16] %v119, 128
        %128 = vxpose.xlu0.b32.cont [7/16] %v119, 128
        %129 = vxpose.xlu0.b32.cont [8/16] %v119, 128
        %130 = vxpose.xlu0.b32.cont [9/16] %v119, 128
        %131 = vxpose.xlu0.b32.cont [10/16] %v119, 128
        %132 = vxpose.xlu0.b32.cont [11/16] %v119, 128
        %133 = vxpose.xlu0.b32.cont [12/16] %v119, 128
        %134 = vxpose.xlu0.b32.cont [13/16] %v119, 128
        %135 = vxpose.xlu0.b32.cont [14/16] %v119, 128
        %136 = vxpose.xlu0.b32.cont [15/16] %v119, 128
        %137 = vxpose.xlu0.b32.end [16/16] %v119, 128
        %v138 = vpop.trf.xlu0
        %v139 = vpop.trf.xlu0
        %v140 = vpop.trf.xlu0
        %v141 = vpop.trf.xlu0
        %v142 = vpop.trf.xlu0
        %v143 = vpop.trf.xlu0
        %v144 = vpop.trf.xlu0
        %v145 = vpop.trf.xlu0
        %v146 = vpop.trf.xlu0
        %v147 = vpop.trf.xlu0
        %v148 = vpop.trf.xlu0
        %v149 = vpop.trf.xlu0
        %v150 = vpop.trf.xlu0
        %v151 = vpop.trf.xlu0
        %v152 = vpop.trf.xlu0
        %v153 = vpop.trf.xlu0
        %154 = vxpose.xlu0.b32.start [1/16] %v120, 128
        %155 = vxpose.xlu0.b32.cont [2/16] %v120, 128
        %156 = vxpose.xlu0.b32.cont [3/16] %v120, 128
        %157 = vxpose.xlu0.b32.cont [4/16] %v120, 128
        %158 = vxpose.xlu0.b32.cont [5/16] %v120, 128
        %159 = vxpose.xlu0.b32.cont [6/16] %v120, 128
        %160 = vxpose.xlu0.b32.cont [7/16] %v120, 128
        %161 = vxpose.xlu0.b32.cont [8/16] %v120, 128
        %162 = vxpose.xlu0.b32.cont [9/16] %v120, 128
        %163 = vxpose.xlu0.b32.cont [10/16] %v120, 128
        %164 = vxpose.xlu0.b32.cont [11/16] %v120, 128
        %165 = vxpose.xlu0.b32.cont [12/16] %v120, 128
        %166 = vxpose.xlu0.b32.cont [13/16] %v120, 128
        %167 = vxpose.xlu0.b32.cont [14/16] %v120, 128
        %168 = vxpose.xlu0.b32.cont [15/16] %v120, 128
        %169 = vxpose.xlu0.b32.end [16/16] %v120, 128
        %v170 = vpop.trf.xlu0
        %v171 = vpop.trf.xlu0
        %v172 = vpop.trf.xlu0
        %v173 = vpop.trf.xlu0
        %v174 = vpop.trf.xlu0
        %v175 = vpop.trf.xlu0
        %v176 = vpop.trf.xlu0
        %v177 = vpop.trf.xlu0
        %v178 = vpop.trf.xlu0
        %v179 = vpop.trf.xlu0
        %v180 = vpop.trf.xlu0
        %v181 = vpop.trf.xlu0
        %v182 = vpop.trf.xlu0
        %v183 = vpop.trf.xlu0
        %v184 = vpop.trf.xlu0
        %v185 = vpop.trf.xlu0
        %186 = xla_tuple %v138, %v170
        %187 = xla_tuple %v139, %v171
        %vm188 = vcmp.gt.s32.totalorder %v139, %v138
        %vm189 = vcmp.eq.s32.totalorder %v139, %v138
        %vm190 = vcmp.lt.s32.totalorder %v171, %v170
        %vm191 = vmand %vm189, %vm190
        %vm192 = vmor %vm188, %vm191
        %v193 = vsel %vm192, %v139, %v138
        %v194 = vsel %vm192, %v171, %v170
        %195 = xla_tuple %v193, %v194
        %196 = xla_tuple %v140, %v172
        %vm197 = vcmp.gt.s32.totalorder %v140, %v193
        %vm198 = vcmp.eq.s32.totalorder %v140, %v193
        %vm199 = vcmp.lt.s32.totalorder %v172, %v194
        %vm200 = vmand %vm198, %vm199
        %vm201 = vmor %vm197, %vm200
        %v202 = vsel %vm201, %v140, %v193
        %v203 = vsel %vm201, %v172, %v194
        %204 = xla_tuple %v202, %v203
        %205 = xla_tuple %v141, %v173
        %vm206 = vcmp.gt.s32.totalorder %v141, %v202
        %vm207 = vcmp.eq.s32.totalorder %v141, %v202
        %vm208 = vcmp.lt.s32.totalorder %v173, %v203
        %vm209 = vmand %vm207, %vm208
        %vm210 = vmor %vm206, %vm209
        %v211 = vsel %vm210, %v141, %v202
        %v212 = vsel %vm210, %v173, %v203
        %213 = xla_tuple %v211, %v212
        %214 = xla_tuple %v142, %v174
        %vm215 = vcmp.gt.s32.totalorder %v142, %v211
        %vm216 = vcmp.eq.s32.totalorder %v142, %v211
        %vm217 = vcmp.lt.s32.totalorder %v174, %v212
        %vm218 = vmand %vm216, %vm217
        %vm219 = vmor %vm215, %vm218
        %v220 = vsel %vm219, %v142, %v211
        %v221 = vsel %vm219, %v174, %v212
        %222 = xla_tuple %v220, %v221
        %223 = xla_tuple %v143, %v175
        %vm224 = vcmp.gt.s32.totalorder %v143, %v220
        %vm225 = vcmp.eq.s32.totalorder %v143, %v220
        %vm226 = vcmp.lt.s32.totalorder %v175, %v221
        %vm227 = vmand %vm225, %vm226
        %vm228 = vmor %vm224, %vm227
        %v229 = vsel %vm228, %v143, %v220
        %v230 = vsel %vm228, %v175, %v221
        %231 = xla_tuple %v229, %v230
        %232 = xla_tuple %v144, %v176
        %vm233 = vcmp.gt.s32.totalorder %v144, %v229
        %vm234 = vcmp.eq.s32.totalorder %v144, %v229
        %vm235 = vcmp.lt.s32.totalorder %v176, %v230
        %vm236 = vmand %vm234, %vm235
        %vm237 = vmor %vm233, %vm236
        %v238 = vsel %vm237, %v144, %v229
        %v239 = vsel %vm237, %v176, %v230
        %240 = xla_tuple %v238, %v239
        %241 = xla_tuple %v145, %v177
        %vm242 = vcmp.gt.s32.totalorder %v145, %v238
        %vm243 = vcmp.eq.s32.totalorder %v145, %v238
        %vm244 = vcmp.lt.s32.totalorder %v177, %v239
        %vm245 = vmand %vm243, %vm244
        %vm246 = vmor %vm242, %vm245
        %v247 = vsel %vm246, %v145, %v238
        %v248 = vsel %vm246, %v177, %v239
        %249 = xla_tuple %v247, %v248
        %250 = xla_tuple %v146, %v178
        %vm251 = vcmp.gt.s32.totalorder %v146, %v247
        %vm252 = vcmp.eq.s32.totalorder %v146, %v247
        %vm253 = vcmp.lt.s32.totalorder %v178, %v248
        %vm254 = vmand %vm252, %vm253
        %vm255 = vmor %vm251, %vm254
        %v256 = vsel %vm255, %v146, %v247
        %v257 = vsel %vm255, %v178, %v248
        %258 = xla_tuple %v256, %v257
        %259 = xla_tuple %v147, %v179
        %vm260 = vcmp.gt.s32.totalorder %v147, %v256
        %vm261 = vcmp.eq.s32.totalorder %v147, %v256
        %vm262 = vcmp.lt.s32.totalorder %v179, %v257
        %vm263 = vmand %vm261, %vm262
        %vm264 = vmor %vm260, %vm263
        %v265 = vsel %vm264, %v147, %v256
        %v266 = vsel %vm264, %v179, %v257
        %267 = xla_tuple %v265, %v266
        %268 = xla_tuple %v148, %v180
        %vm269 = vcmp.gt.s32.totalorder %v148, %v265
        %vm270 = vcmp.eq.s32.totalorder %v148, %v265
        %vm271 = vcmp.lt.s32.totalorder %v180, %v266
        %vm272 = vmand %vm270, %vm271
        %vm273 = vmor %vm269, %vm272
        %v274 = vsel %vm273, %v148, %v265
        %v275 = vsel %vm273, %v180, %v266
        %276 = xla_tuple %v274, %v275
        %277 = xla_tuple %v149, %v181
        %vm278 = vcmp.gt.s32.totalorder %v149, %v274
        %vm279 = vcmp.eq.s32.totalorder %v149, %v274
        %vm280 = vcmp.lt.s32.totalorder %v181, %v275
        %vm281 = vmand %vm279, %vm280
        %vm282 = vmor %vm278, %vm281
        %v283 = vsel %vm282, %v149, %v274
        %v284 = vsel %vm282, %v181, %v275
        %285 = xla_tuple %v283, %v284
        %286 = xla_tuple %v150, %v182
        %vm287 = vcmp.gt.s32.totalorder %v150, %v283
        %vm288 = vcmp.eq.s32.totalorder %v150, %v283
        %vm289 = vcmp.lt.s32.totalorder %v182, %v284
        %vm290 = vmand %vm288, %vm289
        %vm291 = vmor %vm287, %vm290
        %v292 = vsel %vm291, %v150, %v283
        %v293 = vsel %vm291, %v182, %v284
        %294 = xla_tuple %v292, %v293
        %295 = xla_tuple %v151, %v183
        %vm296 = vcmp.gt.s32.totalorder %v151, %v292
        %vm297 = vcmp.eq.s32.totalorder %v151, %v292
        %vm298 = vcmp.lt.s32.totalorder %v183, %v293
        %vm299 = vmand %vm297, %vm298
        %vm300 = vmor %vm296, %vm299
        %v301 = vsel %vm300, %v151, %v292
        %v302 = vsel %vm300, %v183, %v293
        %303 = xla_tuple %v301, %v302
        %304 = xla_tuple %v152, %v184
        %vm305 = vcmp.gt.s32.totalorder %v152, %v301
        %vm306 = vcmp.eq.s32.totalorder %v152, %v301
        %vm307 = vcmp.lt.s32.totalorder %v184, %v302
        %vm308 = vmand %vm306, %vm307
        %vm309 = vmor %vm305, %vm308
        %v310 = vsel %vm309, %v152, %v301
        %v311 = vsel %vm309, %v184, %v302
        %312 = xla_tuple %v310, %v311
        %313 = xla_tuple %v153, %v185
        %vm314 = vcmp.gt.s32.totalorder %v153, %v310
        %vm315 = vcmp.eq.s32.totalorder %v153, %v310
        %vm316 = vcmp.lt.s32.totalorder %v185, %v311
        %vm317 = vmand %vm315, %vm316
        %vm318 = vmor %vm314, %vm317
        %v319 = vsel %vm318, %v153, %v310
        %v320 = vsel %vm318, %v185, %v311
        %321 = xla_tuple %v319, %v320
        %v322 = vrot.slane %v319, 1
        %v323 = vrot.slane %v320, 1
        %324 = xla_tuple %v322, %v323
        %vm325 = vcmp.gt.s32.totalorder %v322, %v319
        %vm326 = vcmp.eq.s32.totalorder %v322, %v319
        %vm327 = vcmp.lt.s32.totalorder %v323, %v320
        %vm328 = vmand %vm326, %vm327
        %vm329 = vmor %vm325, %vm328
        %v330 = vsel %vm329, %v322, %v319
        %v331 = vsel %vm329, %v323, %v320
        %332 = xla_tuple %v330, %v331
        %v333 = vrot.slane %v330, 1
        %v334 = vrot.slane %v331, 1
        %335 = xla_tuple %v333, %v334
        %vm336 = vcmp.gt.s32.totalorder %v333, %v330
        %vm337 = vcmp.eq.s32.totalorder %v333, %v330
        %vm338 = vcmp.lt.s32.totalorder %v334, %v331
        %vm339 = vmand %vm337, %vm338
        %vm340 = vmor %vm336, %vm339
        %v341 = vsel %vm340, %v333, %v330
        %v342 = vsel %vm340, %v334, %v331
        %343 = xla_tuple %v341, %v342
        %v344 = vrot.slane %v341, 1
        %v345 = vrot.slane %v342, 1
        %346 = xla_tuple %v344, %v345
        %vm347 = vcmp.gt.s32.totalorder %v344, %v341
        %vm348 = vcmp.eq.s32.totalorder %v344, %v341
        %vm349 = vcmp.lt.s32.totalorder %v345, %v342
        %vm350 = vmand %vm348, %vm349
        %vm351 = vmor %vm347, %vm350
        %v352 = vsel %vm351, %v344, %v341
        %v353 = vsel %vm351, %v345, %v342
        %354 = xla_tuple %v352, %v353
        %v355 = vrot.slane %v352, 1
        %v356 = vrot.slane %v353, 1
        %357 = xla_tuple %v355, %v356
        %vm358 = vcmp.gt.s32.totalorder %v355, %v352
        %vm359 = vcmp.eq.s32.totalorder %v355, %v352
        %vm360 = vcmp.lt.s32.totalorder %v356, %v353
        %vm361 = vmand %vm359, %vm360
        %vm362 = vmor %vm358, %vm361
        %v363 = vsel %vm362, %v355, %v352
        %v364 = vsel %vm362, %v356, %v353
        %365 = xla_tuple %v363, %v364
        %v366 = vrot.slane %v363, 1
        %v367 = vrot.slane %v364, 1
        %368 = xla_tuple %v366, %v367
        %vm369 = vcmp.gt.s32.totalorder %v366, %v363
        %vm370 = vcmp.eq.s32.totalorder %v366, %v363
        %vm371 = vcmp.lt.s32.totalorder %v367, %v364
        %vm372 = vmand %vm370, %vm371
        %vm373 = vmor %vm369, %vm372
        %v374 = vsel %vm373, %v366, %v363
        %v375 = vsel %vm373, %v367, %v364
        %376 = xla_tuple %v374, %v375
        %v377 = vrot.slane %v374, 1
        %v378 = vrot.slane %v375, 1
        %379 = xla_tuple %v377, %v378
        %vm380 = vcmp.gt.s32.totalorder %v377, %v374
        %vm381 = vcmp.eq.s32.totalorder %v377, %v374
        %vm382 = vcmp.lt.s32.totalorder %v378, %v375
        %vm383 = vmand %vm381, %vm382
        %vm384 = vmor %vm380, %vm383
        %v385 = vsel %vm384, %v377, %v374
        %v386 = vsel %vm384, %v378, %v375
        %387 = xla_tuple %v385, %v386
        %v388 = vrot.slane %v385, 1
        %v389 = vrot.slane %v386, 1
        %390 = xla_tuple %v388, %v389
        %vm391 = vcmp.gt.s32.totalorder %v388, %v385
        %vm392 = vcmp.eq.s32.totalorder %v388, %v385
        %vm393 = vcmp.lt.s32.totalorder %v389, %v386
        %vm394 = vmand %vm392, %vm393
        %vm395 = vmor %vm391, %vm394
        %v396 = vsel %vm395, %v388, %v385
        %v397 = vsel %vm395, %v389, %v386
        %398 = xla_tuple %v396, %v397
        %s399 = scalar_lea.vmem [#allocation13], %s81
        %400 = vst [vmem:[%s399] sm:$0x1] %v396
        %s401 = scalar_lea.vmem [#allocation15], %s81
        %402 = vst [vmem:[%s401] sm:$0x1] %v397
        %403 = xla_tuple %400, %402
        %404 = vxpose.xlu0.b32.start [1/16] %v397, 128
        %405 = vxpose.xlu0.b32.cont [2/16] 0.0, 128
        %406 = vxpose.xlu0.b32.cont [3/16] 0.0, 128
        %407 = vxpose.xlu0.b32.cont [4/16] 0.0, 128
        %408 = vxpose.xlu0.b32.cont [5/16] 0.0, 128
        %409 = vxpose.xlu0.b32.cont [6/16] 0.0, 128
        %410 = vxpose.xlu0.b32.cont [7/16] 0.0, 128
        %411 = vxpose.xlu0.b32.cont [8/16] 0.0, 128
        %412 = vxpose.xlu0.b32.cont [9/16] 0.0, 128
        %413 = vxpose.xlu0.b32.cont [10/16] 0.0, 128
        %414 = vxpose.xlu0.b32.cont [11/16] 0.0, 128
        %415 = vxpose.xlu0.b32.cont [12/16] 0.0, 128
        %416 = vxpose.xlu0.b32.cont [13/16] 0.0, 128
        %417 = vxpose.xlu0.b32.cont [14/16] 0.0, 128
        %418 = vxpose.xlu0.b32.cont [15/16] 0.0, 128
        %419 = vxpose.xlu0.b32.end [16/16] 0.0, 128
        %v420 = vpop.trf.xlu0
        %v421 = vpop.trf.xlu0
        %v422 = vpop.trf.xlu0
        %v423 = vpop.trf.xlu0
        %v424 = vpop.trf.xlu0
        %v425 = vpop.trf.xlu0
        %v426 = vpop.trf.xlu0
        %v427 = vpop.trf.xlu0
        %v428 = vpop.trf.xlu0
        %v429 = vpop.trf.xlu0
        %v430 = vpop.trf.xlu0
        %v431 = vpop.trf.xlu0
        %v432 = vpop.trf.xlu0
        %v433 = vpop.trf.xlu0
        %v434 = vpop.trf.xlu0
        %v435 = vpop.trf.xlu0
        %s436 = vtos %v420
        %s437 = sshrl.u32 %s436, 9
        %p438 = scmp.lt.s32.totalorder %s436, 0
        %s439 = ssub.s32 0, %s436
        %s440 = scalar_select %p438, %s439, %s436
        %s441 = sand.u32 %s440, 511
        %s442 = ssub.s32 0, %s441
        %s443 = scalar_select %p438, %s442, %s441
        %s444 = sshrl.u32 %s443, 7
        %s445 = smul.u32 %s444, 256
        %s446 = sand.u32 %s443, 127
        %s447 = sadd.s32 %s445, %s446
        %v448 = vlaneseq
        %v449 = vstv %s447
        %vm451 = vcmp.eq.s32.totalorder %v448, %v449
        %s452 = smul.addr %s437, 8
        %s453 = scalar_lea.vmem [#allocation16], %s452
        %454 = vst.msk [vmem:[%s453] sm:$0xff] %vm451, 2147483648
        %s455 = smul.addr %s437, 8
        %s456 = scalar_lea.vmem [#allocation17], %s455
        %457 = vst.msk [vmem:[%s456] sm:$0xff] %vm451, 2147483647
        %458 = xla_tuple %454, %457
        %v459 = vrot.slane %v420, 1
        %s460 = vtos %v459
        %s461 = sshrl.u32 %s460, 9
        %p462 = scmp.lt.s32.totalorder %s460, 0
        %s463 = ssub.s32 0, %s460
        %s464 = scalar_select %p462, %s463, %s460
        %s465 = sand.u32 %s464, 511
        %s466 = ssub.s32 0, %s465
        %s467 = scalar_select %p462, %s466, %s465
        %s468 = sshrl.u32 %s467, 7
        %s469 = smul.u32 %s468, 256
        %s470 = sand.u32 %s467, 127
        %s471 = sadd.s32 %s469, %s470
        %v472 = vlaneseq
        %v473 = vstv %s471
        %v474 = vadd.s32 %v473, 128
        %vm475 = vcmp.eq.s32.totalorder %v472, %v474
        %s476 = smul.addr %s461, 8
        %s477 = scalar_lea.vmem [#allocation16], %s476
        %478 = vst.msk [vmem:[%s477] sm:$0xff] %vm475, 2147483648
        %s479 = smul.addr %s461, 8
        %s480 = scalar_lea.vmem [#allocation17], %s479
        %481 = vst.msk [vmem:[%s480] sm:$0xff] %vm475, 2147483647
        %482 = xla_tuple %478, %481
        %v483 = vrot.slane %v459, 1
      $region45: #{custom-call} parent=2 // loop_footer
        %s85 = sadd.s32 1, %s81
      $region46: #{custom-call} parent=2 // loop_footer_branch
        %80 = sbr.rel target = $region42
      $region47: #{custom-call} parent=2 // loop_exit
        _
      %s484 = scalar_lea.vmem [#allocation13], 7
      %v485 = vld [vmem:[%s484] ss:$-1 sm:$0xff]
      %s486 = scalar_lea.vmem [#allocation13], 7
      %v487 = vld [vmem:[%s486] ss:$-1 sm:$0xff]
      %488 = vst [vmem:[#allocation13] sm:$0xff] %v487
      %489 = vst [vmem:[#allocation13] sm:$0xff] %v485
      %s490 = scalar_lea.vmem [#allocation15], 7
      %v491 = vld [vmem:[%s490] ss:$-1 sm:$0xff]
      %s492 = scalar_lea.vmem [#allocation15], 7
      %v493 = vld [vmem:[%s492] ss:$-1 sm:$0xff]
      %494 = vst [vmem:[#allocation15] sm:$0xff] %v493
      %495 = vst [vmem:[#allocation15] sm:$0xff] %v491
      %496 = xla_tuple %489, %495
      %v497 = vld [vmem:[#allocation12] sm:$0xff]
      %v498 = vld [vmem:[#allocation14] sm:$0xff]
      %499 = xla_tuple %v497, %v498
      %v500 = vld [vmem:[#allocation13] sm:$0xff]
      %v501 = vld [vmem:[#allocation15] sm:$0xff]
      %502 = xla_tuple %v500, %v501
      %vm503 = vcmp.gt.s32.totalorder %v497, %v500
      %vm504 = vcmp.eq.s32.totalorder %v497, %v500
      %vm505 = vcmp.lt.s32.totalorder %v498, %v501
      %vm506 = vmand %vm504, %vm505
      %vm507 = vmor %vm503, %vm506
      %v508 = vsel %vm507, %v497, %v500
      %509 = vst [vmem:[#allocation12] sm:$0xff] %v508
      %v510 = vsel %vm507, %v500, %v497
      %511 = vst [vmem:[#allocation13] sm:$0xff] %v510
      %v512 = vsel %vm507, %v498, %v501
      %513 = vst [vmem:[#allocation14] sm:$0xff] %v512
      %v514 = vsel %vm507, %v501, %v498
      %515 = vst [vmem:[#allocation15] sm:$0xff] %v514
      %516 = xla_tuple %511, %515
      %517 = xla_tuple [#allocation12], [#allocation14]
      %v518 = vld [vmem:[#allocation12] sm:$0xff]
      %v519 = vld [vmem:[#allocation14] sm:$0xff]
      %520 = xla_tuple %v518, %v519
      %v522 = vunpack.c.l.s4 839939668
      %v523 = vunpack.c.0.s8 %v522
      %v524 = vperm.slane %v518, %v523
      %v526 = vunpack.c.l.s4 839939668
      %v527 = vunpack.c.0.s8 %v526
      %v528 = vperm.slane %v519, %v527
      %529 = xla_tuple %v524, %v528
      %vm530 = vcmp.gt.s32.totalorder %v518, %v524
      %vm531 = vcmp.eq.s32.totalorder %v518, %v524
      %vm532 = vcmp.lt.s32.totalorder %v519, %v528
      %vm533 = vmand %vm531, %vm532
      %vm534 = vmor %vm530, %vm533
      %v535 = vlaneseq
      %v536 = vshrl.u32 %v535, 7
      %v537 = vand.u32 %v536, 4
      %vm538 = vcmp.ne.s32.totalorder %v537, 0
      %vm539 = vmxor %vm534, %vm538
      %v540 = vsel %vm539, %v518, %v524
      %v541 = vsel %vm539, %v519, %v528
      %542 = xla_tuple %v540, %v541
      %v544 = vunpack.c.l.s4 1417023538
      %v545 = vunpack.c.0.s8 %v544
      %v546 = vperm.slane %v540, %v545
      %v548 = vunpack.c.l.s4 1417023538
      %v549 = vunpack.c.0.s8 %v548
      %v550 = vperm.slane %v541, %v549
      %551 = xla_tuple %v546, %v550
      %vm552 = vcmp.gt.s32.totalorder %v540, %v546
      %vm553 = vcmp.eq.s32.totalorder %v540, %v546
      %vm554 = vcmp.lt.s32.totalorder %v541, %v550
      %vm555 = vmand %vm553, %vm554
      %vm556 = vmor %vm552, %vm555
      %v557 = vlaneseq
      %v558 = vshrl.u32 %v557, 7
      %v559 = vand.u32 %v558, 2
      %vm560 = vcmp.ne.s32.totalorder %v559, 0
      %vm561 = vmxor %vm556, %vm560
      %v562 = vsel %vm561, %v540, %v546
      %v563 = vsel %vm561, %v541, %v550
      %564 = xla_tuple %v562, %v563
      %v566 = vunpack.c.l.s4 1732584193
      %v567 = vunpack.c.0.s8 %v566
      %v568 = vperm.slane %v562, %v567
      %v570 = vunpack.c.l.s4 1732584193
      %v571 = vunpack.c.0.s8 %v570
      %v572 = vperm.slane %v563, %v571
      %573 = xla_tuple %v568, %v572
      %vm574 = vcmp.gt.s32.totalorder %v562, %v568
      %vm575 = vcmp.eq.s32.totalorder %v562, %v568
      %vm576 = vcmp.lt.s32.totalorder %v563, %v572
      %vm577 = vmand %vm575, %vm576
      %vm578 = vmor %vm574, %vm577
      %v579 = vlaneseq
      %v580 = vshrl.u32 %v579, 7
      %v581 = vand.u32 %v580, 1
      %vm582 = vcmp.ne.s32.totalorder %v581, 0
      %vm583 = vmxor %vm578, %vm582
      %v584 = vsel %vm583, %v562, %v568
      %v585 = vsel %vm583, %v563, %v572
      %586 = xla_tuple %v584, %v585
      %587 = vst [vmem:[#allocation12] sm:$0xff] %v584
      %588 = vst [vmem:[#allocation14] sm:$0xff] %v585
      %589 = xla_tuple %587, %588
      %v590 = vld [vmem:[#allocation12] sm:$0xff]
      %v591 = vld [vmem:[#allocation14] sm:$0xff]
      %592 = xla_tuple %v590, %v591
      %v594 = vunpack.c.l.s4 839939668
      %v595 = vunpack.c.0.s8 %v594
      %v596 = vperm.slane %v590, %v595
      %v598 = vunpack.c.l.s4 839939668
      %v599 = vunpack.c.0.s8 %v598
      %v600 = vperm.slane %v591, %v599
      %601 = xla_tuple %v596, %v600
      %vm602 = vcmp.gt.s32.totalorder %v590, %v596
      %vm603 = vcmp.eq.s32.totalorder %v590, %v596
      %vm604 = vcmp.lt.s32.totalorder %v591, %v600
      %vm605 = vmand %vm603, %vm604
      %vm606 = vmor %vm602, %vm605
      %v607 = vlaneseq
      %v608 = vshrl.u32 %v607, 7
      %v609 = vand.u32 %v608, 4
      %vm610 = vcmp.ne.s32.totalorder %v609, 0
      %vm611 = vmxor %vm606, %vm610
      %v612 = vsel %vm611, %v590, %v596
      %v613 = vsel %vm611, %v591, %v600
      %614 = xla_tuple %v612, %v613
      %v616 = vunpack.c.l.s4 1417023538
      %v617 = vunpack.c.0.s8 %v616
      %v618 = vperm.slane %v612, %v617
      %v620 = vunpack.c.l.s4 1417023538
      %v621 = vunpack.c.0.s8 %v620
      %v622 = vperm.slane %v613, %v621
      %623 = xla_tuple %v618, %v622
      %vm624 = vcmp.gt.s32.totalorder %v612, %v618
      %vm625 = vcmp.eq.s32.totalorder %v612, %v618
      %vm626 = vcmp.lt.s32.totalorder %v613, %v622
      %vm627 = vmand %vm625, %vm626
      %vm628 = vmor %vm624, %vm627
      %v629 = vlaneseq
      %v630 = vshrl.u32 %v629, 7
      %v631 = vand.u32 %v630, 2
      %vm632 = vcmp.ne.s32.totalorder %v631, 0
      %vm633 = vmxor %vm628, %vm632
      %v634 = vsel %vm633, %v612, %v618
      %v635 = vsel %vm633, %v613, %v622
      %636 = xla_tuple %v634, %v635
      %v638 = vunpack.c.l.s4 1732584193
      %v639 = vunpack.c.0.s8 %v638
      %v640 = vperm.slane %v634, %v639
      %v642 = vunpack.c.l.s4 1732584193
      %v643 = vunpack.c.0.s8 %v642
      %v644 = vperm.slane %v635, %v643
      %645 = xla_tuple %v640, %v644
      %vm646 = vcmp.gt.s32.totalorder %v634, %v640
      %vm647 = vcmp.eq.s32.totalorder %v634, %v640
      %vm648 = vcmp.lt.s32.totalorder %v635, %v644
      %vm649 = vmand %vm647, %vm648
      %vm650 = vmor %vm646, %vm649
      %v651 = vlaneseq
      %v652 = vshrl.u32 %v651, 7
      %v653 = vand.u32 %v652, 1
      %vm654 = vcmp.ne.s32.totalorder %v653, 0
      %vm655 = vmxor %vm650, %vm654
      %v656 = vsel %vm655, %v634, %v640
      %v657 = vsel %vm655, %v635, %v644
      %658 = xla_tuple %v656, %v657
      %659 = vst [vmem:[#allocation12] sm:$0xff] %v656
      %660 = vst [vmem:[#allocation14] sm:$0xff] %v657
      %661 = xla_tuple %659, %660
      %662 = xla_tuple [#allocation13], [#allocation15]
      %v663 = vld [vmem:[#allocation13] sm:$0xff]
      %v664 = vld [vmem:[#allocation15] sm:$0xff]
      %665 = xla_tuple %v663, %v664
      %v667 = vunpack.c.l.s4 839939668
      %v668 = vunpack.c.0.s8 %v667
      %v669 = vperm.slane %v663, %v668
      %v671 = vunpack.c.l.s4 839939668
      %v672 = vunpack.c.0.s8 %v671
      %v673 = vperm.slane %v664, %v672
      %674 = xla_tuple %v669, %v673
      %vm675 = vcmp.gt.s32.totalorder %v663, %v669
      %vm676 = vcmp.eq.s32.totalorder %v663, %v669
      %vm677 = vcmp.lt.s32.totalorder %v664, %v673
      %vm678 = vmand %vm676, %vm677
      %vm679 = vmor %vm675, %vm678
      %v680 = vlaneseq
      %v681 = vshrl.u32 %v680, 7
      %v682 = vand.u32 %v681, 4
      %vm683 = vcmp.ne.s32.totalorder %v682, 0
      %vm684 = vmxor %vm679, %vm683
      %v685 = vsel %vm684, %v663, %v669
      %v686 = vsel %vm684, %v664, %v673
      %687 = xla_tuple %v685, %v686
      %v689 = vunpack.c.l.s4 1417023538
      %v690 = vunpack.c.0.s8 %v689
      %v691 = vperm.slane %v685, %v690
      %v693 = vunpack.c.l.s4 1417023538
      %v694 = vunpack.c.0.s8 %v693
      %v695 = vperm.slane %v686, %v694
      %696 = xla_tuple %v691, %v695
      %vm697 = vcmp.gt.s32.totalorder %v685, %v691
      %vm698 = vcmp.eq.s32.totalorder %v685, %v691
      %vm699 = vcmp.lt.s32.totalorder %v686, %v695
      %vm700 = vmand %vm698, %vm699
      %vm701 = vmor %vm697, %vm700
      %v702 = vlaneseq
      %v703 = vshrl.u32 %v702, 7
      %v704 = vand.u32 %v703, 2
      %vm705 = vcmp.ne.s32.totalorder %v704, 0
      %vm706 = vmxor %vm701, %vm705
      %v707 = vsel %vm706, %v685, %v691
      %v708 = vsel %vm706, %v686, %v695
      %709 = xla_tuple %v707, %v708
      %v711 = vunpack.c.l.s4 1732584193
      %v712 = vunpack.c.0.s8 %v711
      %v713 = vperm.slane %v707, %v712
      %v715 = vunpack.c.l.s4 1732584193
      %v716 = vunpack.c.0.s8 %v715
      %v717 = vperm.slane %v708, %v716
      %718 = xla_tuple %v713, %v717
      %vm719 = vcmp.gt.s32.totalorder %v707, %v713
      %vm720 = vcmp.eq.s32.totalorder %v707, %v713
      %vm721 = vcmp.lt.s32.totalorder %v708, %v717
      %vm722 = vmand %vm720, %vm721
      %vm723 = vmor %vm719, %vm722
      %v724 = vlaneseq
      %v725 = vshrl.u32 %v724, 7
      %v726 = vand.u32 %v725, 1
      %vm727 = vcmp.ne.s32.totalorder %v726, 0
      %vm728 = vmxor %vm723, %vm727
      %v729 = vsel %vm728, %v707, %v713
      %v730 = vsel %vm728, %v708, %v717
      %731 = xla_tuple %v729, %v730
      %732 = vst [vmem:[#allocation13] sm:$0xff] %v729
      %733 = vst [vmem:[#allocation15] sm:$0xff] %v730
      %734 = xla_tuple %732, %733
      %v735 = vld [vmem:[#allocation13] sm:$0xff]
      %v736 = vld [vmem:[#allocation15] sm:$0xff]
      %737 = xla_tuple %v735, %v736
      %v739 = vunpack.c.l.s4 839939668
      %v740 = vunpack.c.0.s8 %v739
      %v741 = vperm.slane %v735, %v740
      %v743 = vunpack.c.l.s4 839939668
      %v744 = vunpack.c.0.s8 %v743
      %v745 = vperm.slane %v736, %v744
      %746 = xla_tuple %v741, %v745
      %vm747 = vcmp.gt.s32.totalorder %v735, %v741
      %vm748 = vcmp.eq.s32.totalorder %v735, %v741
      %vm749 = vcmp.lt.s32.totalorder %v736, %v745
      %vm750 = vmand %vm748, %vm749
      %vm751 = vmor %vm747, %vm750
      %v752 = vlaneseq
      %v753 = vshrl.u32 %v752, 7
      %v754 = vand.u32 %v753, 4
      %vm755 = vcmp.ne.s32.totalorder %v754, 0
      %vm756 = vmxor %vm751, %vm755
      %v757 = vsel %vm756, %v735, %v741
      %v758 = vsel %vm756, %v736, %v745
      %759 = xla_tuple %v757, %v758
      %v761 = vunpack.c.l.s4 1417023538
      %v762 = vunpack.c.0.s8 %v761
      %v763 = vperm.slane %v757, %v762
      %v765 = vunpack.c.l.s4 1417023538
      %v766 = vunpack.c.0.s8 %v765
      %v767 = vperm.slane %v758, %v766
      %768 = xla_tuple %v763, %v767
      %vm769 = vcmp.gt.s32.totalorder %v757, %v763
      %vm770 = vcmp.eq.s32.totalorder %v757, %v763
      %vm771 = vcmp.lt.s32.totalorder %v758, %v767
      %vm772 = vmand %vm770, %vm771
      %vm773 = vmor %vm769, %vm772
      %v774 = vlaneseq
      %v775 = vshrl.u32 %v774, 7
      %v776 = vand.u32 %v775, 2
      %vm777 = vcmp.ne.s32.totalorder %v776, 0
      %vm778 = vmxor %vm773, %vm777
      %v779 = vsel %vm778, %v757, %v763
      %v780 = vsel %vm778, %v758, %v767
      %781 = xla_tuple %v779, %v780
      %v783 = vunpack.c.l.s4 1732584193
      %v784 = vunpack.c.0.s8 %v783
      %v785 = vperm.slane %v779, %v784
      %v787 = vunpack.c.l.s4 1732584193
      %v788 = vunpack.c.0.s8 %v787
      %v789 = vperm.slane %v780, %v788
      %790 = xla_tuple %v785, %v789
      %vm791 = vcmp.gt.s32.totalorder %v779, %v785
      %vm792 = vcmp.eq.s32.totalorder %v779, %v785
      %vm793 = vcmp.lt.s32.totalorder %v780, %v789
      %vm794 = vmand %vm792, %vm793
      %vm795 = vmor %vm791, %vm794
      %v796 = vlaneseq
      %v797 = vshrl.u32 %v796, 7
      %v798 = vand.u32 %v797, 1
      %vm799 = vcmp.ne.s32.totalorder %v798, 0
      %vm800 = vmxor %vm795, %vm799
      %v801 = vsel %vm800, %v779, %v785
      %v802 = vsel %vm800, %v780, %v789
      %803 = xla_tuple %v801, %v802
      %804 = vst [vmem:[#allocation13] sm:$0xff] %v801
      %805 = vst [vmem:[#allocation15] sm:$0xff] %v802
      %806 = xla_tuple %804, %805
    %v807 = vld [vmem:[#allocation12] sm:$0xff]
    %vm808 = vcmp.lt.s32.totalorder %v807, 0
    %v809 = vsub.s32 2147483647, %v807
    %v810 = vsel %vm808, %v809, %v807
    %811 = vst [vmem:[#allocation12] sm:$0xff] %v810
    %v812 = vld [vmem:[#allocation12] sm:$0xff]
    %813 = vxpose.xlu0.b32.start.end [1/1] (short) %v812, 128
    %v814 = vpop.trf.xlu0
    %v815 = vpop.trf.xlu0
    %v816 = vpop.trf.xlu0
    %v817 = vpop.trf.xlu0
    %v818 = vpop.trf.xlu0
    %v819 = vpop.trf.xlu0
    %v820 = vpop.trf.xlu0
    %v821 = vpop.trf.xlu0
    %v822 = vpop.trf.xlu0
    %v823 = vpop.trf.xlu0
    %v824 = vpop.trf.xlu0
    %v825 = vpop.trf.xlu0
    %v826 = vpop.trf.xlu0
    %v827 = vpop.trf.xlu0
    %v828 = vpop.trf.xlu0
    %v829 = vpop.trf.xlu0
    %830 = vst [vmem:[#allocation7] sm:$0xff] %v814
    %v831 = vld [vmem:[#allocation14] sm:$0xff]
    %832 = vxpose.xlu0.b32.start.end [1/1] (short) %v831, 128
    %v833 = vpop.trf.xlu0
    %v834 = vpop.trf.xlu0
    %v835 = vpop.trf.xlu0
    %v836 = vpop.trf.xlu0
    %v837 = vpop.trf.xlu0
    %v838 = vpop.trf.xlu0
    %v839 = vpop.trf.xlu0
    %v840 = vpop.trf.xlu0
    %v841 = vpop.trf.xlu0
    %v842 = vpop.trf.xlu0
    %v843 = vpop.trf.xlu0
    %v844 = vpop.trf.xlu0
    %v845 = vpop.trf.xlu0
    %v846 = vpop.trf.xlu0
    %v847 = vpop.trf.xlu0
    %v848 = vpop.trf.xlu0
    %849 = vst [vmem:[#allocation10] sm:$0xff] %v833
    %s851 = ssub.s32 4, 1
    %v852 = vld [vmem:[#allocation7] sm:%s851]
    %s854 = ssub.s32 4, 1
    %855 = vst [vmem:[#allocation8] sm:%s854] %v852
    %s857 = ssub.s32 4, 1
    %v858 = vld [vmem:[#allocation10] sm:%s857]
    %s860 = ssub.s32 4, 1
    %861 = vst [vmem:[#allocation11] sm:%s860] %v858
    %863 = vsyncadd [#allocation9], 0
    %s865 = sshll.u32 [#allocation8], 4
    %s866 = int_to_ptr.vmem [resolvable:$true] %s865
    %s867 = sshll.u32 %s1, 4
    %s868 = int_to_ptr.hbm [resolvable:$true] %s867
    %870 = dma.vmem_to_hbm [thread:$0]  %s866, 32, %s868, [#allocation9]
    // Predicated region
    $region48: #{custom-call} parent=1 // pred_check
      _
    $region49: #{custom-call} parent=1 // pred_check_branch
      %872 = sbr.rel (0) target = $region51
    $region50: #{custom-call} parent=1 // pred_region
      // Predicated region
      $region52: #{custom-call} parent=50 // pred_check
        _
      $region53: #{custom-call} parent=50 // pred_check_branch
        %874 = sbr.rel target = $region55
      $region54: #{custom-call} parent=50 // pred_region
        // Predicated region
        $region67: #{custom-call} parent=54 // pred_check
          _
        $region68: #{custom-call} parent=54 // pred_check_branch
          %890 = sbr.rel (0) target = $region70
        $region69: #{custom-call} parent=54 // pred_region
          %s892 = ssub.s32 4, 1
          loop: start=0, step=1, limit=1
          $region71: #{custom-call} parent=69 // loop_pre_header
            _
          $region72: #{custom-call} parent=69 // loop_header
            %s894 = sphi 0, %s898
            %p895 = scmp.ge.s32.totalorder %s894, 1
            %s899 = sphi [#allocation11], [#allocation11]
            %s900 = sphi %s2, %s2
          $region73: #{custom-call} parent=69 // loop_header_branch
            %897 = sbr.rel (%p895) target = $region77
          $region74: #{custom-call} parent=69 // loop_body
            %v901 = vld [vmem:[%s899] sm:%s892]
            %902 = vst [vmem:[%s900] sm:%s892] %v901
          $region75: #{custom-call} parent=69 // loop_footer
            %s898 = sadd.s32 1, %s894
          $region76: #{custom-call} parent=69 // loop_footer_branch
            %893 = sbr.rel target = $region72
          $region77: #{custom-call} parent=69 // loop_exit
            _
        $region70: #{custom-call} parent=54 // pred_fallthru
          _
      $region55: #{custom-call} parent=50 // pred_fallthru
        _
      // Predicated region
      $region56: #{custom-call} parent=50 // pred_check
        _
      $region57: #{custom-call} parent=50 // pred_check_branch
        %876 = sbr.rel (0) target = $region59
      $region58: #{custom-call} parent=50 // pred_region
        %s878 = ssub.s32 4, 1
        loop: start=0, step=1, limit=1
        $region60: #{custom-call} parent=58 // loop_pre_header
          _
        $region61: #{custom-call} parent=58 // loop_header
          %s880 = sphi 0, %s884
          %p881 = scmp.ge.s32.totalorder %s880, 1
          %s885 = sphi [#allocation11], [#allocation11]
          %s886 = sphi %s2, %s2
        $region62: #{custom-call} parent=58 // loop_header_branch
          %883 = sbr.rel (%p881) target = $region66
        $region63: #{custom-call} parent=58 // loop_body
          %v887 = vld [vmem:[%s885] sm:%s878]
          %888 = vst [vmem:[%s886] sm:%s878] %v887
        $region64: #{custom-call} parent=58 // loop_footer
          %s884 = sadd.s32 1, %s880
        $region65: #{custom-call} parent=58 // loop_footer_branch
          %879 = sbr.rel target = $region61
        $region66: #{custom-call} parent=58 // loop_exit
          _
      $region59: #{custom-call} parent=50 // pred_fallthru
        _
    $region51: #{custom-call} parent=1 // pred_fallthru
      _
    %903 = vnop
    %905 = dma.done [#allocation9], 32
    %906 = vsyncpa [#allocation9], 1

// kernel: uninext_finelip_forward.4
$region0: #{uninext_finelip_forward.4}
  #allocation0 [shape = 'u32[]', space=smem, size = 0x4, offset = 0x4, fixed_abs, tag = 'smem constant byte address 0x4 - core index']
  #allocation1 [shape = 'u32[72,128]{1,0:T(1,128)}', space=vmem, size = 0x9000, scoped, tag = 'internal scratch']
  #allocation2 [shape = 'f32[16,64]{1,0:T(8,128)}', space=vmem, size = 0x2000, scoped, tag = 'scratch operand']
  %s0 = inlined_call_operand.vmem [shape: bf16[2,64,64], index: 0, kind: input, shape index: {}]
  %s1 = inlined_call_operand.vmem [shape: bf16[2,32,64], index: 1, kind: input, shape index: {}]
  %s2 = inlined_call_operand.vmem [shape: bf16[2,8,32], index: 2, kind: input, shape index: {}]
  %s3 = inlined_call_operand.vmem [shape: bf16[16,64], index: 3, kind: input, shape index: {}]
  %s4 = inlined_call_operand.vmem [shape: bf16[64,128], index: 4, kind: input, shape index: {}]
  %s5 = inlined_call_operand.vmem [shape: bf16[64,64], index: 5, kind: input, shape index: {}]
  %s6 = inlined_call_operand.vmem [shape: bf16[64,32], index: 6, kind: input, shape index: {}]
  %s7 = inlined_call_operand.vmem [shape: bf16[32,64], index: 7, kind: input, shape index: {}]
  %s8 = inlined_call_operand.vmem [shape: bf16[64,64], index: 8, kind: input, shape index: {}]
  %s9 = inlined_call_operand.vmem [shape: bf16[64,64], index: 9, kind: input, shape index: {}]
  %s10 = inlined_call_operand.vmem [shape: bf16[32,64], index: 10, kind: input, shape index: {}]
  %s11 = inlined_call_operand.vmem [shape: f32[8,256], index: 11, kind: input, shape index: {}]
  %s12 = inlined_call_operand.vmem [shape: bf16[2,16,64], index: 12, kind: output, shape index: {0}]
  %s13 = inlined_call_operand.vmem [shape: bf16[2,8,64], index: 13, kind: output, shape index: {1}]
  %s14 = inlined_call_operand.vmem [shape: f32[2,1,32], index: 14, kind: output, shape index: {2}]
  %s15 = inlined_call_operand.vmem [shape: f32[2,1,8], index: 15, kind: output, shape index: {3}]
  %16 = xla_tuple %s12, %s13, %s14, %s15
  %s17 = sld [smem:[#allocation0]]
  $region105: #{uninext_finelip_forward.4} parent=0
    _
  %s19 = ssub.s32 1, %s17
  %s20 = scalar_select 0, %s19, %s17
  loop: start=0, step=1, limit=4
  $region2: #{uninext_finelip_forward.4} parent=0 // loop_pre_header
    _
  $region3: #{uninext_finelip_forward.4} parent=0 // loop_header
    %s22 = sphi 0, %s26
    %p23 = scmp.ge.s32.totalorder %s22, 4
    %s32 = sphi 0, %s34
    %s35 = sphi 0, %s32
    %s36 = sphi 0, %s35
    %s52 = sphi 0, %s36
    %s58 = sphi 0, %s60
    %s61 = sphi 0, %s58
    %s62 = sphi 0, %s61
    %s78 = sphi 0, %s62
    %s84 = sphi 0, %s86
    %s87 = sphi 0, %s84
    %s88 = sphi 0, %s87
    %s104 = sphi 0, %s88
    %s108 = sphi 0, %s108
    %s110 = sphi 0, %s108
    %s111 = sphi 0, %s110
    %s125 = sphi 0, %s111
    %s129 = sphi 0, %s129
    %s131 = sphi 0, %s129
    %s132 = sphi 0, %s131
    %s146 = sphi 0, %s132
    %s150 = sphi 0, %s150
    %s152 = sphi 0, %s150
    %s153 = sphi 0, %s152
    %s167 = sphi 0, %s153
    %s171 = sphi 0, %s171
    %s173 = sphi 0, %s171
    %s174 = sphi 0, %s173
    %s188 = sphi 0, %s174
    %s192 = sphi 0, %s192
    %s194 = sphi 0, %s192
    %s195 = sphi 0, %s194
    %s209 = sphi 0, %s195
    %s213 = sphi 0, %s213
    %s215 = sphi 0, %s213
    %s216 = sphi 0, %s215
    %s230 = sphi 0, %s216
    %s234 = sphi 0, %s234
    %s236 = sphi 0, %s234
    %s237 = sphi 0, %s236
    %s251 = sphi 0, %s237
    %s255 = sphi 0, %s255
    %s257 = sphi 0, %s255
    %s258 = sphi 0, %s257
    %s272 = sphi 0, %s258
    %s276 = sphi 0, %s276
    %s278 = sphi 0, %s276
    %s279 = sphi 0, %s278
    %s293 = sphi 0, %s279
    %s299 = sphi 0, %s301
    %s302 = sphi 0, %s299
    %s303 = sphi 0, %s302
    %s319 = sphi 0, %s303
    %s325 = sphi 0, %s327
    %s328 = sphi 0, %s325
    %s329 = sphi 0, %s328
    %s345 = sphi 0, %s329
    %s351 = sphi 0, %s353
    %s354 = sphi 0, %s351
    %s355 = sphi 0, %s354
    %s371 = sphi 0, %s355
    %s377 = sphi 0, %s379
    %s380 = sphi 0, %s377
    %s381 = sphi 0, %s380
    %s397 = sphi 0, %s381
  $region4: #{uninext_finelip_forward.4} parent=0 // loop_header_branch
    %25 = sbr.rel (%p23) target = $region8
  $region5: #{uninext_finelip_forward.4} parent=0 // loop_body
    %s27 = ssub.s32 %s22, 1
    %s28 = ssub.s32 %s22, 2
    %s29 = sadd.s32 %s22, 1
    %s30 = ssub.s32 %s22, %s29
    %p31 = scmp.eq.s32.totalorder %s30, 0
    %s33 = sadd.s32 %s32, 1
    %s34 = scalar_select %p31, %s32, %s33
    %p37 = pneg %p31
    %p38 = scmp.eq.s32.totalorder %s22, 1
    %p39 = por %p37, %p38
    %p40 = scmp.ne.s32.totalorder %s32, %s35
    %p41 = scmp.eq.s32.totalorder %s22, 0
    %p42 = por %p40, %p41
    %p43 = scmp.ne.s32.totalorder %s32, %s35
    %p44 = scmp.eq.s32.totalorder %s27, 1
    %p45 = por %p43, %p44
    %p46 = scmp.ne.s32.totalorder %s35, %s36
    %p47 = scmp.eq.s32.totalorder %s27, 0
    %p48 = por %p46, %p47
    %p49 = scmp.ne.s32.totalorder %s35, %s36
    %p50 = scmp.eq.s32.totalorder %s28, 1
    %p51 = por %p49, %p50
    %p53 = scmp.ne.s32.totalorder %s36, %s52
    %p54 = scmp.eq.s32.totalorder %s28, 0
    %p55 = por %p53, %p54
    %s56 = ssub.s32 %s22, %s29
    %p57 = scmp.eq.s32.totalorder %s56, 0
    %s59 = sadd.s32 %s58, 1
    %s60 = scalar_select %p57, %s58, %s59
    %p63 = pneg %p57
    %p64 = scmp.eq.s32.totalorder %s22, 1
    %p65 = por %p63, %p64
    %p66 = scmp.ne.s32.totalorder %s58, %s61
    %p67 = scmp.eq.s32.totalorder %s22, 0
    %p68 = por %p66, %p67
    %p69 = scmp.ne.s32.totalorder %s58, %s61
    %p70 = scmp.eq.s32.totalorder %s27, 1
    %p71 = por %p69, %p70
    %p72 = scmp.ne.s32.totalorder %s61, %s62
    %p73 = scmp.eq.s32.totalorder %s27, 0
    %p74 = por %p72, %p73
    %p75 = scmp.ne.s32.totalorder %s61, %s62
    %p76 = scmp.eq.s32.totalorder %s28, 1
    %p77 = por %p75, %p76
    %p79 = scmp.ne.s32.totalorder %s62, %s78
    %p80 = scmp.eq.s32.totalorder %s28, 0
    %p81 = por %p79, %p80
    %s82 = ssub.s32 %s22, %s29
    %p83 = scmp.eq.s32.totalorder %s82, 0
    %s85 = sadd.s32 %s84, 1
    %s86 = scalar_select %p83, %s84, %s85
    %p89 = pneg %p83
    %p90 = scmp.eq.s32.totalorder %s22, 1
    %p91 = por %p89, %p90
    %p92 = scmp.ne.s32.totalorder %s84, %s87
    %p93 = scmp.eq.s32.totalorder %s22, 0
    %p94 = por %p92, %p93
    %p95 = scmp.ne.s32.totalorder %s84, %s87
    %p96 = scmp.eq.s32.totalorder %s27, 1
    %p97 = por %p95, %p96
    %p98 = scmp.ne.s32.totalorder %s87, %s88
    %p99 = scmp.eq.s32.totalorder %s27, 0
    %p100 = por %p98, %p99
    %p101 = scmp.ne.s32.totalorder %s87, %s88
    %p102 = scmp.eq.s32.totalorder %s28, 1
    %p103 = por %p101, %p102
    %p105 = scmp.ne.s32.totalorder %s88, %s104
    %p106 = scmp.eq.s32.totalorder %s28, 0
    %p107 = por %p105, %p106
    %s109 = sadd.s32 %s108, 1
    %p112 = scmp.eq.s32.totalorder %s22, 1
    %p113 = scmp.ne.s32.totalorder %s108, %s110
    %p114 = scmp.eq.s32.totalorder %s22, 0
    %p115 = por %p113, %p114
    %p116 = scmp.ne.s32.totalorder %s108, %s110
    %p117 = scmp.eq.s32.totalorder %s27, 1
    %p118 = por %p116, %p117
    %p119 = scmp.ne.s32.totalorder %s110, %s111
    %p120 = scmp.eq.s32.totalorder %s27, 0
    %p121 = por %p119, %p120
    %p122 = scmp.ne.s32.totalorder %s110, %s111
    %p123 = scmp.eq.s32.totalorder %s28, 1
    %p124 = por %p122, %p123
    %p126 = scmp.ne.s32.totalorder %s111, %s125
    %p127 = scmp.eq.s32.totalorder %s28, 0
    %p128 = por %p126, %p127
    %s130 = sadd.s32 %s129, 1
    %p133 = scmp.eq.s32.totalorder %s22, 1
    %p134 = scmp.ne.s32.totalorder %s129, %s131
    %p135 = scmp.eq.s32.totalorder %s22, 0
    %p136 = por %p134, %p135
    %p137 = scmp.ne.s32.totalorder %s129, %s131
    %p138 = scmp.eq.s32.totalorder %s27, 1
    %p139 = por %p137, %p138
    %p140 = scmp.ne.s32.totalorder %s131, %s132
    %p141 = scmp.eq.s32.totalorder %s27, 0
    %p142 = por %p140, %p141
    %p143 = scmp.ne.s32.totalorder %s131, %s132
    %p144 = scmp.eq.s32.totalorder %s28, 1
    %p145 = por %p143, %p144
    %p147 = scmp.ne.s32.totalorder %s132, %s146
    %p148 = scmp.eq.s32.totalorder %s28, 0
    %p149 = por %p147, %p148
    %s151 = sadd.s32 %s150, 1
    %p154 = scmp.eq.s32.totalorder %s22, 1
    %p155 = scmp.ne.s32.totalorder %s150, %s152
    %p156 = scmp.eq.s32.totalorder %s22, 0
    %p157 = por %p155, %p156
    %p158 = scmp.ne.s32.totalorder %s150, %s152
    %p159 = scmp.eq.s32.totalorder %s27, 1
    %p160 = por %p158, %p159
    %p161 = scmp.ne.s32.totalorder %s152, %s153
    %p162 = scmp.eq.s32.totalorder %s27, 0
    %p163 = por %p161, %p162
    %p164 = scmp.ne.s32.totalorder %s152, %s153
    %p165 = scmp.eq.s32.totalorder %s28, 1
    %p166 = por %p164, %p165
    %p168 = scmp.ne.s32.totalorder %s153, %s167
    %p169 = scmp.eq.s32.totalorder %s28, 0
    %p170 = por %p168, %p169
    %s172 = sadd.s32 %s171, 1
    %p175 = scmp.eq.s32.totalorder %s22, 1
    %p176 = scmp.ne.s32.totalorder %s171, %s173
    %p177 = scmp.eq.s32.totalorder %s22, 0
    %p178 = por %p176, %p177
    %p179 = scmp.ne.s32.totalorder %s171, %s173
    %p180 = scmp.eq.s32.totalorder %s27, 1
    %p181 = por %p179, %p180
    %p182 = scmp.ne.s32.totalorder %s173, %s174
    %p183 = scmp.eq.s32.totalorder %s27, 0
    %p184 = por %p182, %p183
    %p185 = scmp.ne.s32.totalorder %s173, %s174
    %p186 = scmp.eq.s32.totalorder %s28, 1
    %p187 = por %p185, %p186
    %p189 = scmp.ne.s32.totalorder %s174, %s188
    %p190 = scmp.eq.s32.totalorder %s28, 0
    %p191 = por %p189, %p190
    %s193 = sadd.s32 %s192, 1
    %p196 = scmp.eq.s32.totalorder %s22, 1
    %p197 = scmp.ne.s32.totalorder %s192, %s194
    %p198 = scmp.eq.s32.totalorder %s22, 0
    %p199 = por %p197, %p198
    %p200 = scmp.ne.s32.totalorder %s192, %s194
    %p201 = scmp.eq.s32.totalorder %s27, 1
    %p202 = por %p200, %p201
    %p203 = scmp.ne.s32.totalorder %s194, %s195
    %p204 = scmp.eq.s32.totalorder %s27, 0
    %p205 = por %p203, %p204
    %p206 = scmp.ne.s32.totalorder %s194, %s195
    %p207 = scmp.eq.s32.totalorder %s28, 1
    %p208 = por %p206, %p207
    %p210 = scmp.ne.s32.totalorder %s195, %s209
    %p211 = scmp.eq.s32.totalorder %s28, 0
    %p212 = por %p210, %p211
    %s214 = sadd.s32 %s213, 1
    %p217 = scmp.eq.s32.totalorder %s22, 1
    %p218 = scmp.ne.s32.totalorder %s213, %s215
    %p219 = scmp.eq.s32.totalorder %s22, 0
    %p220 = por %p218, %p219
    %p221 = scmp.ne.s32.totalorder %s213, %s215
    %p222 = scmp.eq.s32.totalorder %s27, 1
    %p223 = por %p221, %p222
    %p224 = scmp.ne.s32.totalorder %s215, %s216
    %p225 = scmp.eq.s32.totalorder %s27, 0
    %p226 = por %p224, %p225
    %p227 = scmp.ne.s32.totalorder %s215, %s216
    %p228 = scmp.eq.s32.totalorder %s28, 1
    %p229 = por %p227, %p228
    %p231 = scmp.ne.s32.totalorder %s216, %s230
    %p232 = scmp.eq.s32.totalorder %s28, 0
    %p233 = por %p231, %p232
    %s235 = sadd.s32 %s234, 1
    %p238 = scmp.eq.s32.totalorder %s22, 1
    %p239 = scmp.ne.s32.totalorder %s234, %s236
    %p240 = scmp.eq.s32.totalorder %s22, 0
    %p241 = por %p239, %p240
    %p242 = scmp.ne.s32.totalorder %s234, %s236
    %p243 = scmp.eq.s32.totalorder %s27, 1
    %p244 = por %p242, %p243
    %p245 = scmp.ne.s32.totalorder %s236, %s237
    %p246 = scmp.eq.s32.totalorder %s27, 0
    %p247 = por %p245, %p246
    %p248 = scmp.ne.s32.totalorder %s236, %s237
    %p249 = scmp.eq.s32.totalorder %s28, 1
    %p250 = por %p248, %p249
    %p252 = scmp.ne.s32.totalorder %s237, %s251
    %p253 = scmp.eq.s32.totalorder %s28, 0
    %p254 = por %p252, %p253
    %s256 = sadd.s32 %s255, 1
    %p259 = scmp.eq.s32.totalorder %s22, 1
    %p260 = scmp.ne.s32.totalorder %s255, %s257
    %p261 = scmp.eq.s32.totalorder %s22, 0
    %p262 = por %p260, %p261
    %p263 = scmp.ne.s32.totalorder %s255, %s257
    %p264 = scmp.eq.s32.totalorder %s27, 1
    %p265 = por %p263, %p264
    %p266 = scmp.ne.s32.totalorder %s257, %s258
    %p267 = scmp.eq.s32.totalorder %s27, 0
    %p268 = por %p266, %p267
    %p269 = scmp.ne.s32.totalorder %s257, %s258
    %p270 = scmp.eq.s32.totalorder %s28, 1
    %p271 = por %p269, %p270
    %p273 = scmp.ne.s32.totalorder %s258, %s272
    %p274 = scmp.eq.s32.totalorder %s28, 0
    %p275 = por %p273, %p274
    %s277 = sadd.s32 %s276, 1
    %p280 = scmp.eq.s32.totalorder %s22, 1
    %p281 = scmp.ne.s32.totalorder %s276, %s278
    %p282 = scmp.eq.s32.totalorder %s22, 0
    %p283 = por %p281, %p282
    %p284 = scmp.ne.s32.totalorder %s276, %s278
    %p285 = scmp.eq.s32.totalorder %s27, 1
    %p286 = por %p284, %p285
    %p287 = scmp.ne.s32.totalorder %s278, %s279
    %p288 = scmp.eq.s32.totalorder %s27, 0
    %p289 = por %p287, %p288
    %p290 = scmp.ne.s32.totalorder %s278, %s279
    %p291 = scmp.eq.s32.totalorder %s28, 1
    %p292 = por %p290, %p291
    %p294 = scmp.ne.s32.totalorder %s279, %s293
    %p295 = scmp.eq.s32.totalorder %s28, 0
    %p296 = por %p294, %p295
    %s297 = ssub.s32 %s22, %s29
    %p298 = scmp.eq.s32.totalorder %s297, 0
    %s300 = sadd.s32 %s299, 1
    %s301 = scalar_select %p298, %s299, %s300
    %p304 = pneg %p298
    %p305 = scmp.eq.s32.totalorder %s22, 1
    %p306 = por %p304, %p305
    %p307 = scmp.ne.s32.totalorder %s299, %s302
    %p308 = scmp.eq.s32.totalorder %s22, 0
    %p309 = por %p307, %p308
    %p310 = scmp.ne.s32.totalorder %s299, %s302
    %p311 = scmp.eq.s32.totalorder %s27, 1
    %p312 = por %p310, %p311
    %p313 = scmp.ne.s32.totalorder %s302, %s303
    %p314 = scmp.eq.s32.totalorder %s27, 0
    %p315 = por %p313, %p314
    %p316 = scmp.ne.s32.totalorder %s302, %s303
    %p317 = scmp.eq.s32.totalorder %s28, 1
    %p318 = por %p316, %p317
    %p320 = scmp.ne.s32.totalorder %s303, %s319
    %p321 = scmp.eq.s32.totalorder %s28, 0
    %p322 = por %p320, %p321
    %s323 = ssub.s32 %s22, %s29
    %p324 = scmp.eq.s32.totalorder %s323, 0
    %s326 = sadd.s32 %s325, 1
    %s327 = scalar_select %p324, %s325, %s326
    %p330 = pneg %p324
    %p331 = scmp.eq.s32.totalorder %s22, 1
    %p332 = por %p330, %p331
    %p333 = scmp.ne.s32.totalorder %s325, %s328
    %p334 = scmp.eq.s32.totalorder %s22, 0
    %p335 = por %p333, %p334
    %p336 = scmp.ne.s32.totalorder %s325, %s328
    %p337 = scmp.eq.s32.totalorder %s27, 1
    %p338 = por %p336, %p337
    %p339 = scmp.ne.s32.totalorder %s328, %s329
    %p340 = scmp.eq.s32.totalorder %s27, 0
    %p341 = por %p339, %p340
    %p342 = scmp.ne.s32.totalorder %s328, %s329
    %p343 = scmp.eq.s32.totalorder %s28, 1
    %p344 = por %p342, %p343
    %p346 = scmp.ne.s32.totalorder %s329, %s345
    %p347 = scmp.eq.s32.totalorder %s28, 0
    %p348 = por %p346, %p347
    %s349 = ssub.s32 %s22, %s29
    %p350 = scmp.eq.s32.totalorder %s349, 0
    %s352 = sadd.s32 %s351, 1
    %s353 = scalar_select %p350, %s351, %s352
    %p356 = pneg %p350
    %p357 = scmp.eq.s32.totalorder %s22, 1
    %p358 = por %p356, %p357
    %p359 = scmp.ne.s32.totalorder %s351, %s354
    %p360 = scmp.eq.s32.totalorder %s22, 0
    %p361 = por %p359, %p360
    %p362 = scmp.ne.s32.totalorder %s351, %s354
    %p363 = scmp.eq.s32.totalorder %s27, 1
    %p364 = por %p362, %p363
    %p365 = scmp.ne.s32.totalorder %s354, %s355
    %p366 = scmp.eq.s32.totalorder %s27, 0
    %p367 = por %p365, %p366
    %p368 = scmp.ne.s32.totalorder %s354, %s355
    %p369 = scmp.eq.s32.totalorder %s28, 1
    %p370 = por %p368, %p369
    %p372 = scmp.ne.s32.totalorder %s355, %s371
    %p373 = scmp.eq.s32.totalorder %s28, 0
    %p374 = por %p372, %p373
    %s375 = ssub.s32 %s22, %s29
    %p376 = scmp.eq.s32.totalorder %s375, 0
    %s378 = sadd.s32 %s377, 1
    %s379 = scalar_select %p376, %s377, %s378
    %p382 = pneg %p376
    %p383 = scmp.eq.s32.totalorder %s22, 1
    %p384 = por %p382, %p383
    %p385 = scmp.ne.s32.totalorder %s377, %s380
    %p386 = scmp.eq.s32.totalorder %s22, 0
    %p387 = por %p385, %p386
    %p388 = scmp.ne.s32.totalorder %s377, %s380
    %p389 = scmp.eq.s32.totalorder %s27, 1
    %p390 = por %p388, %p389
    %p391 = scmp.ne.s32.totalorder %s380, %s381
    %p392 = scmp.eq.s32.totalorder %s27, 0
    %p393 = por %p391, %p392
    %p394 = scmp.ne.s32.totalorder %s380, %s381
    %p395 = scmp.eq.s32.totalorder %s28, 1
    %p396 = por %p394, %p395
    %p398 = scmp.ne.s32.totalorder %s381, %s397
    %p399 = scmp.eq.s32.totalorder %s28, 0
    %p400 = por %p398, %p399
    %p401 = scmp.le.s32.totalorder 1, %s22
    %p402 = scmp.lt.s32.totalorder %s22, 3
    %p403 = pnand %p401, %p402
    %p404 = pneg %p403
    // Predicated region
    $region9: #{uninext_finelip_forward.4} parent=5 // pred_check
      _
    $region10: #{uninext_finelip_forward.4} parent=5 // pred_check_branch
      %406 = sbr.rel (%p403) target = $region12
    $region11: #{uninext_finelip_forward.4} parent=5 // pred_region
      %s407 = ssub.s32 %s22, 1
      // Predicated region
      $region13: #{uninext_finelip_forward.4} parent=11 // pred_check
        %p408 = pneg %p121
      $region14: #{uninext_finelip_forward.4} parent=11 // pred_check_branch
        %410 = sbr.rel (%p408) target = $region16
      $region15: #{uninext_finelip_forward.4} parent=11 // pred_region
        _
      $region16: #{uninext_finelip_forward.4} parent=11 // pred_fallthru
        _
      // Predicated region
      $region17: #{uninext_finelip_forward.4} parent=11 // pred_check
        %p411 = pneg %p142
      $region18: #{uninext_finelip_forward.4} parent=11 // pred_check_branch
        %413 = sbr.rel (%p411) target = $region20
      $region19: #{uninext_finelip_forward.4} parent=11 // pred_region
        _
      $region20: #{uninext_finelip_forward.4} parent=11 // pred_fallthru
        _
      // Predicated region
      $region21: #{uninext_finelip_forward.4} parent=11 // pred_check
        %p414 = pneg %p163
      $region22: #{uninext_finelip_forward.4} parent=11 // pred_check_branch
        %416 = sbr.rel (%p414) target = $region24
      $region23: #{uninext_finelip_forward.4} parent=11 // pred_region
        _
      $region24: #{uninext_finelip_forward.4} parent=11 // pred_fallthru
        _
      // Predicated region
      $region25: #{uninext_finelip_forward.4} parent=11 // pred_check
        %p417 = pneg %p184
      $region26: #{uninext_finelip_forward.4} parent=11 // pred_check_branch
        %419 = sbr.rel (%p417) target = $region28
      $region27: #{uninext_finelip_forward.4} parent=11 // pred_region
        _
      $region28: #{uninext_finelip_forward.4} parent=11 // pred_fallthru
        _
      // Predicated region
      $region29: #{uninext_finelip_forward.4} parent=11 // pred_check
        %p420 = pneg %p205
      $region30: #{uninext_finelip_forward.4} parent=11 // pred_check_branch
        %422 = sbr.rel (%p420) target = $region32
      $region31: #{uninext_finelip_forward.4} parent=11 // pred_region
        _
      $region32: #{uninext_finelip_forward.4} parent=11 // pred_fallthru
        _
      // Predicated region
      $region33: #{uninext_finelip_forward.4} parent=11 // pred_check
        %p423 = pneg %p226
      $region34: #{uninext_finelip_forward.4} parent=11 // pred_check_branch
        %425 = sbr.rel (%p423) target = $region36
      $region35: #{uninext_finelip_forward.4} parent=11 // pred_region
        _
      $region36: #{uninext_finelip_forward.4} parent=11 // pred_fallthru
        _
      // Predicated region
      $region37: #{uninext_finelip_forward.4} parent=11 // pred_check
        %p426 = pneg %p247
      $region38: #{uninext_finelip_forward.4} parent=11 // pred_check_branch
        %428 = sbr.rel (%p426) target = $region40
      $region39: #{uninext_finelip_forward.4} parent=11 // pred_region
        _
      $region40: #{uninext_finelip_forward.4} parent=11 // pred_fallthru
        _
      // Predicated region
      $region41: #{uninext_finelip_forward.4} parent=11 // pred_check
        %p429 = pneg %p268
      $region42: #{uninext_finelip_forward.4} parent=11 // pred_check_branch
        %431 = sbr.rel (%p429) target = $region44
      $region43: #{uninext_finelip_forward.4} parent=11 // pred_region
        _
      $region44: #{uninext_finelip_forward.4} parent=11 // pred_fallthru
        _
      // Predicated region
      $region45: #{uninext_finelip_forward.4} parent=11 // pred_check
        %p432 = pneg %p289
      $region46: #{uninext_finelip_forward.4} parent=11 // pred_check_branch
        %434 = sbr.rel (%p432) target = $region48
      $region47: #{uninext_finelip_forward.4} parent=11 // pred_region
        _
      $region48: #{uninext_finelip_forward.4} parent=11 // pred_fallthru
        _
    $region12: #{uninext_finelip_forward.4} parent=5 // pred_fallthru
      _
    %p435 = scmp.lt.s32.totalorder %s22, 2
    // Predicated region
    $region49: #{uninext_finelip_forward.4} parent=5 // pred_check
      %p436 = pneg %p435
    $region50: #{uninext_finelip_forward.4} parent=5 // pred_check_branch
      %438 = sbr.rel (%p436) target = $region52
    $region51: #{uninext_finelip_forward.4} parent=5 // pred_region
      // Predicated region
      $region53: #{uninext_finelip_forward.4} parent=51 // pred_check
        %p439 = pneg %p42
      $region54: #{uninext_finelip_forward.4} parent=51 // pred_check_branch
        %441 = sbr.rel (%p439) target = $region56
      $region55: #{uninext_finelip_forward.4} parent=51 // pred_region
        %p442 = scmp.lt.s32.totalorder %s22, 1
        %s443 = scalar_select %p442, %s22, 1
        %s444 = smul.addr %s443, 8
        %s445 = smul.addr %s444, 4
        %s446 = scalar_lea.vmem %s0, %s445
      $region56: #{uninext_finelip_forward.4} parent=51 // pred_fallthru
        _
      // Predicated region
      $region57: #{uninext_finelip_forward.4} parent=51 // pred_check
        %p447 = pneg %p68
      $region58: #{uninext_finelip_forward.4} parent=51 // pred_check_branch
        %449 = sbr.rel (%p447) target = $region60
      $region59: #{uninext_finelip_forward.4} parent=51 // pred_region
        %p450 = scmp.lt.s32.totalorder %s22, 1
        %s451 = scalar_select %p450, %s22, 1
        %s452 = smul.addr %s451, 4
        %s453 = smul.addr %s452, 4
        %s454 = scalar_lea.vmem %s1, %s453
      $region60: #{uninext_finelip_forward.4} parent=51 // pred_fallthru
        _
      // Predicated region
      $region61: #{uninext_finelip_forward.4} parent=51 // pred_check
        %p455 = pneg %p94
      $region62: #{uninext_finelip_forward.4} parent=51 // pred_check_branch
        %457 = sbr.rel (%p455) target = $region64
      $region63: #{uninext_finelip_forward.4} parent=51 // pred_region
        %p458 = scmp.lt.s32.totalorder %s22, 1
        %s459 = scalar_select %p458, %s22, 1
        %s460 = smul.addr %s459, 4
        %s461 = scalar_lea.vmem %s2, %s460
      $region64: #{uninext_finelip_forward.4} parent=51 // pred_fallthru
        _
    $region52: #{uninext_finelip_forward.4} parent=5 // pred_fallthru
      _
    %p462 = scmp.le.s32.totalorder 1, %s22
    %p463 = scmp.lt.s32.totalorder %s22, 3
    %p464 = pnand %p462, %p463
    %p465 = pneg %p464
    // Predicated region
    $region65: #{uninext_finelip_forward.4} parent=5 // pred_check
      _
    $region66: #{uninext_finelip_forward.4} parent=5 // pred_check_branch
      %467 = sbr.rel (%p464) target = $region68
    $region67: #{uninext_finelip_forward.4} parent=5 // pred_region
      %s468 = ssub.s32 %s22, 1
      %p469 = scmp.lt.s32.totalorder %s27, 1
      %s470 = scalar_select %p469, %s27, 1
      %s471 = smul.addr %s470, 8
      %s472 = smul.addr %s471, 4
      %s473 = scalar_lea.vmem %s0, %s472
      %p474 = pneg %p48
      %p475 = pneg %p45
      %p476 = scmp.lt.s32.totalorder %s27, 1
      %s477 = scalar_select %p476, %s27, 1
      %s478 = smul.addr %s477, 4
      %s479 = smul.addr %s478, 4
      %s480 = scalar_lea.vmem %s1, %s479
      %p481 = pneg %p74
      %p482 = pneg %p71
      %p483 = scmp.lt.s32.totalorder %s27, 1
      %s484 = scalar_select %p483, %s27, 1
      %s485 = smul.addr %s484, 4
      %s486 = scalar_lea.vmem %s2, %s485
      %p487 = pneg %p100
      %p488 = pneg %p97
      %p489 = pneg %p121
      %p490 = pneg %p118
      %p491 = pneg %p142
      %p492 = pneg %p139
      %p493 = pneg %p163
      %p494 = pneg %p160
      %p495 = pneg %p184
      %p496 = pneg %p181
      %p497 = pneg %p205
      %p498 = pneg %p202
      %p499 = pneg %p226
      %p500 = pneg %p223
      %p501 = pneg %p247
      %p502 = pneg %p244
      %p503 = pneg %p268
      %p504 = pneg %p265
      %p505 = pneg %p289
      %p506 = pneg %p286
      %p507 = pneg %p315
      %p508 = pneg %p312
      %p509 = scmp.lt.s32.totalorder %s27, 1
      %s510 = scalar_select %p509, %s27, 1
      %s511 = smul.addr %s510, 2
      %s512 = smul.addr %s511, 4
      %s513 = scalar_lea.vmem %s12, %s512
      %p514 = pneg %p341
      %p515 = pneg %p338
      %p516 = scmp.lt.s32.totalorder %s27, 1
      %s517 = scalar_select %p516, %s27, 1
      %s518 = smul.addr %s517, 4
      %s519 = scalar_lea.vmem %s13, %s518
      %p520 = pneg %p367
      %p521 = pneg %p364
      %p522 = scmp.lt.s32.totalorder %s27, 1
      %s523 = scalar_select %p522, %s27, 1
      %s524 = scalar_lea.vmem %s14, %s523
      %p525 = pneg %p393
      %p526 = pneg %p390
      %p527 = scmp.lt.s32.totalorder %s27, 1
      %s528 = scalar_select %p527, %s27, 1
      %s529 = scalar_lea.vmem %s15, %s528
      %p530 = scmp.lt.s32.totalorder %s27, 1
      %s531 = scalar_select %p530, %s27, 1
      %s532 = smul.addr %s531, 8
      %s533 = smul.addr %s532, 4
      %s534 = scalar_lea.vmem %s0, %s533
      %p535 = scmp.lt.s32.totalorder %s27, 1
      %s536 = scalar_select %p535, %s27, 1
      %s537 = smul.addr %s536, 4
      %s538 = smul.addr %s537, 4
      %s539 = scalar_lea.vmem %s1, %s538
      %p540 = scmp.lt.s32.totalorder %s27, 1
      %s541 = scalar_select %p540, %s27, 1
      %s542 = smul.addr %s541, 4
      %s543 = scalar_lea.vmem %s2, %s542
      %p544 = scmp.lt.s32.totalorder %s27, 1
      %s545 = scalar_select %p544, %s27, 1
      %s546 = smul.addr %s545, 2
      %s547 = smul.addr %s546, 4
      %s548 = scalar_lea.vmem %s12, %s547
      %p549 = scmp.lt.s32.totalorder %s27, 1
      %s550 = scalar_select %p549, %s27, 1
      %s551 = smul.addr %s550, 4
      %s552 = scalar_lea.vmem %s13, %s551
      %p553 = scmp.lt.s32.totalorder %s27, 1
      %s554 = scalar_select %p553, %s27, 1
      %s555 = scalar_lea.vmem %s14, %s554
      %p556 = scmp.lt.s32.totalorder %s27, 1
      %s557 = scalar_select %p556, %s27, 1
      %s558 = scalar_lea.vmem %s15, %s557
      %v560 = vld [vmem:[%s534] sm:$0xf]
      %v561 = vld [vmem:[%s534 + $0x4] sm:$0xf]
      %v562 = vld [vmem:[%s534 + $0x8] sm:$0xf]
      %v563 = vld [vmem:[%s534 + $0xc] sm:$0xf]
      %v564 = vld [vmem:[%s534 + $0x10] sm:$0xf]
      %v565 = vld [vmem:[%s534 + $0x14] sm:$0xf]
      %v566 = vld [vmem:[%s534 + $0x18] sm:$0xf]
      %v567 = vld [vmem:[%s534 + $0x1c] sm:$0xf]
      %v568 = vld [vmem:[%s539] sm:$0xf]
      %v569 = vld [vmem:[%s539 + $0x4] sm:$0xf]
      %v570 = vld [vmem:[%s539 + $0x8] sm:$0xf]
      %v571 = vld [vmem:[%s539 + $0xc] sm:$0xf]
      %v576 = vunpack.c.l.b16 %v568
      %v577 = vunpack.c.l.b16 %v569
      %v578 = vunpack.c.l.b16 %v570
      %v579 = vunpack.c.l.b16 %v571
      %v580 = vpack.c.b16 %v577, %v576
      %v581 = vpack.c.b16 %v579, %v578
      %v590 = vunpack.c.l.b16 %v560
      %v591 = vunpack.c.l.b16 %v561
      %v592 = vunpack.c.l.b16 %v562
      %v593 = vunpack.c.l.b16 %v563
      %v594 = vunpack.c.l.b16 %v564
      %v595 = vunpack.c.l.b16 %v565
      %v596 = vunpack.c.l.b16 %v566
      %v597 = vunpack.c.l.b16 %v567
      %v598 = vpack.c.b16 %v591, %v590
      %v599 = vpack.c.b16 %v593, %v592
      %v600 = vpack.c.b16 %v595, %v594
      %v601 = vpack.c.b16 %v597, %v596
      %vm606 = vcmask 523264
      %v608 = vsel %vm606, %v580, 0
      %v611 = vsel %vm606, %v581, 0
      %613 = vmatpush.bf16.msra.mxu0 0
      %614 = vmatpush.bf16.msra.mxu0 0
      %615 = vmatpush.bf16.msra.mxu0 0
      %616 = vmatpush.bf16.msra.mxu0 0
      %617 = vmatpush.bf16.msra.mxu0 %v601
      %618 = vmatpush.bf16.msra.mxu0 %v600
      %619 = vmatpush.bf16.msra.mxu0 %v599
      %620 = vmatpush.bf16.msra.mxu0 %v598
      %621 = vmatmul.bf16.gmra.mxu0 %v608
      %v622 = vpop.f32.mrf.mxu0
      %v623 = vadd.f32 0.0, %v622
      %v624 = vpop.f32.mrf.mxu0
      %v625 = vadd.f32 0.0, %v624
      %626 = vmatmul.bf16.gmra.mxu0 %v611
      %v627 = vpop.f32.mrf.mxu0
      %v628 = vadd.f32 0.0, %v627
      %v629 = vpop.f32.mrf.mxu0
      %v630 = vadd.f32 0.0, %v629
      %631 = vdwg.mxu0
      %v632 = vpack.c.bf16 %v625, %v623
      %v633 = vpack.c.bf16 %v630, %v628
      %v634 = vld [vmem:[%s4] sm:$0xf]
      %v635 = vld [vmem:[%s4 + $0x4] sm:$0xf]
      %v636 = vld [vmem:[%s4 + $0x8] sm:$0xf]
      %v637 = vld [vmem:[%s4 + $0xc] sm:$0xf]
      %v638 = vld [vmem:[%s4 + $0x10] sm:$0xf]
      %v639 = vld [vmem:[%s4 + $0x14] sm:$0xf]
      %v640 = vld [vmem:[%s4 + $0x18] sm:$0xf]
      %v641 = vld [vmem:[%s4 + $0x1c] sm:$0xf]
      %v650 = vunpack.c.l.b16 %v634
      %v651 = vunpack.c.l.b16 %v635
      %v652 = vunpack.c.l.b16 %v636
      %v653 = vunpack.c.l.b16 %v637
      %v654 = vunpack.c.l.b16 %v638
      %v655 = vunpack.c.l.b16 %v639
      %v656 = vunpack.c.l.b16 %v640
      %v657 = vunpack.c.l.b16 %v641
      %v658 = vpack.c.b16 %v651, %v650
      %v659 = vpack.c.b16 %v653, %v652
      %v660 = vpack.c.b16 %v655, %v654
      %v661 = vpack.c.b16 %v657, %v656
      %v667 = vsel %vm606, %v632, 0
      %v670 = vsel %vm606, %v633, 0
      %672 = vmatpush.bf16.msra.mxu0 0
      %673 = vmatpush.bf16.msra.mxu0 0
      %674 = vmatpush.bf16.msra.mxu0 0
      %675 = vmatpush.bf16.msra.mxu0 0
      %676 = vmatpush.bf16.msra.mxu0 %v661
      %677 = vmatpush.bf16.msra.mxu0 %v660
      %678 = vmatpush.bf16.msra.mxu0 %v659
      %679 = vmatpush.bf16.msra.mxu0 %v658
      %680 = vmatmul.bf16.gmra.mxu0 %v667
      %v681 = vpop.f32.mrf.mxu0
      %v682 = vadd.f32 0.0, %v681
      %v683 = vpop.f32.mrf.mxu0
      %v684 = vadd.f32 0.0, %v683
      %685 = vmatmul.bf16.gmra.mxu0 %v670
      %v686 = vpop.f32.mrf.mxu0
      %v687 = vadd.f32 0.0, %v686
      %v688 = vpop.f32.mrf.mxu0
      %v689 = vadd.f32 0.0, %v688
      %690 = vdwg.mxu0
      %v691 = vld [vmem:[%s11] ss:$0 sm:$0xff]
      %v692 = vadd.f32 %v682, %v691
      %v693 = vadd.f32 %v684, %v691
      %v694 = vadd.f32 %v687, %v691
      %v695 = vadd.f32 %v689, %v691
      %v696 = vpack.c.bf16 %v692, %v692
      %v697 = vpack.c.bf16 %v693, %v693
      %v698 = vpack.c.bf16 %v694, %v694
      %v699 = vpack.c.bf16 %v695, %v695
      %v700 = vld [vmem:[%s11 + $0x1] ss:$0 sm:$0xff]
      %702 = vrot.lane.b32.xlu0 %v700, 64
      %v703 = vpop.permute.xlu0 %702
      %v705 = vadd.f32 %v682, %v703
      %v706 = vadd.f32 %v684, %v703
      %v707 = vadd.f32 %v687, %v703
      %v708 = vadd.f32 %v689, %v703
      %v709 = vpack.c.bf16 %v705, %v705
      %v710 = vpack.c.bf16 %v706, %v706
      %v711 = vpack.c.bf16 %v707, %v707
      %v712 = vpack.c.bf16 %v708, %v708
      %v713 = vld [vmem:[%s3] sm:$0xf]
      %v714 = vld [vmem:[%s3 + $0x4] sm:$0xf]
      %v717 = vunpack.c.l.b16 %v713
      %v718 = vunpack.c.l.b16 %v714
      %v719 = vpack.c.b16 %v718, %v717
      %v724 = vunpack.c.l.b16 %v696
      %v725 = vunpack.c.l.b16 %v697
      %v726 = vunpack.c.l.b16 %v698
      %v727 = vunpack.c.l.b16 %v699
      %v728 = vpack.c.b16 %v725, %v724
      %v729 = vpack.c.b16 %v727, %v726
      %vm730 = vcmask 130048
      %v732 = vsel %vm730, %v719, 0
      %v735 = vsel %vm730, %v728, 0
      %v738 = vsel %vm730, %v729, 0
      %740 = vmatpush.bf16.xpose.msra.mxu0 0
      %741 = vmatpush.bf16.xpose.msra.mxu0 0
      %742 = vmatpush.bf16.xpose.msra.mxu0 0
      %743 = vmatpush.bf16.xpose.msra.mxu0 0
      %744 = vmatpush.bf16.xpose.msra.mxu0 0
      %745 = vmatpush.bf16.xpose.msra.mxu0 0
      %746 = vmatpush.bf16.xpose.msra.mxu0 %v738
      %747 = vmatpush.bf16.xpose.msra.mxu0 %v735
      %748 = vmatmul.bf16.gmra.mxu0 %v732
      %v749 = vpop.f32.mrf.mxu0
      %v750 = vadd.f32 0.0, %v749
      %v751 = vpop.f32.mrf.mxu0
      %v752 = vadd.f32 0.0, %v751
      %753 = vdwg.mxu0
      %vm754 = vcmask 261120
      %v755 = vsel %vm754, %v750, -inf
      %756 = vmax.xlane.f32.xlu0 %v755
      %v757 = vpop.xlane.xlu0 %756
      %v758 = vsel %vm754, %v752, -inf
      %759 = vmax.xlane.f32.xlu0 %v758
      %v760 = vpop.xlane.xlu0 %759
      %v761 = vsub.f32 %v750, %v757
      %v762 = vsub.f32 %v752, %v760
      %v763 = vmul.f32 %v761, 1.442695
      %v764 = vpow.pop %v763
      %v765 = vmul.f32 %v762, 1.442695
      %v766 = vpow.pop %v765
      %v767 = vsel %vm754, %v764, 0.0
      %768 = vadd.xlane.f32.xlu0 %v767
      %v769 = vpop.xlane.xlu0 %768
      %v770 = vsel %vm754, %v766, 0.0
      %771 = vadd.xlane.f32.xlu0 %v770
      %v772 = vpop.xlane.xlu0 %771
      %v773 = vrcp.pop %v769
      %v774 = vmul.f32 %v769, %v773
      %v775 = vsub.f32 1.0, %v774
      %v776 = vmul.f32 %v773, %v775
      %v777 = vadd.f32 %v773, %v776
      %vm778 = vweird.f32 %v769
      %vm779 = vweird.f32 %v773
      %vm780 = vmor %vm778, %vm779
      %v781 = vsel %vm780, %v773, %v777
      %v782 = vand.u32 2147483647, %v769
      %vm783 = vcmp.eq.f32.partialorder %v782, 8.507059e+37
      %v784 = vand.u32 %v769, 2147483648
      %v785 = vor.u32 1.1754944e-38, %v784
      %v786 = vsel %vm783, %v785, %v781
      %v787 = vmul.f32 %v764, %v786
      %v788 = vrcp.pop %v772
      %v789 = vmul.f32 %v772, %v788
      %v790 = vsub.f32 1.0, %v789
      %v791 = vmul.f32 %v788, %v790
      %v792 = vadd.f32 %v788, %v791
      %vm793 = vweird.f32 %v772
      %vm794 = vweird.f32 %v788
      %vm795 = vmor %vm793, %vm794
      %v796 = vsel %vm795, %v788, %v792
      %v797 = vand.u32 2147483647, %v772
      %vm798 = vcmp.eq.f32.partialorder %v797, 8.507059e+37
      %v799 = vand.u32 %v772, 2147483648
      %v800 = vor.u32 1.1754944e-38, %v799
      %v801 = vsel %vm798, %v800, %v796
      %v802 = vmul.f32 %v766, %v801
      %v803 = vpack.c.bf16 %v802, %v787
      %v808 = vunpack.c.l.b16 %v709
      %v809 = vunpack.c.l.b16 %v710
      %v810 = vunpack.c.l.b16 %v711
      %v811 = vunpack.c.l.b16 %v712
      %v812 = vpack.c.b16 %v809, %v808
      %v813 = vpack.c.b16 %v811, %v810
      %814 = vrot.lane.b32.xlu0 %v812, 64
      %v815 = vpop.permute.xlu0 %814
      %816 = vrot.lane.b32.xlu0 %v813, 64
      %v817 = vpop.permute.xlu0 %816
      %v821 = vsel %vm754, %v803, 0
      %823 = vmatpush.bf16.msra.mxu0 0
      %824 = vmatpush.bf16.msra.mxu0 0
      %825 = vmatpush.bf16.msra.mxu0 0
      %826 = vmatpush.bf16.msra.mxu0 0
      %827 = vmatpush.bf16.msra.mxu0 0
      %828 = vmatpush.bf16.msra.mxu0 0
      %829 = vmatpush.bf16.msra.mxu0 %v817
      %830 = vmatpush.bf16.msra.mxu0 %v815
      %831 = vmatmul.bf16.gmra.mxu0 %v821
      %v832 = vpop.f32.mrf.mxu0
      %v833 = vadd.f32 0.0, %v832
      %v834 = vpop.f32.mrf.mxu0
      %v835 = vadd.f32 0.0, %v834
      %836 = vdwg.mxu0
      %837 = vst.msk [vmem:[#allocation2] sm:$0xff] %vm730, %v833
      %838 = vst.msk [vmem:[#allocation2 + $0x8] sm:$0xff] %vm730, %v835
      %839 = vrot.lane.b32.xlu0 %v719, 112
      %v840 = vpop.permute.xlu0 %839
      %841 = vrot.lane.b32.xlu0 %v728, 112
      %v842 = vpop.permute.xlu0 %841
      %843 = vrot.lane.b32.xlu0 %v729, 112
      %v844 = vpop.permute.xlu0 %843
      %v846 = vsel %vm730, %v840, 0
      %v849 = vsel %vm730, %v842, 0
      %v852 = vsel %vm730, %v844, 0
      %854 = vmatpush.bf16.xpose.msra.mxu0 0
      %855 = vmatpush.bf16.xpose.msra.mxu0 0
      %856 = vmatpush.bf16.xpose.msra.mxu0 0
      %857 = vmatpush.bf16.xpose.msra.mxu0 0
      %858 = vmatpush.bf16.xpose.msra.mxu0 0
      %859 = vmatpush.bf16.xpose.msra.mxu0 0
      %860 = vmatpush.bf16.xpose.msra.mxu0 %v852
      %861 = vmatpush.bf16.xpose.msra.mxu0 %v849
      %862 = vmatmul.bf16.gmra.mxu0 %v846
      %v863 = vpop.f32.mrf.mxu0
      %v864 = vadd.f32 0.0, %v863
      %v865 = vpop.f32.mrf.mxu0
      %v866 = vadd.f32 0.0, %v865
      %867 = vdwg.mxu0
      %v868 = vsel %vm754, %v864, -inf
      %869 = vmax.xlane.f32.xlu0 %v868
      %v870 = vpop.xlane.xlu0 %869
      %v871 = vsel %vm754, %v866, -inf
      %872 = vmax.xlane.f32.xlu0 %v871
      %v873 = vpop.xlane.xlu0 %872
      %v874 = vsub.f32 %v864, %v870
      %v875 = vsub.f32 %v866, %v873
      %v876 = vmul.f32 %v874, 1.442695
      %v877 = vpow.pop %v876
      %v878 = vmul.f32 %v875, 1.442695
      %v879 = vpow.pop %v878
      %v880 = vsel %vm754, %v877, 0.0
      %881 = vadd.xlane.f32.xlu0 %v880
      %v882 = vpop.xlane.xlu0 %881
      %v883 = vsel %vm754, %v879, 0.0
      %884 = vadd.xlane.f32.xlu0 %v883
      %v885 = vpop.xlane.xlu0 %884
      %v886 = vrcp.pop %v882
      %v887 = vmul.f32 %v882, %v886
      %v888 = vsub.f32 1.0, %v887
      %v889 = vmul.f32 %v886, %v888
      %v890 = vadd.f32 %v886, %v889
      %vm891 = vweird.f32 %v882
      %vm892 = vweird.f32 %v886
      %vm893 = vmor %vm891, %vm892
      %v894 = vsel %vm893, %v886, %v890
      %v895 = vand.u32 2147483647, %v882
      %vm896 = vcmp.eq.f32.partialorder %v895, 8.507059e+37
      %v897 = vand.u32 %v882, 2147483648
      %v898 = vor.u32 1.1754944e-38, %v897
      %v899 = vsel %vm896, %v898, %v894
      %v900 = vmul.f32 %v877, %v899
      %v901 = vrcp.pop %v885
      %v902 = vmul.f32 %v885, %v901
      %v903 = vsub.f32 1.0, %v902
      %v904 = vmul.f32 %v901, %v903
      %v905 = vadd.f32 %v901, %v904
      %vm906 = vweird.f32 %v885
      %vm907 = vweird.f32 %v901
      %vm908 = vmor %vm906, %vm907
      %v909 = vsel %vm908, %v901, %v905
      %v910 = vand.u32 2147483647, %v885
      %vm911 = vcmp.eq.f32.partialorder %v910, 8.507059e+37
      %v912 = vand.u32 %v885, 2147483648
      %v913 = vor.u32 1.1754944e-38, %v912
      %v914 = vsel %vm911, %v913, %v909
      %v915 = vmul.f32 %v879, %v914
      %v916 = vpack.c.bf16 %v915, %v900
      %917 = vrot.lane.b32.xlu0 %v812, 48
      %v918 = vpop.permute.xlu0 %917
      %919 = vrot.lane.b32.xlu0 %v813, 48
      %v920 = vpop.permute.xlu0 %919
      %v924 = vsel %vm754, %v916, 0
      %926 = vmatpush.bf16.msra.mxu0 0
      %927 = vmatpush.bf16.msra.mxu0 0
      %928 = vmatpush.bf16.msra.mxu0 0
      %929 = vmatpush.bf16.msra.mxu0 0
      %930 = vmatpush.bf16.msra.mxu0 0
      %931 = vmatpush.bf16.msra.mxu0 0
      %932 = vmatpush.bf16.msra.mxu0 %v920
      %933 = vmatpush.bf16.msra.mxu0 %v918
      %934 = vmatmul.bf16.gmra.mxu0 %v924
      %v935 = vpop.f32.mrf.mxu0
      %v936 = vadd.f32 0.0, %v935
      %v937 = vpop.f32.mrf.mxu0
      %v938 = vadd.f32 0.0, %v937
      %939 = vdwg.mxu0
      %942 = vrot.lane.b32.xlu0 %v936, 16
      %v943 = vpop.permute.xlu0 %942
      %944 = vrot.lane.b32.xlu0 %v938, 16
      %v945 = vpop.permute.xlu0 %944
      %vm948 = vcmask 261248
      %949 = vst.msk [vmem:[#allocation2] sm:$0xff] %vm948, %v943
      %950 = vst.msk [vmem:[#allocation2 + $0x8] sm:$0xff] %vm948, %v945
      %951 = vrot.lane.b32.xlu0 %v719, 96
      %v952 = vpop.permute.xlu0 %951
      %953 = vrot.lane.b32.xlu0 %v728, 96
      %v954 = vpop.permute.xlu0 %953
      %955 = vrot.lane.b32.xlu0 %v729, 96
      %v956 = vpop.permute.xlu0 %955
      %v958 = vsel %vm730, %v952, 0
      %v961 = vsel %vm730, %v954, 0
      %v964 = vsel %vm730, %v956, 0
      %966 = vmatpush.bf16.xpose.msra.mxu0 0
      %967 = vmatpush.bf16.xpose.msra.mxu0 0
      %968 = vmatpush.bf16.xpose.msra.mxu0 0
      %969 = vmatpush.bf16.xpose.msra.mxu0 0
      %970 = vmatpush.bf16.xpose.msra.mxu0 0
      %971 = vmatpush.bf16.xpose.msra.mxu0 0
      %972 = vmatpush.bf16.xpose.msra.mxu0 %v964
      %973 = vmatpush.bf16.xpose.msra.mxu0 %v961
      %974 = vmatmul.bf16.gmra.mxu0 %v958
      %v975 = vpop.f32.mrf.mxu0
      %v976 = vadd.f32 0.0, %v975
      %v977 = vpop.f32.mrf.mxu0
      %v978 = vadd.f32 0.0, %v977
      %979 = vdwg.mxu0
      %v980 = vsel %vm754, %v976, -inf
      %981 = vmax.xlane.f32.xlu0 %v980
      %v982 = vpop.xlane.xlu0 %981
      %v983 = vsel %vm754, %v978, -inf
      %984 = vmax.xlane.f32.xlu0 %v983
      %v985 = vpop.xlane.xlu0 %984
      %v986 = vsub.f32 %v976, %v982
      %v987 = vsub.f32 %v978, %v985
      %v988 = vmul.f32 %v986, 1.442695
      %v989 = vpow.pop %v988
      %v990 = vmul.f32 %v987, 1.442695
      %v991 = vpow.pop %v990
      %v992 = vsel %vm754, %v989, 0.0
      %993 = vadd.xlane.f32.xlu0 %v992
      %v994 = vpop.xlane.xlu0 %993
      %v995 = vsel %vm754, %v991, 0.0
      %996 = vadd.xlane.f32.xlu0 %v995
      %v997 = vpop.xlane.xlu0 %996
      %v998 = vrcp.pop %v994
      %v999 = vmul.f32 %v994, %v998
      %v1000 = vsub.f32 1.0, %v999
      %v1001 = vmul.f32 %v998, %v1000
      %v1002 = vadd.f32 %v998, %v1001
      %vm1003 = vweird.f32 %v994
      %vm1004 = vweird.f32 %v998
      %vm1005 = vmor %vm1003, %vm1004
      %v1006 = vsel %vm1005, %v998, %v1002
      %v1007 = vand.u32 2147483647, %v994
      %vm1008 = vcmp.eq.f32.partialorder %v1007, 8.507059e+37
      %v1009 = vand.u32 %v994, 2147483648
      %v1010 = vor.u32 1.1754944e-38, %v1009
      %v1011 = vsel %vm1008, %v1010, %v1006
      %v1012 = vmul.f32 %v989, %v1011
      %v1013 = vrcp.pop %v997
      %v1014 = vmul.f32 %v997, %v1013
      %v1015 = vsub.f32 1.0, %v1014
      %v1016 = vmul.f32 %v1013, %v1015
      %v1017 = vadd.f32 %v1013, %v1016
      %vm1018 = vweird.f32 %v997
      %vm1019 = vweird.f32 %v1013
      %vm1020 = vmor %vm1018, %vm1019
      %v1021 = vsel %vm1020, %v1013, %v1017
      %v1022 = vand.u32 2147483647, %v997
      %vm1023 = vcmp.eq.f32.partialorder %v1022, 8.507059e+37
      %v1024 = vand.u32 %v997, 2147483648
      %v1025 = vor.u32 1.1754944e-38, %v1024
      %v1026 = vsel %vm1023, %v1025, %v1021
      %v1027 = vmul.f32 %v991, %v1026
      %v1028 = vpack.c.bf16 %v1027, %v1012
      %1029 = vrot.lane.b32.xlu0 %v812, 32
      %v1030 = vpop.permute.xlu0 %1029
      %1031 = vrot.lane.b32.xlu0 %v813, 32
      %v1032 = vpop.permute.xlu0 %1031
      %v1036 = vsel %vm754, %v1028, 0
      %1038 = vmatpush.bf16.msra.mxu0 0
      %1039 = vmatpush.bf16.msra.mxu0 0
      %1040 = vmatpush.bf16.msra.mxu0 0
      %1041 = vmatpush.bf16.msra.mxu0 0
      %1042 = vmatpush.bf16.msra.mxu0 0
      %1043 = vmatpush.bf16.msra.mxu0 0
      %1044 = vmatpush.bf16.msra.mxu0 %v1032
      %1045 = vmatpush.bf16.msra.mxu0 %v1030
      %1046 = vmatmul.bf16.gmra.mxu0 %v1036
      %v1047 = vpop.f32.mrf.mxu0
      %v1048 = vadd.f32 0.0, %v1047
      %v1049 = vpop.f32.mrf.mxu0
      %v1050 = vadd.f32 0.0, %v1049
      %1051 = vdwg.mxu0
      %1054 = vrot.lane.b32.xlu0 %v1048, 32
      %v1055 = vpop.permute.xlu0 %1054
      %1056 = vrot.lane.b32.xlu0 %v1050, 32
      %v1057 = vpop.permute.xlu0 %1056
      %vm1060 = vcmask 392448
      %1061 = vst.msk [vmem:[#allocation2] sm:$0xff] %vm1060, %v1055
      %1062 = vst.msk [vmem:[#allocation2 + $0x8] sm:$0xff] %vm1060, %v1057
      %1063 = vrot.lane.b32.xlu0 %v719, 80
      %v1064 = vpop.permute.xlu0 %1063
      %1065 = vrot.lane.b32.xlu0 %v728, 80
      %v1066 = vpop.permute.xlu0 %1065
      %1067 = vrot.lane.b32.xlu0 %v729, 80
      %v1068 = vpop.permute.xlu0 %1067
      %v1070 = vsel %vm730, %v1064, 0
      %v1073 = vsel %vm730, %v1066, 0
      %v1076 = vsel %vm730, %v1068, 0
      %1078 = vmatpush.bf16.xpose.msra.mxu0 0
      %1079 = vmatpush.bf16.xpose.msra.mxu0 0
      %1080 = vmatpush.bf16.xpose.msra.mxu0 0
      %1081 = vmatpush.bf16.xpose.msra.mxu0 0
      %1082 = vmatpush.bf16.xpose.msra.mxu0 0
      %1083 = vmatpush.bf16.xpose.msra.mxu0 0
      %1084 = vmatpush.bf16.xpose.msra.mxu0 %v1076
      %1085 = vmatpush.bf16.xpose.msra.mxu0 %v1073
      %1086 = vmatmul.bf16.gmra.mxu0 %v1070
      %v1087 = vpop.f32.mrf.mxu0
      %v1088 = vadd.f32 0.0, %v1087
      %v1089 = vpop.f32.mrf.mxu0
      %v1090 = vadd.f32 0.0, %v1089
      %1091 = vdwg.mxu0
      %v1092 = vsel %vm754, %v1088, -inf
      %1093 = vmax.xlane.f32.xlu0 %v1092
      %v1094 = vpop.xlane.xlu0 %1093
      %v1095 = vsel %vm754, %v1090, -inf
      %1096 = vmax.xlane.f32.xlu0 %v1095
      %v1097 = vpop.xlane.xlu0 %1096
      %v1098 = vsub.f32 %v1088, %v1094
      %v1099 = vsub.f32 %v1090, %v1097
      %v1100 = vmul.f32 %v1098, 1.442695
      %v1101 = vpow.pop %v1100
      %v1102 = vmul.f32 %v1099, 1.442695
      %v1103 = vpow.pop %v1102
      %v1104 = vsel %vm754, %v1101, 0.0
      %1105 = vadd.xlane.f32.xlu0 %v1104
      %v1106 = vpop.xlane.xlu0 %1105
      %v1107 = vsel %vm754, %v1103, 0.0
      %1108 = vadd.xlane.f32.xlu0 %v1107
      %v1109 = vpop.xlane.xlu0 %1108
      %v1110 = vrcp.pop %v1106
      %v1111 = vmul.f32 %v1106, %v1110
      %v1112 = vsub.f32 1.0, %v1111
      %v1113 = vmul.f32 %v1110, %v1112
      %v1114 = vadd.f32 %v1110, %v1113
      %vm1115 = vweird.f32 %v1106
      %vm1116 = vweird.f32 %v1110
      %vm1117 = vmor %vm1115, %vm1116
      %v1118 = vsel %vm1117, %v1110, %v1114
      %v1119 = vand.u32 2147483647, %v1106
      %vm1120 = vcmp.eq.f32.partialorder %v1119, 8.507059e+37
      %v1121 = vand.u32 %v1106, 2147483648
      %v1122 = vor.u32 1.1754944e-38, %v1121
      %v1123 = vsel %vm1120, %v1122, %v1118
      %v1124 = vmul.f32 %v1101, %v1123
      %v1125 = vrcp.pop %v1109
      %v1126 = vmul.f32 %v1109, %v1125
      %v1127 = vsub.f32 1.0, %v1126
      %v1128 = vmul.f32 %v1125, %v1127
      %v1129 = vadd.f32 %v1125, %v1128
      %vm1130 = vweird.f32 %v1109
      %vm1131 = vweird.f32 %v1125
      %vm1132 = vmor %vm1130, %vm1131
      %v1133 = vsel %vm1132, %v1125, %v1129
      %v1134 = vand.u32 2147483647, %v1109
      %vm1135 = vcmp.eq.f32.partialorder %v1134, 8.507059e+37
      %v1136 = vand.u32 %v1109, 2147483648
      %v1137 = vor.u32 1.1754944e-38, %v1136
      %v1138 = vsel %vm1135, %v1137, %v1133
      %v1139 = vmul.f32 %v1103, %v1138
      %v1140 = vpack.c.bf16 %v1139, %v1124
      %1141 = vrot.lane.b32.xlu0 %v812, 16
      %v1142 = vpop.permute.xlu0 %1141
      %1143 = vrot.lane.b32.xlu0 %v813, 16
      %v1144 = vpop.permute.xlu0 %1143
      %v1148 = vsel %vm754, %v1140, 0
      %1150 = vmatpush.bf16.msra.mxu0 0
      %1151 = vmatpush.bf16.msra.mxu0 0
      %1152 = vmatpush.bf16.msra.mxu0 0
      %1153 = vmatpush.bf16.msra.mxu0 0
      %1154 = vmatpush.bf16.msra.mxu0 0
      %1155 = vmatpush.bf16.msra.mxu0 0
      %1156 = vmatpush.bf16.msra.mxu0 %v1144
      %1157 = vmatpush.bf16.msra.mxu0 %v1142
      %1158 = vmatmul.bf16.gmra.mxu0 %v1148
      %v1159 = vpop.f32.mrf.mxu0
      %v1160 = vadd.f32 0.0, %v1159
      %v1161 = vpop.f32.mrf.mxu0
      %v1162 = vadd.f32 0.0, %v1161
      %1163 = vdwg.mxu0
      %1166 = vrot.lane.b32.xlu0 %v1160, 48
      %v1167 = vpop.permute.xlu0 %1166
      %1168 = vrot.lane.b32.xlu0 %v1162, 48
      %v1169 = vpop.permute.xlu0 %1168
      %vm1172 = vcmask 523648
      %1173 = vst.msk [vmem:[#allocation2] sm:$0xff] %vm1172, %v1167
      %1174 = vst.msk [vmem:[#allocation2 + $0x8] sm:$0xff] %vm1172, %v1169
      %v1175 = vld [vmem:[#allocation2] sm:$0xff]
      %v1176 = vld [vmem:[#allocation2 + $0x8] sm:$0xff]
      %v1177 = vpack.c.bf16 %v1176, %v1175
      %v1178 = vld [vmem:[%s5] sm:$0xf]
      %v1179 = vld [vmem:[%s5 + $0x4] sm:$0xf]
      %v1180 = vld [vmem:[%s5 + $0x8] sm:$0xf]
      %v1181 = vld [vmem:[%s5 + $0xc] sm:$0xf]
      %v1182 = vld [vmem:[%s5 + $0x10] sm:$0xf]
      %v1183 = vld [vmem:[%s5 + $0x14] sm:$0xf]
      %v1184 = vld [vmem:[%s5 + $0x18] sm:$0xf]
      %v1185 = vld [vmem:[%s5 + $0x1c] sm:$0xf]
      %v1186 = vld [vmem:[%s11 + $0x2] ss:$0 sm:$0xff]
      %v1195 = vunpack.c.l.b16 %v1178
      %v1196 = vunpack.c.l.b16 %v1179
      %v1197 = vunpack.c.l.b16 %v1180
      %v1198 = vunpack.c.l.b16 %v1181
      %v1199 = vunpack.c.l.b16 %v1182
      %v1200 = vunpack.c.l.b16 %v1183
      %v1201 = vunpack.c.l.b16 %v1184
      %v1202 = vunpack.c.l.b16 %v1185
      %v1203 = vpack.c.b16 %v1196, %v1195
      %v1204 = vpack.c.b16 %v1198, %v1197
      %v1205 = vpack.c.b16 %v1200, %v1199
      %v1206 = vpack.c.b16 %v1202, %v1201
      %v1212 = vsel %vm606, %v1177, 0
      %1214 = vmatpush.bf16.msra.mxu0 0
      %1215 = vmatpush.bf16.msra.mxu0 0
      %1216 = vmatpush.bf16.msra.mxu0 0
      %1217 = vmatpush.bf16.msra.mxu0 0
      %1218 = vmatpush.bf16.msra.mxu0 %v1206
      %1219 = vmatpush.bf16.msra.mxu0 %v1205
      %1220 = vmatpush.bf16.msra.mxu0 %v1204
      %1221 = vmatpush.bf16.msra.mxu0 %v1203
      %1222 = vmatmul.bf16.gmra.mxu0 %v1212
      %v1223 = vpop.f32.mrf.mxu0
      %v1224 = vadd.f32 %v1186, %v1223
      %v1225 = vpop.f32.mrf.mxu0
      %v1226 = vadd.f32 %v1186, %v1225
      %1227 = vdwg.mxu0
      %v1228 = vpack.c.bf16 %v1226, %v1224
      %v1229 = vld [vmem:[%s6] sm:$0xf]
      %v1230 = vld [vmem:[%s6 + $0x4] sm:$0xf]
      %v1231 = vld [vmem:[%s6 + $0x8] sm:$0xf]
      %v1232 = vld [vmem:[%s6 + $0xc] sm:$0xf]
      %v1233 = vld [vmem:[%s6 + $0x10] sm:$0xf]
      %v1234 = vld [vmem:[%s6 + $0x14] sm:$0xf]
      %v1235 = vld [vmem:[%s6 + $0x18] sm:$0xf]
      %v1236 = vld [vmem:[%s6 + $0x1c] sm:$0xf]
      %v1237 = vld [vmem:[%s11 + $0x3] ss:$0 sm:$0xff]
      %v1246 = vunpack.c.l.b16 %v1229
      %v1247 = vunpack.c.l.b16 %v1230
      %v1248 = vunpack.c.l.b16 %v1231
      %v1249 = vunpack.c.l.b16 %v1232
      %v1250 = vunpack.c.l.b16 %v1233
      %v1251 = vunpack.c.l.b16 %v1234
      %v1252 = vunpack.c.l.b16 %v1235
      %v1253 = vunpack.c.l.b16 %v1236
      %v1254 = vpack.c.b16 %v1247, %v1246
      %v1255 = vpack.c.b16 %v1249, %v1248
      %v1256 = vpack.c.b16 %v1251, %v1250
      %v1257 = vpack.c.b16 %v1253, %v1252
      %v1263 = vsel %vm606, %v1228, 0
      %1265 = vmatpush.bf16.msra.mxu0 0
      %1266 = vmatpush.bf16.msra.mxu0 0
      %1267 = vmatpush.bf16.msra.mxu0 0
      %1268 = vmatpush.bf16.msra.mxu0 0
      %1269 = vmatpush.bf16.msra.mxu0 %v1257
      %1270 = vmatpush.bf16.msra.mxu0 %v1256
      %1271 = vmatpush.bf16.msra.mxu0 %v1255
      %1272 = vmatpush.bf16.msra.mxu0 %v1254
      %1273 = vmatmul.bf16.gmra.mxu0 %v1263
      %v1274 = vpop.f32.mrf.mxu0
      %v1275 = vadd.f32 %v1237, %v1274
      %v1276 = vpop.f32.mrf.mxu0
      %v1277 = vadd.f32 %v1237, %v1276
      %1278 = vdwg.mxu0
      %v1279 = vmax.f32 %v1275, 0.0
      %v1280 = vmax.f32 %v1277, 0.0
      %v1281 = vpack.c.bf16 %v1280, %v1279
      %v1282 = vld [vmem:[%s7] sm:$0xf]
      %v1283 = vld [vmem:[%s7 + $0x4] sm:$0xf]
      %v1284 = vld [vmem:[%s7 + $0x8] sm:$0xf]
      %v1285 = vld [vmem:[%s7 + $0xc] sm:$0xf]
      %v1286 = vld [vmem:[%s11 + $0x4] ss:$0 sm:$0xff]
      %v1291 = vunpack.c.l.b16 %v1282
      %v1292 = vunpack.c.l.b16 %v1283
      %v1293 = vunpack.c.l.b16 %v1284
      %v1294 = vunpack.c.l.b16 %v1285
      %v1295 = vpack.c.b16 %v1292, %v1291
      %v1296 = vpack.c.b16 %v1294, %v1293
      %v1300 = vsel %vm754, %v1281, 0
      %1302 = vmatpush.bf16.msra.mxu0 0
      %1303 = vmatpush.bf16.msra.mxu0 0
      %1304 = vmatpush.bf16.msra.mxu0 0
      %1305 = vmatpush.bf16.msra.mxu0 0
      %1306 = vmatpush.bf16.msra.mxu0 0
      %1307 = vmatpush.bf16.msra.mxu0 0
      %1308 = vmatpush.bf16.msra.mxu0 %v1296
      %1309 = vmatpush.bf16.msra.mxu0 %v1295
      %1310 = vmatmul.bf16.gmra.mxu0 %v1300
      %v1311 = vpop.f32.mrf.mxu0
      %v1312 = vadd.f32 %v1286, %v1311
      %v1313 = vpop.f32.mrf.mxu0
      %v1314 = vadd.f32 %v1286, %v1313
      %1315 = vdwg.mxu0
      %v1316 = vadd.f32 %v1224, %v1312
      %v1317 = vadd.f32 %v1226, %v1314
      %v1318 = vpack.c.bf16 %v1316, %v1316
      %v1319 = vpack.c.bf16 %v1317, %v1317
      %vm1320 = vcmask 519168
      %1321 = vst.msk [vmem:[%s548] sm:$0xf] %vm1320, %v1318
      %1322 = vst.msk [vmem:[%s548 + $0x4] sm:$0xf] %vm1320, %v1319
      %v1323 = vld [vmem:[%s8] sm:$0xf]
      %v1324 = vld [vmem:[%s8 + $0x4] sm:$0xf]
      %v1325 = vld [vmem:[%s8 + $0x8] sm:$0xf]
      %v1326 = vld [vmem:[%s8 + $0xc] sm:$0xf]
      %v1327 = vld [vmem:[%s8 + $0x10] sm:$0xf]
      %v1328 = vld [vmem:[%s8 + $0x14] sm:$0xf]
      %v1329 = vld [vmem:[%s8 + $0x18] sm:$0xf]
      %v1330 = vld [vmem:[%s8 + $0x1c] sm:$0xf]
      %v1331 = vld [vmem:[%s11 + $0x5] ss:$0 sm:$0xff]
      %v1340 = vunpack.c.l.b16 %v1323
      %v1341 = vunpack.c.l.b16 %v1324
      %v1342 = vunpack.c.l.b16 %v1325
      %v1343 = vunpack.c.l.b16 %v1326
      %v1344 = vunpack.c.l.b16 %v1327
      %v1345 = vunpack.c.l.b16 %v1328
      %v1346 = vunpack.c.l.b16 %v1329
      %v1347 = vunpack.c.l.b16 %v1330
      %v1348 = vpack.c.b16 %v1341, %v1340
      %v1349 = vpack.c.b16 %v1343, %v1342
      %v1350 = vpack.c.b16 %v1345, %v1344
      %v1351 = vpack.c.b16 %v1347, %v1346
      %1356 = vmatpush.bf16.msra.mxu0 0
      %1357 = vmatpush.bf16.msra.mxu0 0
      %1358 = vmatpush.bf16.msra.mxu0 0
      %1359 = vmatpush.bf16.msra.mxu0 0
      %1360 = vmatpush.bf16.msra.mxu0 %v1351
      %1361 = vmatpush.bf16.msra.mxu0 %v1350
      %1362 = vmatpush.bf16.msra.mxu0 %v1349
      %1363 = vmatpush.bf16.msra.mxu0 %v1348
      %1364 = vmatmul.bf16.gmra.mxu0 %v667
      %v1365 = vpop.f32.mrf.mxu0
      %v1366 = vadd.f32 %v1331, %v1365
      %v1367 = vpop.f32.mrf.mxu0
      %v1368 = vadd.f32 %v1331, %v1367
      %1369 = vmatmul.bf16.gmra.mxu0 %v670
      %v1370 = vpop.f32.mrf.mxu0
      %v1371 = vadd.f32 %v1331, %v1370
      %v1372 = vpop.f32.mrf.mxu0
      %v1373 = vadd.f32 %v1331, %v1372
      %1374 = vdwg.mxu0
      %v1375 = vpack.c.bf16 %v1368, %v1366
      %v1376 = vpack.c.bf16 %v1373, %v1371
      %1379 = vrot.lane.b32.xlu0 %v1375, 96
      %v1380 = vpop.permute.xlu0 %1379
      %1381 = vrot.lane.b32.xlu0 %v1376, 96
      %v1382 = vpop.permute.xlu0 %1381
      %v1384 = vsel %vm754, %v1375, 0
      %v1387 = vsel %vm754, %v1376, 0
      %v1390 = vsel %vm754, %v1380, 0
      %v1393 = vsel %vm754, %v1382, 0
      %1395 = vmatpush.bf16.xpose.msra.mxu0 0
      %1396 = vmatpush.bf16.xpose.msra.mxu0 0
      %1397 = vmatpush.bf16.xpose.msra.mxu0 0
      %1398 = vmatpush.bf16.xpose.msra.mxu0 0
      %1399 = vmatpush.bf16.xpose.msra.mxu0 0
      %1400 = vmatpush.bf16.xpose.msra.mxu0 0
      %1401 = vmatpush.bf16.xpose.msra.mxu0 %v1393
      %1402 = vmatpush.bf16.xpose.msra.mxu0 %v1390
      %1403 = vmatmul.bf16.gmra.mxu0 %v1384
      %v1404 = vpop.f32.mrf.mxu0
      %v1405 = vadd.f32 0.0, %v1404
      %v1406 = vpop.f32.mrf.mxu0
      %v1407 = vadd.f32 0.0, %v1406
      %1408 = vmatmul.bf16.gmra.mxu0 %v1387
      %v1409 = vpop.f32.mrf.mxu0
      %v1410 = vadd.f32 0.0, %v1409
      %v1411 = vpop.f32.mrf.mxu0
      %v1412 = vadd.f32 0.0, %v1411
      %1413 = vdwg.mxu0
      %v1414 = vsel %vm754, %v1405, -inf
      %1415 = vmax.xlane.f32.xlu0 %v1414
      %v1416 = vpop.xlane.xlu0 %1415
      %v1417 = vsel %vm754, %v1407, -inf
      %1418 = vmax.xlane.f32.xlu0 %v1417
      %v1419 = vpop.xlane.xlu0 %1418
      %v1420 = vsel %vm754, %v1410, -inf
      %1421 = vmax.xlane.f32.xlu0 %v1420
      %v1422 = vpop.xlane.xlu0 %1421
      %v1423 = vsel %vm754, %v1412, -inf
      %1424 = vmax.xlane.f32.xlu0 %v1423
      %v1425 = vpop.xlane.xlu0 %1424
      %v1426 = vsub.f32 %v1405, %v1416
      %v1427 = vsub.f32 %v1407, %v1419
      %v1428 = vsub.f32 %v1410, %v1422
      %v1429 = vsub.f32 %v1412, %v1425
      %v1430 = vmul.f32 %v1426, 1.442695
      %v1431 = vpow.pop %v1430
      %v1432 = vmul.f32 %v1427, 1.442695
      %v1433 = vpow.pop %v1432
      %v1434 = vmul.f32 %v1428, 1.442695
      %v1435 = vpow.pop %v1434
      %v1436 = vmul.f32 %v1429, 1.442695
      %v1437 = vpow.pop %v1436
      %v1438 = vsel %vm754, %v1431, 0.0
      %1439 = vadd.xlane.f32.xlu0 %v1438
      %v1440 = vpop.xlane.xlu0 %1439
      %v1441 = vsel %vm754, %v1433, 0.0
      %1442 = vadd.xlane.f32.xlu0 %v1441
      %v1443 = vpop.xlane.xlu0 %1442
      %v1444 = vsel %vm754, %v1435, 0.0
      %1445 = vadd.xlane.f32.xlu0 %v1444
      %v1446 = vpop.xlane.xlu0 %1445
      %v1447 = vsel %vm754, %v1437, 0.0
      %1448 = vadd.xlane.f32.xlu0 %v1447
      %v1449 = vpop.xlane.xlu0 %1448
      %v1450 = vrcp.pop %v1440
      %v1451 = vmul.f32 %v1440, %v1450
      %v1452 = vsub.f32 1.0, %v1451
      %v1453 = vmul.f32 %v1450, %v1452
      %v1454 = vadd.f32 %v1450, %v1453
      %vm1455 = vweird.f32 %v1440
      %vm1456 = vweird.f32 %v1450
      %vm1457 = vmor %vm1455, %vm1456
      %v1458 = vsel %vm1457, %v1450, %v1454
      %v1459 = vand.u32 2147483647, %v1440
      %vm1460 = vcmp.eq.f32.partialorder %v1459, 8.507059e+37
      %v1461 = vand.u32 %v1440, 2147483648
      %v1462 = vor.u32 1.1754944e-38, %v1461
      %v1463 = vsel %vm1460, %v1462, %v1458
      %v1464 = vmul.f32 %v1431, %v1463
      %v1465 = vrcp.pop %v1443
      %v1466 = vmul.f32 %v1443, %v1465
      %v1467 = vsub.f32 1.0, %v1466
      %v1468 = vmul.f32 %v1465, %v1467
      %v1469 = vadd.f32 %v1465, %v1468
      %vm1470 = vweird.f32 %v1443
      %vm1471 = vweird.f32 %v1465
      %vm1472 = vmor %vm1470, %vm1471
      %v1473 = vsel %vm1472, %v1465, %v1469
      %v1474 = vand.u32 2147483647, %v1443
      %vm1475 = vcmp.eq.f32.partialorder %v1474, 8.507059e+37
      %v1476 = vand.u32 %v1443, 2147483648
      %v1477 = vor.u32 1.1754944e-38, %v1476
      %v1478 = vsel %vm1475, %v1477, %v1473
      %v1479 = vmul.f32 %v1433, %v1478
      %v1480 = vrcp.pop %v1446
      %v1481 = vmul.f32 %v1446, %v1480
      %v1482 = vsub.f32 1.0, %v1481
      %v1483 = vmul.f32 %v1480, %v1482
      %v1484 = vadd.f32 %v1480, %v1483
      %vm1485 = vweird.f32 %v1446
      %vm1486 = vweird.f32 %v1480
      %vm1487 = vmor %vm1485, %vm1486
      %v1488 = vsel %vm1487, %v1480, %v1484
      %v1489 = vand.u32 2147483647, %v1446
      %vm1490 = vcmp.eq.f32.partialorder %v1489, 8.507059e+37
      %v1491 = vand.u32 %v1446, 2147483648
      %v1492 = vor.u32 1.1754944e-38, %v1491
      %v1493 = vsel %vm1490, %v1492, %v1488
      %v1494 = vmul.f32 %v1435, %v1493
      %v1495 = vrcp.pop %v1449
      %v1496 = vmul.f32 %v1449, %v1495
      %v1497 = vsub.f32 1.0, %v1496
      %v1498 = vmul.f32 %v1495, %v1497
      %v1499 = vadd.f32 %v1495, %v1498
      %vm1500 = vweird.f32 %v1449
      %vm1501 = vweird.f32 %v1495
      %vm1502 = vmor %vm1500, %vm1501
      %v1503 = vsel %vm1502, %v1495, %v1499
      %v1504 = vand.u32 2147483647, %v1449
      %vm1505 = vcmp.eq.f32.partialorder %v1504, 8.507059e+37
      %v1506 = vand.u32 %v1449, 2147483648
      %v1507 = vor.u32 1.1754944e-38, %v1506
      %v1508 = vsel %vm1505, %v1507, %v1503
      %v1509 = vmul.f32 %v1437, %v1508
      %v1510 = vsel %vm754, %v1464, 0.0
      %v1511 = vsel %vm754, %v1479, 0.0
      %v1512 = vadd.f32 %v1510, %v1511
      %v1513 = vsel %vm754, %v1494, 0.0
      %v1514 = vadd.f32 %v1512, %v1513
      %v1515 = vsel %vm754, %v1509, 0.0
      %v1516 = vadd.f32 %v1514, %v1515
      %v1517 = vrot.slane %v1516, 4
      %v1518 = vadd.f32 %v1516, %v1517
      %v1519 = vrot.slane %v1518, 2
      %v1520 = vadd.f32 %v1518, %v1519
      %v1521 = vrot.slane %v1520, 1
      %v1522 = vadd.f32 %v1520, %v1521
      %v1523 = vrcp.pop 32.0
      %v1524 = vmul.f32 32.0, %v1523
      %v1525 = vsub.f32 1.0, %v1524
      %v1526 = vmul.f32 %v1523, %v1525
      %v1527 = vadd.f32 %v1523, %v1526
      %vm1528 = vweird.f32 %v1523
      %v1529 = vsel %vm1528, %v1523, %v1527
      %v1530 = vmul.f32 %v1522, %v1529
      %vm1531 = vcmask 253952
      %1532 = vst.msk [vmem:[%s555] sm:$0x1] %vm1531, %v1530
      %v1533 = vld [vmem:[%s543] sm:$0xf]
      %v1534 = vld [vmem:[%s10] sm:$0xf]
      %v1535 = vld [vmem:[%s10 + $0x4] sm:$0xf]
      %v1536 = vld [vmem:[%s10 + $0x8] sm:$0xf]
      %v1537 = vld [vmem:[%s10 + $0xc] sm:$0xf]
      %v1538 = vld [vmem:[%s11 + $0x7] ss:$0 sm:$0xff]
      %v1543 = vunpack.c.l.b16 %v1534
      %v1544 = vunpack.c.l.b16 %v1535
      %v1545 = vunpack.c.l.b16 %v1536
      %v1546 = vunpack.c.l.b16 %v1537
      %v1547 = vpack.c.b16 %v1544, %v1543
      %v1548 = vpack.c.b16 %v1546, %v1545
      %v1552 = vsel %vm754, %v1533, 0
      %1554 = vmatpush.bf16.msra.mxu0 0
      %1555 = vmatpush.bf16.msra.mxu0 0
      %1556 = vmatpush.bf16.msra.mxu0 0
      %1557 = vmatpush.bf16.msra.mxu0 0
      %1558 = vmatpush.bf16.msra.mxu0 0
      %1559 = vmatpush.bf16.msra.mxu0 0
      %1560 = vmatpush.bf16.msra.mxu0 %v1548
      %1561 = vmatpush.bf16.msra.mxu0 %v1547
      %1562 = vmatmul.bf16.gmra.mxu0 %v1552
      %v1563 = vpop.f32.mrf.mxu0
      %v1564 = vadd.f32 %v1538, %v1563
      %v1565 = vpop.f32.mrf.mxu0
      %1566 = vdwg.mxu0
      %v1567 = vpack.c.bf16 %v1564, %v1564
      %1568 = vst.msk [vmem:[%s552] sm:$0xf] %vm1320, %v1567
      %v1569 = vld [vmem:[%s9] sm:$0xf]
      %v1570 = vld [vmem:[%s9 + $0x4] sm:$0xf]
      %v1571 = vld [vmem:[%s9 + $0x8] sm:$0xf]
      %v1572 = vld [vmem:[%s9 + $0xc] sm:$0xf]
      %v1573 = vld [vmem:[%s9 + $0x10] sm:$0xf]
      %v1574 = vld [vmem:[%s9 + $0x14] sm:$0xf]
      %v1575 = vld [vmem:[%s9 + $0x18] sm:$0xf]
      %v1576 = vld [vmem:[%s9 + $0x1c] sm:$0xf]
      %v1577 = vld [vmem:[%s11 + $0x6] ss:$0 sm:$0xff]
      %v1586 = vunpack.c.l.b16 %v1569
      %v1587 = vunpack.c.l.b16 %v1570
      %v1588 = vunpack.c.l.b16 %v1571
      %v1589 = vunpack.c.l.b16 %v1572
      %v1590 = vunpack.c.l.b16 %v1573
      %v1591 = vunpack.c.l.b16 %v1574
      %v1592 = vunpack.c.l.b16 %v1575
      %v1593 = vunpack.c.l.b16 %v1576
      %v1594 = vpack.c.b16 %v1587, %v1586
      %v1595 = vpack.c.b16 %v1589, %v1588
      %v1596 = vpack.c.b16 %v1591, %v1590
      %v1597 = vpack.c.b16 %v1593, %v1592
      %v1603 = vsel %vm606, %v1567, 0
      %1605 = vmatpush.bf16.msra.mxu0 0
      %1606 = vmatpush.bf16.msra.mxu0 0
      %1607 = vmatpush.bf16.msra.mxu0 0
      %1608 = vmatpush.bf16.msra.mxu0 0
      %1609 = vmatpush.bf16.msra.mxu0 %v1597
      %1610 = vmatpush.bf16.msra.mxu0 %v1596
      %1611 = vmatpush.bf16.msra.mxu0 %v1595
      %1612 = vmatpush.bf16.msra.mxu0 %v1594
      %1613 = vmatmul.bf16.gmra.mxu0 %v1603
      %v1614 = vpop.f32.mrf.mxu0
      %v1615 = vadd.f32 %v1577, %v1614
      %v1616 = vpop.f32.mrf.mxu0
      %1617 = vdwg.mxu0
      %v1618 = vpack.c.bf16 %v1615, %v1615
      %1620 = vrot.lane.b32.xlu0 %v1618, 96
      %v1621 = vpop.permute.xlu0 %1620
      %v1623 = vsel %vm754, %v1618, 0
      %v1626 = vsel %vm754, %v1621, 0
      %1628 = vmatpush.bf16.xpose.msra.mxu0 0
      %1629 = vmatpush.bf16.xpose.msra.mxu0 0
      %1630 = vmatpush.bf16.xpose.msra.mxu0 0
      %1631 = vmatpush.bf16.xpose.msra.mxu0 0
      %1632 = vmatpush.bf16.xpose.msra.mxu0 0
      %1633 = vmatpush.bf16.xpose.msra.mxu0 0
      %1634 = vmatpush.bf16.xpose.msra.mxu0 0
      %1635 = vmatpush.bf16.xpose.msra.mxu0 %v1626
      %1636 = vmatmul.bf16.gmra.mxu0 %v1623
      %v1637 = vpop.f32.mrf.mxu0
      %v1638 = vadd.f32 0.0, %v1637
      %v1639 = vpop.f32.mrf.mxu0
      %1640 = vdwg.mxu0
      %vm1641 = vcmask 64512
      %v1642 = vsel %vm1641, %v1638, -inf
      %1643 = vmax.xlane.f32.xlu0 %v1642
      %v1644 = vpop.xlane.xlu0 %1643
      %v1645 = vsub.f32 %v1638, %v1644
      %v1646 = vmul.f32 %v1645, 1.442695
      %v1647 = vpow.pop %v1646
      %v1648 = vsel %vm1641, %v1647, 0.0
      %1649 = vadd.xlane.f32.xlu0 %v1648
      %v1650 = vpop.xlane.xlu0 %1649
      %v1651 = vrcp.pop %v1650
      %v1652 = vmul.f32 %v1650, %v1651
      %v1653 = vsub.f32 1.0, %v1652
      %v1654 = vmul.f32 %v1651, %v1653
      %v1655 = vadd.f32 %v1651, %v1654
      %vm1656 = vweird.f32 %v1650
      %vm1657 = vweird.f32 %v1651
      %vm1658 = vmor %vm1656, %vm1657
      %v1659 = vsel %vm1658, %v1651, %v1655
      %v1660 = vand.u32 2147483647, %v1650
      %vm1661 = vcmp.eq.f32.partialorder %v1660, 8.507059e+37
      %v1662 = vand.u32 %v1650, 2147483648
      %v1663 = vor.u32 1.1754944e-38, %v1662
      %v1664 = vsel %vm1661, %v1663, %v1659
      %v1665 = vmul.f32 %v1647, %v1664
      %v1666 = vsel %vm1641, %v1665, 0.0
      %v1667 = vrot.slane %v1666, 4
      %v1668 = vadd.f32 %v1666, %v1667
      %v1669 = vrot.slane %v1668, 2
      %v1670 = vadd.f32 %v1668, %v1669
      %v1671 = vrot.slane %v1670, 1
      %v1672 = vadd.f32 %v1670, %v1671
      %v1673 = vrcp.pop 8.0
      %v1674 = vmul.f32 8.0, %v1673
      %v1675 = vsub.f32 1.0, %v1674
      %v1676 = vmul.f32 %v1673, %v1675
      %v1677 = vadd.f32 %v1673, %v1676
      %vm1678 = vweird.f32 %v1673
      %v1679 = vsel %vm1678, %v1673, %v1677
      %v1680 = vmul.f32 %v1672, %v1679
      %vm1681 = vcmask 57344
      %1682 = vst.msk [vmem:[%s558] sm:$0x1] %vm1681, %v1680
      %p1683 = scmp.lt.s32.totalorder %s27, 1
      %s1684 = scalar_select %p1683, %s27, 1
      %s1685 = smul.addr %s1684, 2
      %s1686 = smul.addr %s1685, 4
      %s1687 = scalar_lea.vmem %s12, %s1686
      %p1688 = scmp.lt.s32.totalorder %s27, 1
      %s1689 = scalar_select %p1688, %s27, 1
      %s1690 = smul.addr %s1689, 4
      %s1691 = scalar_lea.vmem %s13, %s1690
      %p1692 = scmp.lt.s32.totalorder %s27, 1
      %s1693 = scalar_select %p1692, %s27, 1
      %s1694 = scalar_lea.vmem %s14, %s1693
      %p1695 = scmp.lt.s32.totalorder %s27, 1
      %s1696 = scalar_select %p1695, %s27, 1
      %s1697 = scalar_lea.vmem %s15, %s1696
      // Predicated region
      $region69: #{uninext_finelip_forward.4} parent=67 // pred_check
        %p1698 = pneg %p312
      $region70: #{uninext_finelip_forward.4} parent=67 // pred_check_branch
        %1700 = sbr.rel (%p1698) target = $region72
      $region71: #{uninext_finelip_forward.4} parent=67 // pred_region
        _
      $region72: #{uninext_finelip_forward.4} parent=67 // pred_fallthru
        _
      // Predicated region
      $region73: #{uninext_finelip_forward.4} parent=67 // pred_check
        %p1701 = pneg %p338
      $region74: #{uninext_finelip_forward.4} parent=67 // pred_check_branch
        %1703 = sbr.rel (%p1701) target = $region76
      $region75: #{uninext_finelip_forward.4} parent=67 // pred_region
        _
      $region76: #{uninext_finelip_forward.4} parent=67 // pred_fallthru
        _
      // Predicated region
      $region77: #{uninext_finelip_forward.4} parent=67 // pred_check
        %p1704 = pneg %p364
      $region78: #{uninext_finelip_forward.4} parent=67 // pred_check_branch
        %1706 = sbr.rel (%p1704) target = $region80
      $region79: #{uninext_finelip_forward.4} parent=67 // pred_region
        _
      $region80: #{uninext_finelip_forward.4} parent=67 // pred_fallthru
        _
      // Predicated region
      $region81: #{uninext_finelip_forward.4} parent=67 // pred_check
        %p1707 = pneg %p390
      $region82: #{uninext_finelip_forward.4} parent=67 // pred_check_branch
        %1709 = sbr.rel (%p1707) target = $region84
      $region83: #{uninext_finelip_forward.4} parent=67 // pred_region
        _
      $region84: #{uninext_finelip_forward.4} parent=67 // pred_fallthru
        _
    $region68: #{uninext_finelip_forward.4} parent=5 // pred_fallthru
      _
    %p1710 = scmp.le.s32.totalorder 2, %s22
    // Predicated region
    $region85: #{uninext_finelip_forward.4} parent=5 // pred_check
      %p1711 = pneg %p1710
    $region86: #{uninext_finelip_forward.4} parent=5 // pred_check_branch
      %1713 = sbr.rel (%p1711) target = $region88
    $region87: #{uninext_finelip_forward.4} parent=5 // pred_region
      %s1714 = ssub.s32 %s22, 2
      // Predicated region
      $region89: #{uninext_finelip_forward.4} parent=87 // pred_check
        %p1715 = pneg %p318
      $region90: #{uninext_finelip_forward.4} parent=87 // pred_check_branch
        %1717 = sbr.rel (%p1715) target = $region92
      $region91: #{uninext_finelip_forward.4} parent=87 // pred_region
        %p1718 = scmp.lt.s32.totalorder %s28, 1
        %s1719 = scalar_select %p1718, %s28, 1
        %s1720 = smul.addr %s1719, 2
        %s1721 = smul.addr %s1720, 4
        %s1722 = scalar_lea.vmem %s12, %s1721
      $region92: #{uninext_finelip_forward.4} parent=87 // pred_fallthru
        _
      // Predicated region
      $region93: #{uninext_finelip_forward.4} parent=87 // pred_check
        %p1723 = pneg %p344
      $region94: #{uninext_finelip_forward.4} parent=87 // pred_check_branch
        %1725 = sbr.rel (%p1723) target = $region96
      $region95: #{uninext_finelip_forward.4} parent=87 // pred_region
        %p1726 = scmp.lt.s32.totalorder %s28, 1
        %s1727 = scalar_select %p1726, %s28, 1
        %s1728 = smul.addr %s1727, 4
        %s1729 = scalar_lea.vmem %s13, %s1728
      $region96: #{uninext_finelip_forward.4} parent=87 // pred_fallthru
        _
      // Predicated region
      $region97: #{uninext_finelip_forward.4} parent=87 // pred_check
        %p1730 = pneg %p370
      $region98: #{uninext_finelip_forward.4} parent=87 // pred_check_branch
        %1732 = sbr.rel (%p1730) target = $region100
      $region99: #{uninext_finelip_forward.4} parent=87 // pred_region
        %p1733 = scmp.lt.s32.totalorder %s28, 1
        %s1734 = scalar_select %p1733, %s28, 1
        %s1735 = scalar_lea.vmem %s14, %s1734
      $region100: #{uninext_finelip_forward.4} parent=87 // pred_fallthru
        _
      // Predicated region
      $region101: #{uninext_finelip_forward.4} parent=87 // pred_check
        %p1736 = pneg %p396
      $region102: #{uninext_finelip_forward.4} parent=87 // pred_check_branch
        %1738 = sbr.rel (%p1736) target = $region104
      $region103: #{uninext_finelip_forward.4} parent=87 // pred_region
        %p1739 = scmp.lt.s32.totalorder %s28, 1
        %s1740 = scalar_select %p1739, %s28, 1
        %s1741 = scalar_lea.vmem %s15, %s1740
      $region104: #{uninext_finelip_forward.4} parent=87 // pred_fallthru
        _
    $region88: #{uninext_finelip_forward.4} parent=5 // pred_fallthru
      _
  $region6: #{uninext_finelip_forward.4} parent=0 // loop_footer
    %s26 = sadd.s32 1, %s22
  $region7: #{uninext_finelip_forward.4} parent=0 // loop_footer_branch
    %21 = sbr.rel target = $region3
  $region8: #{uninext_finelip_forward.4} parent=0 // loop_exit
    _

// kernel: uninext_finelip_forward.5
$region0: #{uninext_finelip_forward.5}
  #allocation0 [shape = 'u32[]', space=smem, size = 0x4, offset = 0x4, fixed_abs, tag = 'smem constant byte address 0x4 - core index']
  #allocation1 [shape = 'u32[72,128]{1,0:T(1,128)}', space=vmem, size = 0x9000, scoped, tag = 'internal scratch']
  %s0 = inlined_call_operand.vmem [shape: bf16[2,16,64], index: 0, kind: input, shape index: {}]
  %s1 = inlined_call_operand.vmem [shape: bf16[2,64,64], index: 1, kind: input, shape index: {}]
  %s2 = inlined_call_operand.vmem [shape: bf16[2,6,64], index: 2, kind: input, shape index: {}]
  %s3 = inlined_call_operand.vmem [shape: bf16[2,8,64], index: 3, kind: input, shape index: {}]
  %s4 = inlined_call_operand.vmem [shape: bf16[2,1,8], index: 4, kind: input, shape index: {}]
  %s5 = inlined_call_operand.vmem [shape: bf16[9,16,16], index: 5, kind: input, shape index: {}]
  %s6 = inlined_call_operand.vmem [shape: bf16[64,288], index: 6, kind: input, shape index: {}]
  %s7 = inlined_call_operand.vmem [shape: bf16[32,144], index: 7, kind: input, shape index: {}]
  %s8 = inlined_call_operand.vmem [shape: bf16[16,256], index: 8, kind: input, shape index: {}]
  %s9 = inlined_call_operand.vmem [shape: f32[8,32], index: 9, kind: input, shape index: {}]
  %s10 = inlined_call_operand.vmem [shape: f32[2,1,256], index: 10, kind: output, shape index: {0}]
  %s11 = inlined_call_operand.vmem [shape: f32[2,1,1], index: 11, kind: output, shape index: {1}]
  %12 = xla_tuple %s10, %s11
  %s13 = sld [smem:[#allocation0]]
  $region81: #{uninext_finelip_forward.5} parent=0
    _
  %s15 = ssub.s32 1, %s13
  %s16 = scalar_select 0, %s15, %s13
  loop: start=0, step=1, limit=4
  $region2: #{uninext_finelip_forward.5} parent=0 // loop_pre_header
    _
  $region3: #{uninext_finelip_forward.5} parent=0 // loop_header
    %s18 = sphi 0, %s22
    %p19 = scmp.ge.s32.totalorder %s18, 4
    %s28 = sphi 0, %s30
    %s31 = sphi 0, %s28
    %s32 = sphi 0, %s31
    %s48 = sphi 0, %s32
    %s54 = sphi 0, %s56
    %s57 = sphi 0, %s54
    %s58 = sphi 0, %s57
    %s74 = sphi 0, %s58
    %s80 = sphi 0, %s82
    %s83 = sphi 0, %s80
    %s84 = sphi 0, %s83
    %s100 = sphi 0, %s84
    %s106 = sphi 0, %s108
    %s109 = sphi 0, %s106
    %s110 = sphi 0, %s109
    %s126 = sphi 0, %s110
    %s132 = sphi 0, %s134
    %s135 = sphi 0, %s132
    %s136 = sphi 0, %s135
    %s152 = sphi 0, %s136
    %s156 = sphi 0, %s156
    %s158 = sphi 0, %s156
    %s159 = sphi 0, %s158
    %s173 = sphi 0, %s159
    %s177 = sphi 0, %s177
    %s179 = sphi 0, %s177
    %s180 = sphi 0, %s179
    %s194 = sphi 0, %s180
    %s198 = sphi 0, %s198
    %s200 = sphi 0, %s198
    %s201 = sphi 0, %s200
    %s215 = sphi 0, %s201
    %s219 = sphi 0, %s219
    %s221 = sphi 0, %s219
    %s222 = sphi 0, %s221
    %s236 = sphi 0, %s222
    %s240 = sphi 0, %s240
    %s242 = sphi 0, %s240
    %s243 = sphi 0, %s242
    %s257 = sphi 0, %s243
    %s263 = sphi 0, %s265
    %s266 = sphi 0, %s263
    %s267 = sphi 0, %s266
    %s283 = sphi 0, %s267
    %s289 = sphi 0, %s291
    %s292 = sphi 0, %s289
    %s293 = sphi 0, %s292
    %s309 = sphi 0, %s293
  $region4: #{uninext_finelip_forward.5} parent=0 // loop_header_branch
    %21 = sbr.rel (%p19) target = $region8
  $region5: #{uninext_finelip_forward.5} parent=0 // loop_body
    %s23 = ssub.s32 %s18, 1
    %s24 = ssub.s32 %s18, 2
    %s25 = sadd.s32 %s18, 1
    %s26 = ssub.s32 %s18, %s25
    %p27 = scmp.eq.s32.totalorder %s26, 0
    %s29 = sadd.s32 %s28, 1
    %s30 = scalar_select %p27, %s28, %s29
    %p33 = pneg %p27
    %p34 = scmp.eq.s32.totalorder %s18, 1
    %p35 = por %p33, %p34
    %p36 = scmp.ne.s32.totalorder %s28, %s31
    %p37 = scmp.eq.s32.totalorder %s18, 0
    %p38 = por %p36, %p37
    %p39 = scmp.ne.s32.totalorder %s28, %s31
    %p40 = scmp.eq.s32.totalorder %s23, 1
    %p41 = por %p39, %p40
    %p42 = scmp.ne.s32.totalorder %s31, %s32
    %p43 = scmp.eq.s32.totalorder %s23, 0
    %p44 = por %p42, %p43
    %p45 = scmp.ne.s32.totalorder %s31, %s32
    %p46 = scmp.eq.s32.totalorder %s24, 1
    %p47 = por %p45, %p46
    %p49 = scmp.ne.s32.totalorder %s32, %s48
    %p50 = scmp.eq.s32.totalorder %s24, 0
    %p51 = por %p49, %p50
    %s52 = ssub.s32 %s18, %s25
    %p53 = scmp.eq.s32.totalorder %s52, 0
    %s55 = sadd.s32 %s54, 1
    %s56 = scalar_select %p53, %s54, %s55
    %p59 = pneg %p53
    %p60 = scmp.eq.s32.totalorder %s18, 1
    %p61 = por %p59, %p60
    %p62 = scmp.ne.s32.totalorder %s54, %s57
    %p63 = scmp.eq.s32.totalorder %s18, 0
    %p64 = por %p62, %p63
    %p65 = scmp.ne.s32.totalorder %s54, %s57
    %p66 = scmp.eq.s32.totalorder %s23, 1
    %p67 = por %p65, %p66
    %p68 = scmp.ne.s32.totalorder %s57, %s58
    %p69 = scmp.eq.s32.totalorder %s23, 0
    %p70 = por %p68, %p69
    %p71 = scmp.ne.s32.totalorder %s57, %s58
    %p72 = scmp.eq.s32.totalorder %s24, 1
    %p73 = por %p71, %p72
    %p75 = scmp.ne.s32.totalorder %s58, %s74
    %p76 = scmp.eq.s32.totalorder %s24, 0
    %p77 = por %p75, %p76
    %s78 = ssub.s32 %s18, %s25
    %p79 = scmp.eq.s32.totalorder %s78, 0
    %s81 = sadd.s32 %s80, 1
    %s82 = scalar_select %p79, %s80, %s81
    %p85 = pneg %p79
    %p86 = scmp.eq.s32.totalorder %s18, 1
    %p87 = por %p85, %p86
    %p88 = scmp.ne.s32.totalorder %s80, %s83
    %p89 = scmp.eq.s32.totalorder %s18, 0
    %p90 = por %p88, %p89
    %p91 = scmp.ne.s32.totalorder %s80, %s83
    %p92 = scmp.eq.s32.totalorder %s23, 1
    %p93 = por %p91, %p92
    %p94 = scmp.ne.s32.totalorder %s83, %s84
    %p95 = scmp.eq.s32.totalorder %s23, 0
    %p96 = por %p94, %p95
    %p97 = scmp.ne.s32.totalorder %s83, %s84
    %p98 = scmp.eq.s32.totalorder %s24, 1
    %p99 = por %p97, %p98
    %p101 = scmp.ne.s32.totalorder %s84, %s100
    %p102 = scmp.eq.s32.totalorder %s24, 0
    %p103 = por %p101, %p102
    %s104 = ssub.s32 %s18, %s25
    %p105 = scmp.eq.s32.totalorder %s104, 0
    %s107 = sadd.s32 %s106, 1
    %s108 = scalar_select %p105, %s106, %s107
    %p111 = pneg %p105
    %p112 = scmp.eq.s32.totalorder %s18, 1
    %p113 = por %p111, %p112
    %p114 = scmp.ne.s32.totalorder %s106, %s109
    %p115 = scmp.eq.s32.totalorder %s18, 0
    %p116 = por %p114, %p115
    %p117 = scmp.ne.s32.totalorder %s106, %s109
    %p118 = scmp.eq.s32.totalorder %s23, 1
    %p119 = por %p117, %p118
    %p120 = scmp.ne.s32.totalorder %s109, %s110
    %p121 = scmp.eq.s32.totalorder %s23, 0
    %p122 = por %p120, %p121
    %p123 = scmp.ne.s32.totalorder %s109, %s110
    %p124 = scmp.eq.s32.totalorder %s24, 1
    %p125 = por %p123, %p124
    %p127 = scmp.ne.s32.totalorder %s110, %s126
    %p128 = scmp.eq.s32.totalorder %s24, 0
    %p129 = por %p127, %p128
    %s130 = ssub.s32 %s18, %s25
    %p131 = scmp.eq.s32.totalorder %s130, 0
    %s133 = sadd.s32 %s132, 1
    %s134 = scalar_select %p131, %s132, %s133
    %p137 = pneg %p131
    %p138 = scmp.eq.s32.totalorder %s18, 1
    %p139 = por %p137, %p138
    %p140 = scmp.ne.s32.totalorder %s132, %s135
    %p141 = scmp.eq.s32.totalorder %s18, 0
    %p142 = por %p140, %p141
    %p143 = scmp.ne.s32.totalorder %s132, %s135
    %p144 = scmp.eq.s32.totalorder %s23, 1
    %p145 = por %p143, %p144
    %p146 = scmp.ne.s32.totalorder %s135, %s136
    %p147 = scmp.eq.s32.totalorder %s23, 0
    %p148 = por %p146, %p147
    %p149 = scmp.ne.s32.totalorder %s135, %s136
    %p150 = scmp.eq.s32.totalorder %s24, 1
    %p151 = por %p149, %p150
    %p153 = scmp.ne.s32.totalorder %s136, %s152
    %p154 = scmp.eq.s32.totalorder %s24, 0
    %p155 = por %p153, %p154
    %s157 = sadd.s32 %s156, 1
    %p160 = scmp.eq.s32.totalorder %s18, 1
    %p161 = scmp.ne.s32.totalorder %s156, %s158
    %p162 = scmp.eq.s32.totalorder %s18, 0
    %p163 = por %p161, %p162
    %p164 = scmp.ne.s32.totalorder %s156, %s158
    %p165 = scmp.eq.s32.totalorder %s23, 1
    %p166 = por %p164, %p165
    %p167 = scmp.ne.s32.totalorder %s158, %s159
    %p168 = scmp.eq.s32.totalorder %s23, 0
    %p169 = por %p167, %p168
    %p170 = scmp.ne.s32.totalorder %s158, %s159
    %p171 = scmp.eq.s32.totalorder %s24, 1
    %p172 = por %p170, %p171
    %p174 = scmp.ne.s32.totalorder %s159, %s173
    %p175 = scmp.eq.s32.totalorder %s24, 0
    %p176 = por %p174, %p175
    %s178 = sadd.s32 %s177, 1
    %p181 = scmp.eq.s32.totalorder %s18, 1
    %p182 = scmp.ne.s32.totalorder %s177, %s179
    %p183 = scmp.eq.s32.totalorder %s18, 0
    %p184 = por %p182, %p183
    %p185 = scmp.ne.s32.totalorder %s177, %s179
    %p186 = scmp.eq.s32.totalorder %s23, 1
    %p187 = por %p185, %p186
    %p188 = scmp.ne.s32.totalorder %s179, %s180
    %p189 = scmp.eq.s32.totalorder %s23, 0
    %p190 = por %p188, %p189
    %p191 = scmp.ne.s32.totalorder %s179, %s180
    %p192 = scmp.eq.s32.totalorder %s24, 1
    %p193 = por %p191, %p192
    %p195 = scmp.ne.s32.totalorder %s180, %s194
    %p196 = scmp.eq.s32.totalorder %s24, 0
    %p197 = por %p195, %p196
    %s199 = sadd.s32 %s198, 1
    %p202 = scmp.eq.s32.totalorder %s18, 1
    %p203 = scmp.ne.s32.totalorder %s198, %s200
    %p204 = scmp.eq.s32.totalorder %s18, 0
    %p205 = por %p203, %p204
    %p206 = scmp.ne.s32.totalorder %s198, %s200
    %p207 = scmp.eq.s32.totalorder %s23, 1
    %p208 = por %p206, %p207
    %p209 = scmp.ne.s32.totalorder %s200, %s201
    %p210 = scmp.eq.s32.totalorder %s23, 0
    %p211 = por %p209, %p210
    %p212 = scmp.ne.s32.totalorder %s200, %s201
    %p213 = scmp.eq.s32.totalorder %s24, 1
    %p214 = por %p212, %p213
    %p216 = scmp.ne.s32.totalorder %s201, %s215
    %p217 = scmp.eq.s32.totalorder %s24, 0
    %p218 = por %p216, %p217
    %s220 = sadd.s32 %s219, 1
    %p223 = scmp.eq.s32.totalorder %s18, 1
    %p224 = scmp.ne.s32.totalorder %s219, %s221
    %p225 = scmp.eq.s32.totalorder %s18, 0
    %p226 = por %p224, %p225
    %p227 = scmp.ne.s32.totalorder %s219, %s221
    %p228 = scmp.eq.s32.totalorder %s23, 1
    %p229 = por %p227, %p228
    %p230 = scmp.ne.s32.totalorder %s221, %s222
    %p231 = scmp.eq.s32.totalorder %s23, 0
    %p232 = por %p230, %p231
    %p233 = scmp.ne.s32.totalorder %s221, %s222
    %p234 = scmp.eq.s32.totalorder %s24, 1
    %p235 = por %p233, %p234
    %p237 = scmp.ne.s32.totalorder %s222, %s236
    %p238 = scmp.eq.s32.totalorder %s24, 0
    %p239 = por %p237, %p238
    %s241 = sadd.s32 %s240, 1
    %p244 = scmp.eq.s32.totalorder %s18, 1
    %p245 = scmp.ne.s32.totalorder %s240, %s242
    %p246 = scmp.eq.s32.totalorder %s18, 0
    %p247 = por %p245, %p246
    %p248 = scmp.ne.s32.totalorder %s240, %s242
    %p249 = scmp.eq.s32.totalorder %s23, 1
    %p250 = por %p248, %p249
    %p251 = scmp.ne.s32.totalorder %s242, %s243
    %p252 = scmp.eq.s32.totalorder %s23, 0
    %p253 = por %p251, %p252
    %p254 = scmp.ne.s32.totalorder %s242, %s243
    %p255 = scmp.eq.s32.totalorder %s24, 1
    %p256 = por %p254, %p255
    %p258 = scmp.ne.s32.totalorder %s243, %s257
    %p259 = scmp.eq.s32.totalorder %s24, 0
    %p260 = por %p258, %p259
    %s261 = ssub.s32 %s18, %s25
    %p262 = scmp.eq.s32.totalorder %s261, 0
    %s264 = sadd.s32 %s263, 1
    %s265 = scalar_select %p262, %s263, %s264
    %p268 = pneg %p262
    %p269 = scmp.eq.s32.totalorder %s18, 1
    %p270 = por %p268, %p269
    %p271 = scmp.ne.s32.totalorder %s263, %s266
    %p272 = scmp.eq.s32.totalorder %s18, 0
    %p273 = por %p271, %p272
    %p274 = scmp.ne.s32.totalorder %s263, %s266
    %p275 = scmp.eq.s32.totalorder %s23, 1
    %p276 = por %p274, %p275
    %p277 = scmp.ne.s32.totalorder %s266, %s267
    %p278 = scmp.eq.s32.totalorder %s23, 0
    %p279 = por %p277, %p278
    %p280 = scmp.ne.s32.totalorder %s266, %s267
    %p281 = scmp.eq.s32.totalorder %s24, 1
    %p282 = por %p280, %p281
    %p284 = scmp.ne.s32.totalorder %s267, %s283
    %p285 = scmp.eq.s32.totalorder %s24, 0
    %p286 = por %p284, %p285
    %s287 = ssub.s32 %s18, %s25
    %p288 = scmp.eq.s32.totalorder %s287, 0
    %s290 = sadd.s32 %s289, 1
    %s291 = scalar_select %p288, %s289, %s290
    %p294 = pneg %p288
    %p295 = scmp.eq.s32.totalorder %s18, 1
    %p296 = por %p294, %p295
    %p297 = scmp.ne.s32.totalorder %s289, %s292
    %p298 = scmp.eq.s32.totalorder %s18, 0
    %p299 = por %p297, %p298
    %p300 = scmp.ne.s32.totalorder %s289, %s292
    %p301 = scmp.eq.s32.totalorder %s23, 1
    %p302 = por %p300, %p301
    %p303 = scmp.ne.s32.totalorder %s292, %s293
    %p304 = scmp.eq.s32.totalorder %s23, 0
    %p305 = por %p303, %p304
    %p306 = scmp.ne.s32.totalorder %s292, %s293
    %p307 = scmp.eq.s32.totalorder %s24, 1
    %p308 = por %p306, %p307
    %p310 = scmp.ne.s32.totalorder %s293, %s309
    %p311 = scmp.eq.s32.totalorder %s24, 0
    %p312 = por %p310, %p311
    %p313 = scmp.le.s32.totalorder 1, %s18
    %p314 = scmp.lt.s32.totalorder %s18, 3
    %p315 = pnand %p313, %p314
    %p316 = pneg %p315
    // Predicated region
    $region9: #{uninext_finelip_forward.5} parent=5 // pred_check
      _
    $region10: #{uninext_finelip_forward.5} parent=5 // pred_check_branch
      %318 = sbr.rel (%p315) target = $region12
    $region11: #{uninext_finelip_forward.5} parent=5 // pred_region
      %s319 = ssub.s32 %s18, 1
      // Predicated region
      $region13: #{uninext_finelip_forward.5} parent=11 // pred_check
        %p320 = pneg %p169
      $region14: #{uninext_finelip_forward.5} parent=11 // pred_check_branch
        %322 = sbr.rel (%p320) target = $region16
      $region15: #{uninext_finelip_forward.5} parent=11 // pred_region
        _
      $region16: #{uninext_finelip_forward.5} parent=11 // pred_fallthru
        _
      // Predicated region
      $region17: #{uninext_finelip_forward.5} parent=11 // pred_check
        %p323 = pneg %p190
      $region18: #{uninext_finelip_forward.5} parent=11 // pred_check_branch
        %325 = sbr.rel (%p323) target = $region20
      $region19: #{uninext_finelip_forward.5} parent=11 // pred_region
        _
      $region20: #{uninext_finelip_forward.5} parent=11 // pred_fallthru
        _
      // Predicated region
      $region21: #{uninext_finelip_forward.5} parent=11 // pred_check
        %p326 = pneg %p211
      $region22: #{uninext_finelip_forward.5} parent=11 // pred_check_branch
        %328 = sbr.rel (%p326) target = $region24
      $region23: #{uninext_finelip_forward.5} parent=11 // pred_region
        _
      $region24: #{uninext_finelip_forward.5} parent=11 // pred_fallthru
        _
      // Predicated region
      $region25: #{uninext_finelip_forward.5} parent=11 // pred_check
        %p329 = pneg %p232
      $region26: #{uninext_finelip_forward.5} parent=11 // pred_check_branch
        %331 = sbr.rel (%p329) target = $region28
      $region27: #{uninext_finelip_forward.5} parent=11 // pred_region
        _
      $region28: #{uninext_finelip_forward.5} parent=11 // pred_fallthru
        _
      // Predicated region
      $region29: #{uninext_finelip_forward.5} parent=11 // pred_check
        %p332 = pneg %p253
      $region30: #{uninext_finelip_forward.5} parent=11 // pred_check_branch
        %334 = sbr.rel (%p332) target = $region32
      $region31: #{uninext_finelip_forward.5} parent=11 // pred_region
        _
      $region32: #{uninext_finelip_forward.5} parent=11 // pred_fallthru
        _
    $region12: #{uninext_finelip_forward.5} parent=5 // pred_fallthru
      _
    %p335 = scmp.lt.s32.totalorder %s18, 2
    // Predicated region
    $region33: #{uninext_finelip_forward.5} parent=5 // pred_check
      %p336 = pneg %p335
    $region34: #{uninext_finelip_forward.5} parent=5 // pred_check_branch
      %338 = sbr.rel (%p336) target = $region36
    $region35: #{uninext_finelip_forward.5} parent=5 // pred_region
      // Predicated region
      $region37: #{uninext_finelip_forward.5} parent=35 // pred_check
        %p339 = pneg %p38
      $region38: #{uninext_finelip_forward.5} parent=35 // pred_check_branch
        %341 = sbr.rel (%p339) target = $region40
      $region39: #{uninext_finelip_forward.5} parent=35 // pred_region
        %p342 = scmp.lt.s32.totalorder %s18, 1
        %s343 = scalar_select %p342, %s18, 1
        %s344 = smul.addr %s343, 2
        %s345 = smul.addr %s344, 4
        %s346 = scalar_lea.vmem %s0, %s345
      $region40: #{uninext_finelip_forward.5} parent=35 // pred_fallthru
        _
      // Predicated region
      $region41: #{uninext_finelip_forward.5} parent=35 // pred_check
        %p347 = pneg %p64
      $region42: #{uninext_finelip_forward.5} parent=35 // pred_check_branch
        %349 = sbr.rel (%p347) target = $region44
      $region43: #{uninext_finelip_forward.5} parent=35 // pred_region
        %p350 = scmp.lt.s32.totalorder %s18, 1
        %s351 = scalar_select %p350, %s18, 1
        %s352 = smul.addr %s351, 8
        %s353 = smul.addr %s352, 4
        %s354 = scalar_lea.vmem %s1, %s353
      $region44: #{uninext_finelip_forward.5} parent=35 // pred_fallthru
        _
      // Predicated region
      $region45: #{uninext_finelip_forward.5} parent=35 // pred_check
        %p355 = pneg %p90
      $region46: #{uninext_finelip_forward.5} parent=35 // pred_check_branch
        %357 = sbr.rel (%p355) target = $region48
      $region47: #{uninext_finelip_forward.5} parent=35 // pred_region
        %p358 = scmp.lt.s32.totalorder %s18, 1
        %s359 = scalar_select %p358, %s18, 1
        %s360 = smul.addr %s359, 4
        %s361 = scalar_lea.vmem %s2, %s360
      $region48: #{uninext_finelip_forward.5} parent=35 // pred_fallthru
        _
      // Predicated region
      $region49: #{uninext_finelip_forward.5} parent=35 // pred_check
        %p362 = pneg %p116
      $region50: #{uninext_finelip_forward.5} parent=35 // pred_check_branch
        %364 = sbr.rel (%p362) target = $region52
      $region51: #{uninext_finelip_forward.5} parent=35 // pred_region
        %p365 = scmp.lt.s32.totalorder %s18, 1
        %s366 = scalar_select %p365, %s18, 1
        %s367 = smul.addr %s366, 4
        %s368 = scalar_lea.vmem %s3, %s367
      $region52: #{uninext_finelip_forward.5} parent=35 // pred_fallthru
        _
      // Predicated region
      $region53: #{uninext_finelip_forward.5} parent=35 // pred_check
        %p369 = pneg %p142
      $region54: #{uninext_finelip_forward.5} parent=35 // pred_check_branch
        %371 = sbr.rel (%p369) target = $region56
      $region55: #{uninext_finelip_forward.5} parent=35 // pred_region
        %p372 = scmp.lt.s32.totalorder %s18, 1
        %s373 = scalar_select %p372, %s18, 1
        %s374 = scalar_lea.vmem %s4, %s373
      $region56: #{uninext_finelip_forward.5} parent=35 // pred_fallthru
        _
    $region36: #{uninext_finelip_forward.5} parent=5 // pred_fallthru
      _
    %p375 = scmp.le.s32.totalorder 1, %s18
    %p376 = scmp.lt.s32.totalorder %s18, 3
    %p377 = pnand %p375, %p376
    %p378 = pneg %p377
    // Predicated region
    $region57: #{uninext_finelip_forward.5} parent=5 // pred_check
      _
    $region58: #{uninext_finelip_forward.5} parent=5 // pred_check_branch
      %380 = sbr.rel (%p377) target = $region60
    $region59: #{uninext_finelip_forward.5} parent=5 // pred_region
      %s381 = ssub.s32 %s18, 1
      %p382 = scmp.lt.s32.totalorder %s23, 1
      %s383 = scalar_select %p382, %s23, 1
      %s384 = smul.addr %s383, 2
      %s385 = smul.addr %s384, 4
      %s386 = scalar_lea.vmem %s0, %s385
      %p387 = pneg %p44
      %p388 = pneg %p41
      %p389 = scmp.lt.s32.totalorder %s23, 1
      %s390 = scalar_select %p389, %s23, 1
      %s391 = smul.addr %s390, 8
      %s392 = smul.addr %s391, 4
      %s393 = scalar_lea.vmem %s1, %s392
      %p394 = pneg %p70
      %p395 = pneg %p67
      %p396 = scmp.lt.s32.totalorder %s23, 1
      %s397 = scalar_select %p396, %s23, 1
      %s398 = smul.addr %s397, 4
      %s399 = scalar_lea.vmem %s2, %s398
      %p400 = pneg %p96
      %p401 = pneg %p93
      %p402 = scmp.lt.s32.totalorder %s23, 1
      %s403 = scalar_select %p402, %s23, 1
      %s404 = smul.addr %s403, 4
      %s405 = scalar_lea.vmem %s3, %s404
      %p406 = pneg %p122
      %p407 = pneg %p119
      %p408 = scmp.lt.s32.totalorder %s23, 1
      %s409 = scalar_select %p408, %s23, 1
      %s410 = scalar_lea.vmem %s4, %s409
      %p411 = pneg %p148
      %p412 = pneg %p145
      %p413 = pneg %p169
      %p414 = pneg %p166
      %p415 = pneg %p190
      %p416 = pneg %p187
      %p417 = pneg %p211
      %p418 = pneg %p208
      %p419 = pneg %p232
      %p420 = pneg %p229
      %p421 = pneg %p253
      %p422 = pneg %p250
      %p423 = pneg %p279
      %p424 = pneg %p276
      %p425 = scmp.lt.s32.totalorder %s23, 1
      %s426 = scalar_select %p425, %s23, 1
      %s427 = smul.addr %s426, 2
      %s428 = scalar_lea.vmem %s10, %s427
      %p429 = pneg %p305
      %p430 = pneg %p302
      %p431 = scmp.lt.s32.totalorder %s23, 1
      %s432 = scalar_select %p431, %s23, 1
      %s433 = scalar_lea.vmem %s11, %s432
      %p434 = scmp.lt.s32.totalorder %s23, 1
      %s435 = scalar_select %p434, %s23, 1
      %s436 = smul.addr %s435, 2
      %s437 = smul.addr %s436, 4
      %s438 = scalar_lea.vmem %s0, %s437
      %p439 = scmp.lt.s32.totalorder %s23, 1
      %s440 = scalar_select %p439, %s23, 1
      %s441 = smul.addr %s440, 8
      %s442 = smul.addr %s441, 4
      %s443 = scalar_lea.vmem %s1, %s442
      %p444 = scmp.lt.s32.totalorder %s23, 1
      %s445 = scalar_select %p444, %s23, 1
      %s446 = smul.addr %s445, 4
      %s447 = scalar_lea.vmem %s2, %s446
      %p448 = scmp.lt.s32.totalorder %s23, 1
      %s449 = scalar_select %p448, %s23, 1
      %s450 = smul.addr %s449, 4
      %s451 = scalar_lea.vmem %s3, %s450
      %p452 = scmp.lt.s32.totalorder %s23, 1
      %s453 = scalar_select %p452, %s23, 1
      %s454 = scalar_lea.vmem %s4, %s453
      %p455 = scmp.lt.s32.totalorder %s23, 1
      %s456 = scalar_select %p455, %s23, 1
      %s457 = smul.addr %s456, 2
      %s458 = scalar_lea.vmem %s10, %s457
      %p459 = scmp.lt.s32.totalorder %s23, 1
      %s460 = scalar_select %p459, %s23, 1
      %s461 = scalar_lea.vmem %s11, %s460
      %v463 = vld [vmem:[%s447] sm:$0x7]
      %v464 = vld [vmem:[%s443] sm:$0xf]
      %v465 = vld [vmem:[%s443 + $0x4] sm:$0xf]
      %v466 = vld [vmem:[%s443 + $0x8] sm:$0xf]
      %v467 = vld [vmem:[%s443 + $0xc] sm:$0xf]
      %v468 = vld [vmem:[%s443 + $0x10] sm:$0xf]
      %v469 = vld [vmem:[%s443 + $0x14] sm:$0xf]
      %v470 = vld [vmem:[%s443 + $0x18] sm:$0xf]
      %v471 = vld [vmem:[%s443 + $0x1c] sm:$0xf]
      %v480 = vunpack.c.l.b16 %v464
      %v481 = vunpack.c.l.b16 %v465
      %v482 = vunpack.c.l.b16 %v466
      %v483 = vunpack.c.l.b16 %v467
      %v484 = vunpack.c.l.b16 %v468
      %v485 = vunpack.c.l.b16 %v469
      %v486 = vunpack.c.l.b16 %v470
      %v487 = vunpack.c.l.b16 %v471
      %v488 = vpack.c.b16 %v481, %v480
      %v489 = vpack.c.b16 %v483, %v482
      %v490 = vpack.c.b16 %v485, %v484
      %v491 = vpack.c.b16 %v487, %v486
      %vm496 = vcmask 523264
      %v498 = vsel %vm496, %v463, 0
      %500 = vmatpush.bf16.msra.mxu0 0
      %501 = vmatpush.bf16.msra.mxu0 0
      %502 = vmatpush.bf16.msra.mxu0 0
      %503 = vmatpush.bf16.msra.mxu0 0
      %504 = vmatpush.bf16.msra.mxu0 %v491
      %505 = vmatpush.bf16.msra.mxu0 %v490
      %506 = vmatpush.bf16.msra.mxu0 %v489
      %507 = vmatpush.bf16.msra.mxu0 %v488
      %508 = vmatmul.bf16.gmra.mxu0 %v498
      %v509 = vpop.f32.mrf.mxu0
      %v510 = vadd.f32 0.0, %v509
      %v511 = vpop.f32.mrf.mxu0
      %512 = vdwg.mxu0
      %v513 = vld [vmem:[%s454] sm:$0x1]
      %v514 = vld [vmem:[%s451] sm:$0xf]
      %vm515 = vcmask 64512
      %v517 = vsel %vm515, %v513, 0
      %vm519 = vcmask 1043456
      %v521 = vsel %vm519, %v514, 0
      %523 = vmatpush.bf16.msra.mxu0 0
      %524 = vmatpush.bf16.msra.mxu0 0
      %525 = vmatpush.bf16.msra.mxu0 0
      %526 = vmatpush.bf16.msra.mxu0 0
      %527 = vmatpush.bf16.msra.mxu0 0
      %528 = vmatpush.bf16.msra.mxu0 0
      %529 = vmatpush.bf16.msra.mxu0 0
      %530 = vmatpush.bf16.msra.mxu0 %v521
      %531 = vmatmul.bf16.gmra.mxu0 %v517
      %v532 = vpop.f32.mrf.mxu0
      %v533 = vadd.f32 0.0, %v532
      %v534 = vpop.f32.mrf.mxu0
      %535 = vdwg.mxu0
      %v536 = vmul.f32 %v510, %v510
      %vm537 = vcmask 521216
      %v538 = vsel %vm537, %v536, 0.0
      %539 = vadd.xlane.f32.xlu0 %v538
      %v540 = vpop.xlane.xlu0 %539
      %v541 = vadd.f32 %v540, 1e-12
      %v542 = vrsqrt.pop %v541
      %v543 = vmul.f32 %v542, %v541
      %v544 = vmul.f32 %v543, %v542
      %v545 = vmul.f32 0.5, %v544
      %v546 = vsub.f32 1.5, %v545
      %v547 = vmul.f32 %v542, %v546
      %vm548 = vweird.f32 %v541
      %vm549 = vweird.f32 %v542
      %vm550 = vmor %vm548, %vm549
      %v551 = vsel %vm550, %v542, %v547
      %v552 = vmul.f32 %v510, %v551
      %v553 = vmul.f32 %v533, %v533
      %vm554 = vcmask 516096
      %v555 = vsel %vm554, %v553, 0.0
      %556 = vadd.xlane.f32.xlu0 %v555
      %v557 = vpop.xlane.xlu0 %556
      %v558 = vadd.f32 %v557, 1e-12
      %v559 = vrsqrt.pop %v558
      %v560 = vmul.f32 %v559, %v558
      %v561 = vmul.f32 %v560, %v559
      %v562 = vmul.f32 0.5, %v561
      %v563 = vsub.f32 1.5, %v562
      %v564 = vmul.f32 %v559, %v563
      %vm565 = vweird.f32 %v558
      %vm566 = vweird.f32 %v559
      %vm567 = vmor %vm565, %vm566
      %v568 = vsel %vm567, %v559, %v564
      %v569 = vmul.f32 %v533, %v568
      %v570 = vpack.c.bf16 %v552, %v552
      %v571 = vpack.c.bf16 %v569, %v569
      %v573 = vsel %vm496, %v570, 0
      %v576 = vsel %vm496, %v571, 0
      %578 = vmatpush.bf16.xpose.msra.mxu0 0
      %579 = vmatpush.bf16.xpose.msra.mxu0 0
      %580 = vmatpush.bf16.xpose.msra.mxu0 0
      %581 = vmatpush.bf16.xpose.msra.mxu0 0
      %582 = vmatpush.bf16.xpose.msra.mxu0 0
      %583 = vmatpush.bf16.xpose.msra.mxu0 0
      %584 = vmatpush.bf16.xpose.msra.mxu0 0
      %585 = vmatpush.bf16.xpose.msra.mxu0 %v576
      %586 = vmatmul.bf16.gmra.mxu0 %v573
      %v587 = vpop.f32.mrf.mxu0
      %v588 = vadd.f32 0.0, %v587
      %v589 = vpop.f32.mrf.mxu0
      %590 = vdwg.mxu0
      %vm591 = vcmask 5120
      %v592 = vsel %vm591, %v588, 0.0
      %v593 = vrot.slane %v592, 4
      %v594 = vadd.f32 %v592, %v593
      %v595 = vrot.slane %v594, 2
      %v596 = vadd.f32 %v594, %v595
      %v597 = vrot.slane %v596, 1
      %v598 = vadd.f32 %v596, %v597
      %v599 = vrcp.pop 6.0
      %v600 = vmul.f32 6.0, %v599
      %v601 = vsub.f32 1.0, %v600
      %v602 = vmul.f32 %v599, %v601
      %v603 = vadd.f32 %v599, %v602
      %vm604 = vweird.f32 %v599
      %v605 = vsel %vm604, %v599, %v603
      %v606 = vmul.f32 %v598, %v605
      %v607 = vsel %vm591, %v588, -inf
      %v608 = vrot.slane %v607, 4
      %v609 = vmax.f32 %v607, %v608
      %v610 = vrot.slane %v609, 2
      %v611 = vmax.f32 %v609, %v610
      %v612 = vrot.slane %v611, 1
      %v613 = vmax.f32 %v611, %v612
      %v614 = vadd.f32 %v613, 0.0
      %v615 = vadd.f32 %v606, %v614
      %v616 = vmul.f32 %v615, 0.5
      %vm617 = vcmask 0
      %618 = vst.msk [vmem:[%s461] sm:$0x1] %vm617, %v616
      %v619 = vld [vmem:[%s438] sm:$0xf]
      %v620 = vld [vmem:[%s438 + $0x4] sm:$0xf]
      %v621 = vld [vmem:[%s6] sm:$0xff]
      %v622 = vld [vmem:[%s6 + $0x8] sm:$0xf]
      %v623 = vld [vmem:[%s6 + $0xc] sm:$0xff]
      %v624 = vld [vmem:[%s6 + $0x14] sm:$0xf]
      %v625 = vld [vmem:[%s6 + $0x18] sm:$0xff]
      %v626 = vld [vmem:[%s6 + $0x20] sm:$0xf]
      %v627 = vld [vmem:[%s6 + $0x24] sm:$0xff]
      %v628 = vld [vmem:[%s6 + $0x2c] sm:$0xf]
      %v629 = vld [vmem:[%s6 + $0x30] sm:$0xff]
      %v630 = vld [vmem:[%s6 + $0x38] sm:$0xf]
      %v631 = vld [vmem:[%s6 + $0x3c] sm:$0xff]
      %v632 = vld [vmem:[%s6 + $0x44] sm:$0xf]
      %v633 = vld [vmem:[%s6 + $0x48] sm:$0xff]
      %v634 = vld [vmem:[%s6 + $0x50] sm:$0xf]
      %v635 = vld [vmem:[%s6 + $0x54] sm:$0xff]
      %v636 = vld [vmem:[%s6 + $0x5c] sm:$0xf]
      %v639 = vunpack.c.l.b16 %v619
      %v640 = vunpack.c.l.b16 %v620
      %v641 = vpack.c.b16 %v640, %v639
      %v658 = vunpack.c.l.b16 %v621
      %v659 = vunpack.c.h.b16 %v621
      %v660 = vunpack.c.l.b16 %v622
      %v661 = vunpack.c.l.b16 %v623
      %v662 = vunpack.c.h.b16 %v623
      %v663 = vunpack.c.l.b16 %v624
      %v664 = vunpack.c.l.b16 %v625
      %v665 = vunpack.c.h.b16 %v625
      %v666 = vunpack.c.l.b16 %v626
      %v667 = vunpack.c.l.b16 %v627
      %v668 = vunpack.c.h.b16 %v627
      %v669 = vunpack.c.l.b16 %v628
      %v670 = vunpack.c.l.b16 %v629
      %v671 = vunpack.c.h.b16 %v629
      %v672 = vunpack.c.l.b16 %v630
      %v673 = vunpack.c.l.b16 %v631
      %v674 = vunpack.c.h.b16 %v631
      %v675 = vunpack.c.l.b16 %v632
      %v676 = vunpack.c.l.b16 %v633
      %v677 = vunpack.c.h.b16 %v633
      %v678 = vunpack.c.l.b16 %v634
      %v679 = vunpack.c.l.b16 %v635
      %v680 = vunpack.c.h.b16 %v635
      %v681 = vunpack.c.l.b16 %v636
      %v682 = vpack.c.b16 %v661, %v658
      %v683 = vpack.c.b16 %v662, %v659
      %v684 = vpack.c.b16 %v663, %v660
      %v685 = vpack.c.b16 %v667, %v664
      %v686 = vpack.c.b16 %v668, %v665
      %v687 = vpack.c.b16 %v669, %v666
      %v688 = vpack.c.b16 %v673, %v670
      %v689 = vpack.c.b16 %v674, %v671
      %v690 = vpack.c.b16 %v675, %v672
      %v691 = vpack.c.b16 %v679, %v676
      %v692 = vpack.c.b16 %v680, %v677
      %v693 = vpack.c.b16 %v681, %v678
      %v707 = vsel %vm496, %v641, 0
      %709 = vmatpush.bf16.msra.mxu0 0
      %710 = vmatpush.bf16.msra.mxu0 0
      %711 = vmatpush.bf16.msra.mxu0 0
      %712 = vmatpush.bf16.msra.mxu0 0
      %713 = vmatpush.bf16.msra.mxu0 %v691
      %714 = vmatpush.bf16.msra.mxu0 %v688
      %715 = vmatpush.bf16.msra.mxu0 %v685
      %716 = vmatpush.bf16.msra.mxu0 %v682
      %717 = vmatmul.bf16.gmra.mxu0 %v707
      %v718 = vpop.f32.mrf.mxu0
      %v719 = vadd.f32 0.0, %v718
      %v720 = vpop.f32.mrf.mxu0
      %v721 = vadd.f32 0.0, %v720
      %722 = vdwg.mxu0
      %723 = vmatpush.bf16.msra.mxu0 0
      %724 = vmatpush.bf16.msra.mxu0 0
      %725 = vmatpush.bf16.msra.mxu0 0
      %726 = vmatpush.bf16.msra.mxu0 0
      %727 = vmatpush.bf16.msra.mxu0 %v692
      %728 = vmatpush.bf16.msra.mxu0 %v689
      %729 = vmatpush.bf16.msra.mxu0 %v686
      %730 = vmatpush.bf16.msra.mxu0 %v683
      %731 = vmatmul.bf16.gmra.mxu0 %v707
      %v732 = vpop.f32.mrf.mxu0
      %v733 = vadd.f32 0.0, %v732
      %v734 = vpop.f32.mrf.mxu0
      %v735 = vadd.f32 0.0, %v734
      %736 = vdwg.mxu0
      %737 = vmatpush.bf16.msra.mxu0 0
      %738 = vmatpush.bf16.msra.mxu0 0
      %739 = vmatpush.bf16.msra.mxu0 0
      %740 = vmatpush.bf16.msra.mxu0 0
      %741 = vmatpush.bf16.msra.mxu0 %v693
      %742 = vmatpush.bf16.msra.mxu0 %v690
      %743 = vmatpush.bf16.msra.mxu0 %v687
      %744 = vmatpush.bf16.msra.mxu0 %v684
      %745 = vmatmul.bf16.gmra.mxu0 %v707
      %v746 = vpop.f32.mrf.mxu0
      %v747 = vadd.f32 0.0, %v746
      %v748 = vpop.f32.mrf.mxu0
      %v749 = vadd.f32 0.0, %v748
      %750 = vdwg.mxu0
      %v751 = vpack.c.bf16 %v733, %v719
      %v752 = vpack.c.bf16 %v747, %v747
      %v753 = vpack.c.bf16 %v735, %v721
      %v754 = vpack.c.bf16 %v749, %v749
      %v755 = vld [vmem:[%s5] sm:$0xf]
      %v756 = vld [vmem:[%s5 + $0x4] sm:$0xf]
      %s757 = scalar_lea.vmem %s5, 8
      %v758 = vld [vmem:[%s757] sm:$0xf]
      %v759 = vld [vmem:[%s757 + $0x4] sm:$0xf]
      %v762 = vunpack.c.l.b16 %v758
      %v763 = vunpack.c.l.b16 %v759
      %v764 = vpack.c.b16 %v763, %v762
      %v767 = vunpack.c.l.b16 %v751
      %v768 = vunpack.c.l.b16 %v753
      %v769 = vpack.c.b16 %v768, %v767
      %770 = vrot.lane.b32.xlu0 %v769, 96
      %v771 = vpop.permute.xlu0 %770
      %vm773 = vcmask 130048
      %v775 = vsel %vm773, %v764, 0
      %777 = vmatpush.bf16.msra.mxu0 0
      %778 = vmatpush.bf16.msra.mxu0 0
      %779 = vmatpush.bf16.msra.mxu0 0
      %780 = vmatpush.bf16.msra.mxu0 0
      %781 = vmatpush.bf16.msra.mxu0 0
      %782 = vmatpush.bf16.msra.mxu0 0
      %783 = vmatpush.bf16.msra.mxu0 0
      %784 = vmatpush.bf16.msra.mxu0 %v771
      %785 = vmatmul.bf16.gmra.mxu0 %v775
      %v786 = vpop.f32.mrf.mxu0
      %v787 = vadd.f32 0.0, %v786
      %v788 = vpop.f32.mrf.mxu0
      %v789 = vadd.f32 0.0, %v788
      %790 = vdwg.mxu0
      %v793 = vunpack.c.l.b16 %v755
      %v794 = vunpack.c.l.b16 %v756
      %v795 = vpack.c.b16 %v794, %v793
      %v798 = vsel %vm773, %v795, 0
      %800 = vmatpush.bf16.msra.mxu0 0
      %801 = vmatpush.bf16.msra.mxu0 0
      %802 = vmatpush.bf16.msra.mxu0 0
      %803 = vmatpush.bf16.msra.mxu0 0
      %804 = vmatpush.bf16.msra.mxu0 0
      %805 = vmatpush.bf16.msra.mxu0 0
      %806 = vmatpush.bf16.msra.mxu0 0
      %807 = vmatpush.bf16.msra.mxu0 %v769
      %808 = vmatmul.bf16.gmra.mxu0 %v798
      %v809 = vpop.f32.mrf.mxu0
      %v810 = vadd.f32 %v787, %v809
      %v811 = vpop.f32.mrf.mxu0
      %v812 = vadd.f32 %v789, %v811
      %813 = vdwg.mxu0
      %s814 = scalar_lea.vmem %s5, 16
      %v815 = vld [vmem:[%s814] sm:$0xf]
      %v816 = vld [vmem:[%s814 + $0x4] sm:$0xf]
      %v819 = vunpack.c.l.b16 %v815
      %v820 = vunpack.c.l.b16 %v816
      %v821 = vpack.c.b16 %v820, %v819
      %822 = vrot.lane.b32.xlu0 %v769, 64
      %v823 = vpop.permute.xlu0 %822
      %v826 = vsel %vm773, %v821, 0
      %828 = vmatpush.bf16.msra.mxu0 0
      %829 = vmatpush.bf16.msra.mxu0 0
      %830 = vmatpush.bf16.msra.mxu0 0
      %831 = vmatpush.bf16.msra.mxu0 0
      %832 = vmatpush.bf16.msra.mxu0 0
      %833 = vmatpush.bf16.msra.mxu0 0
      %834 = vmatpush.bf16.msra.mxu0 0
      %835 = vmatpush.bf16.msra.mxu0 %v823
      %836 = vmatmul.bf16.gmra.mxu0 %v826
      %v837 = vpop.f32.mrf.mxu0
      %v838 = vadd.f32 0.0, %v837
      %v839 = vpop.f32.mrf.mxu0
      %v840 = vadd.f32 0.0, %v839
      %841 = vdwg.mxu0
      %v842 = vadd.f32 %v810, %v838
      %v843 = vadd.f32 %v812, %v840
      %s844 = scalar_lea.vmem %s5, 24
      %v845 = vld [vmem:[%s844] sm:$0xf]
      %v846 = vld [vmem:[%s844 + $0x4] sm:$0xf]
      %v849 = vunpack.c.l.b16 %v845
      %v850 = vunpack.c.l.b16 %v846
      %v851 = vpack.c.b16 %v850, %v849
      %852 = vrot.lane.b32.xlu0 %v769, 32
      %v853 = vpop.permute.xlu0 %852
      %v856 = vsel %vm773, %v851, 0
      %858 = vmatpush.bf16.msra.mxu0 0
      %859 = vmatpush.bf16.msra.mxu0 0
      %860 = vmatpush.bf16.msra.mxu0 0
      %861 = vmatpush.bf16.msra.mxu0 0
      %862 = vmatpush.bf16.msra.mxu0 0
      %863 = vmatpush.bf16.msra.mxu0 0
      %864 = vmatpush.bf16.msra.mxu0 0
      %865 = vmatpush.bf16.msra.mxu0 %v853
      %866 = vmatmul.bf16.gmra.mxu0 %v856
      %v867 = vpop.f32.mrf.mxu0
      %v868 = vadd.f32 0.0, %v867
      %v869 = vpop.f32.mrf.mxu0
      %v870 = vadd.f32 0.0, %v869
      %871 = vdwg.mxu0
      %v872 = vadd.f32 %v842, %v868
      %v873 = vadd.f32 %v843, %v870
      %s874 = scalar_lea.vmem %s5, 32
      %v875 = vld [vmem:[%s874] sm:$0xf]
      %v876 = vld [vmem:[%s874 + $0x4] sm:$0xf]
      %v879 = vunpack.c.l.b16 %v875
      %v880 = vunpack.c.l.b16 %v876
      %v881 = vpack.c.b16 %v880, %v879
      %v882 = vunpack.c.h.b16 %v751
      %v883 = vunpack.c.h.b16 %v753
      %v884 = vpack.c.b16 %v883, %v882
      %v887 = vsel %vm773, %v881, 0
      %889 = vmatpush.bf16.msra.mxu0 0
      %890 = vmatpush.bf16.msra.mxu0 0
      %891 = vmatpush.bf16.msra.mxu0 0
      %892 = vmatpush.bf16.msra.mxu0 0
      %893 = vmatpush.bf16.msra.mxu0 0
      %894 = vmatpush.bf16.msra.mxu0 0
      %895 = vmatpush.bf16.msra.mxu0 0
      %896 = vmatpush.bf16.msra.mxu0 %v884
      %897 = vmatmul.bf16.gmra.mxu0 %v887
      %v898 = vpop.f32.mrf.mxu0
      %v899 = vadd.f32 0.0, %v898
      %v900 = vpop.f32.mrf.mxu0
      %v901 = vadd.f32 0.0, %v900
      %902 = vdwg.mxu0
      %v903 = vadd.f32 %v872, %v899
      %v904 = vadd.f32 %v873, %v901
      %s905 = scalar_lea.vmem %s5, 40
      %v906 = vld [vmem:[%s905] sm:$0xf]
      %v907 = vld [vmem:[%s905 + $0x4] sm:$0xf]
      %v910 = vunpack.c.l.b16 %v906
      %v911 = vunpack.c.l.b16 %v907
      %v912 = vpack.c.b16 %v911, %v910
      %913 = vrot.lane.b32.xlu0 %v884, 96
      %v914 = vpop.permute.xlu0 %913
      %v917 = vsel %vm773, %v912, 0
      %919 = vmatpush.bf16.msra.mxu0 0
      %920 = vmatpush.bf16.msra.mxu0 0
      %921 = vmatpush.bf16.msra.mxu0 0
      %922 = vmatpush.bf16.msra.mxu0 0
      %923 = vmatpush.bf16.msra.mxu0 0
      %924 = vmatpush.bf16.msra.mxu0 0
      %925 = vmatpush.bf16.msra.mxu0 0
      %926 = vmatpush.bf16.msra.mxu0 %v914
      %927 = vmatmul.bf16.gmra.mxu0 %v917
      %v928 = vpop.f32.mrf.mxu0
      %v929 = vadd.f32 0.0, %v928
      %v930 = vpop.f32.mrf.mxu0
      %v931 = vadd.f32 0.0, %v930
      %932 = vdwg.mxu0
      %v933 = vadd.f32 %v903, %v929
      %v934 = vadd.f32 %v904, %v931
      %s935 = scalar_lea.vmem %s5, 48
      %v936 = vld [vmem:[%s935] sm:$0xf]
      %v937 = vld [vmem:[%s935 + $0x4] sm:$0xf]
      %v940 = vunpack.c.l.b16 %v936
      %v941 = vunpack.c.l.b16 %v937
      %v942 = vpack.c.b16 %v941, %v940
      %943 = vrot.lane.b32.xlu0 %v884, 64
      %v944 = vpop.permute.xlu0 %943
      %v947 = vsel %vm773, %v942, 0
      %949 = vmatpush.bf16.msra.mxu0 0
      %950 = vmatpush.bf16.msra.mxu0 0
      %951 = vmatpush.bf16.msra.mxu0 0
      %952 = vmatpush.bf16.msra.mxu0 0
      %953 = vmatpush.bf16.msra.mxu0 0
      %954 = vmatpush.bf16.msra.mxu0 0
      %955 = vmatpush.bf16.msra.mxu0 0
      %956 = vmatpush.bf16.msra.mxu0 %v944
      %957 = vmatmul.bf16.gmra.mxu0 %v947
      %v958 = vpop.f32.mrf.mxu0
      %v959 = vadd.f32 0.0, %v958
      %v960 = vpop.f32.mrf.mxu0
      %v961 = vadd.f32 0.0, %v960
      %962 = vdwg.mxu0
      %v963 = vadd.f32 %v933, %v959
      %v964 = vadd.f32 %v934, %v961
      %s965 = scalar_lea.vmem %s5, 56
      %v966 = vld [vmem:[%s965] sm:$0xf]
      %v967 = vld [vmem:[%s965 + $0x4] sm:$0xf]
      %v970 = vunpack.c.l.b16 %v966
      %v971 = vunpack.c.l.b16 %v967
      %v972 = vpack.c.b16 %v971, %v970
      %973 = vrot.lane.b32.xlu0 %v884, 32
      %v974 = vpop.permute.xlu0 %973
      %v977 = vsel %vm773, %v972, 0
      %979 = vmatpush.bf16.msra.mxu0 0
      %980 = vmatpush.bf16.msra.mxu0 0
      %981 = vmatpush.bf16.msra.mxu0 0
      %982 = vmatpush.bf16.msra.mxu0 0
      %983 = vmatpush.bf16.msra.mxu0 0
      %984 = vmatpush.bf16.msra.mxu0 0
      %985 = vmatpush.bf16.msra.mxu0 0
      %986 = vmatpush.bf16.msra.mxu0 %v974
      %987 = vmatmul.bf16.gmra.mxu0 %v977
      %v988 = vpop.f32.mrf.mxu0
      %v989 = vadd.f32 0.0, %v988
      %v990 = vpop.f32.mrf.mxu0
      %v991 = vadd.f32 0.0, %v990
      %992 = vdwg.mxu0
      %v993 = vadd.f32 %v963, %v989
      %v994 = vadd.f32 %v964, %v991
      %s995 = scalar_lea.vmem %s5, 64
      %v996 = vld [vmem:[%s995] sm:$0xf]
      %v997 = vld [vmem:[%s995 + $0x4] sm:$0xf]
      %v1000 = vunpack.c.l.b16 %v996
      %v1001 = vunpack.c.l.b16 %v997
      %v1002 = vpack.c.b16 %v1001, %v1000
      %v1005 = vunpack.c.l.b16 %v752
      %v1006 = vunpack.c.l.b16 %v754
      %v1007 = vpack.c.b16 %v1006, %v1005
      %v1010 = vsel %vm773, %v1002, 0
      %1012 = vmatpush.bf16.msra.mxu0 0
      %1013 = vmatpush.bf16.msra.mxu0 0
      %1014 = vmatpush.bf16.msra.mxu0 0
      %1015 = vmatpush.bf16.msra.mxu0 0
      %1016 = vmatpush.bf16.msra.mxu0 0
      %1017 = vmatpush.bf16.msra.mxu0 0
      %1018 = vmatpush.bf16.msra.mxu0 0
      %1019 = vmatpush.bf16.msra.mxu0 %v1007
      %1020 = vmatmul.bf16.gmra.mxu0 %v1010
      %v1021 = vpop.f32.mrf.mxu0
      %v1022 = vadd.f32 0.0, %v1021
      %v1023 = vpop.f32.mrf.mxu0
      %v1024 = vadd.f32 0.0, %v1023
      %1025 = vdwg.mxu0
      %v1026 = vadd.f32 %v993, %v1022
      %v1027 = vadd.f32 %v994, %v1024
      %v1028 = vld [vmem:[%s9] sm:$0x1]
      %v1029 = vperm.slane %v1028, 0
      %v1030 = vadd.f32 %v1026, %v1029
      %v1031 = vadd.f32 %v1027, %v1029
      %v1032 = vmax.f32 %v1030, 0.0
      %v1033 = vmax.f32 %v1031, 0.0
      %v1034 = vpack.c.bf16 %v1033, %v1032
      %v1035 = vld [vmem:[%s7] sm:$0xff]
      %v1036 = vld [vmem:[%s7 + $0x8] sm:$0xff]
      %v1037 = vld [vmem:[%s7 + $0x10] sm:$0xff]
      %v1038 = vld [vmem:[%s7 + $0x18] sm:$0xff]
      %v1043 = vunpack.c.l.b16 %v1035
      %v1044 = vunpack.c.h.b16 %v1035
      %v1045 = vunpack.c.l.b16 %v1036
      %v1046 = vunpack.c.h.b16 %v1036
      %v1047 = vunpack.c.l.b16 %v1037
      %v1048 = vunpack.c.h.b16 %v1037
      %v1049 = vunpack.c.l.b16 %v1038
      %v1050 = vunpack.c.h.b16 %v1038
      %v1051 = vpack.c.b16 %v1045, %v1043
      %v1052 = vpack.c.b16 %v1046, %v1044
      %v1053 = vpack.c.b16 %v1049, %v1047
      %v1054 = vpack.c.b16 %v1050, %v1048
      %vm1059 = vcmask 261120
      %v1061 = vsel %vm1059, %v1034, 0
      %1063 = vmatpush.bf16.msra.mxu0 0
      %1064 = vmatpush.bf16.msra.mxu0 0
      %1065 = vmatpush.bf16.msra.mxu0 0
      %1066 = vmatpush.bf16.msra.mxu0 0
      %1067 = vmatpush.bf16.msra.mxu0 0
      %1068 = vmatpush.bf16.msra.mxu0 0
      %1069 = vmatpush.bf16.msra.mxu0 %v1053
      %1070 = vmatpush.bf16.msra.mxu0 %v1051
      %1071 = vmatmul.bf16.gmra.mxu0 %v1061
      %v1072 = vpop.f32.mrf.mxu0
      %v1073 = vadd.f32 0.0, %v1072
      %v1074 = vpop.f32.mrf.mxu0
      %v1075 = vadd.f32 0.0, %v1074
      %1076 = vdwg.mxu0
      %1077 = vmatpush.bf16.msra.mxu0 0
      %1078 = vmatpush.bf16.msra.mxu0 0
      %1079 = vmatpush.bf16.msra.mxu0 0
      %1080 = vmatpush.bf16.msra.mxu0 0
      %1081 = vmatpush.bf16.msra.mxu0 0
      %1082 = vmatpush.bf16.msra.mxu0 0
      %1083 = vmatpush.bf16.msra.mxu0 %v1054
      %1084 = vmatpush.bf16.msra.mxu0 %v1052
      %1085 = vmatmul.bf16.gmra.mxu0 %v1061
      %v1086 = vpop.f32.mrf.mxu0
      %v1087 = vadd.f32 0.0, %v1086
      %v1088 = vpop.f32.mrf.mxu0
      %v1089 = vadd.f32 0.0, %v1088
      %1090 = vdwg.mxu0
      %v1091 = vpack.c.bf16 %v1087, %v1073
      %v1092 = vpack.c.bf16 %v1089, %v1075
      %v1095 = vunpack.c.l.b16 %v1091
      %v1096 = vunpack.c.l.b16 %v1092
      %v1097 = vpack.c.b16 %v1096, %v1095
      %1098 = vrot.lane.b32.xlu0 %v1097, 112
      %v1099 = vpop.permute.xlu0 %1098
      %1101 = vmatpush.bf16.msra.mxu0 0
      %1102 = vmatpush.bf16.msra.mxu0 0
      %1103 = vmatpush.bf16.msra.mxu0 0
      %1104 = vmatpush.bf16.msra.mxu0 0
      %1105 = vmatpush.bf16.msra.mxu0 0
      %1106 = vmatpush.bf16.msra.mxu0 0
      %1107 = vmatpush.bf16.msra.mxu0 0
      %1108 = vmatpush.bf16.msra.mxu0 %v1099
      %1109 = vmatmul.bf16.gmra.mxu0 %v775
      %v1110 = vpop.f32.mrf.mxu0
      %v1111 = vadd.f32 0.0, %v1110
      %v1112 = vpop.f32.mrf.mxu0
      %v1113 = vadd.f32 0.0, %v1112
      %1114 = vdwg.mxu0
      %1116 = vmatpush.bf16.msra.mxu0 0
      %1117 = vmatpush.bf16.msra.mxu0 0
      %1118 = vmatpush.bf16.msra.mxu0 0
      %1119 = vmatpush.bf16.msra.mxu0 0
      %1120 = vmatpush.bf16.msra.mxu0 0
      %1121 = vmatpush.bf16.msra.mxu0 0
      %1122 = vmatpush.bf16.msra.mxu0 0
      %1123 = vmatpush.bf16.msra.mxu0 %v1097
      %1124 = vmatmul.bf16.gmra.mxu0 %v798
      %v1125 = vpop.f32.mrf.mxu0
      %v1126 = vadd.f32 %v1111, %v1125
      %v1127 = vpop.f32.mrf.mxu0
      %v1128 = vadd.f32 %v1113, %v1127
      %1129 = vdwg.mxu0
      %1130 = vrot.lane.b32.xlu0 %v1097, 96
      %v1131 = vpop.permute.xlu0 %1130
      %1133 = vmatpush.bf16.msra.mxu0 0
      %1134 = vmatpush.bf16.msra.mxu0 0
      %1135 = vmatpush.bf16.msra.mxu0 0
      %1136 = vmatpush.bf16.msra.mxu0 0
      %1137 = vmatpush.bf16.msra.mxu0 0
      %1138 = vmatpush.bf16.msra.mxu0 0
      %1139 = vmatpush.bf16.msra.mxu0 0
      %1140 = vmatpush.bf16.msra.mxu0 %v1131
      %1141 = vmatmul.bf16.gmra.mxu0 %v826
      %v1142 = vpop.f32.mrf.mxu0
      %v1143 = vadd.f32 0.0, %v1142
      %v1144 = vpop.f32.mrf.mxu0
      %v1145 = vadd.f32 0.0, %v1144
      %1146 = vdwg.mxu0
      %v1147 = vadd.f32 %v1126, %v1143
      %v1148 = vadd.f32 %v1128, %v1145
      %1149 = vrot.lane.b32.xlu0 %v1097, 80
      %v1150 = vpop.permute.xlu0 %1149
      %1152 = vmatpush.bf16.msra.mxu0 0
      %1153 = vmatpush.bf16.msra.mxu0 0
      %1154 = vmatpush.bf16.msra.mxu0 0
      %1155 = vmatpush.bf16.msra.mxu0 0
      %1156 = vmatpush.bf16.msra.mxu0 0
      %1157 = vmatpush.bf16.msra.mxu0 0
      %1158 = vmatpush.bf16.msra.mxu0 0
      %1159 = vmatpush.bf16.msra.mxu0 %v1150
      %1160 = vmatmul.bf16.gmra.mxu0 %v856
      %v1161 = vpop.f32.mrf.mxu0
      %v1162 = vadd.f32 0.0, %v1161
      %v1163 = vpop.f32.mrf.mxu0
      %v1164 = vadd.f32 0.0, %v1163
      %1165 = vdwg.mxu0
      %v1166 = vadd.f32 %v1147, %v1162
      %v1167 = vadd.f32 %v1148, %v1164
      %1168 = vrot.lane.b32.xlu0 %v1097, 64
      %v1169 = vpop.permute.xlu0 %1168
      %1171 = vmatpush.bf16.msra.mxu0 0
      %1172 = vmatpush.bf16.msra.mxu0 0
      %1173 = vmatpush.bf16.msra.mxu0 0
      %1174 = vmatpush.bf16.msra.mxu0 0
      %1175 = vmatpush.bf16.msra.mxu0 0
      %1176 = vmatpush.bf16.msra.mxu0 0
      %1177 = vmatpush.bf16.msra.mxu0 0
      %1178 = vmatpush.bf16.msra.mxu0 %v1169
      %1179 = vmatmul.bf16.gmra.mxu0 %v887
      %v1180 = vpop.f32.mrf.mxu0
      %v1181 = vadd.f32 0.0, %v1180
      %v1182 = vpop.f32.mrf.mxu0
      %v1183 = vadd.f32 0.0, %v1182
      %1184 = vdwg.mxu0
      %v1185 = vadd.f32 %v1166, %v1181
      %v1186 = vadd.f32 %v1167, %v1183
      %1187 = vrot.lane.b32.xlu0 %v1097, 48
      %v1188 = vpop.permute.xlu0 %1187
      %1190 = vmatpush.bf16.msra.mxu0 0
      %1191 = vmatpush.bf16.msra.mxu0 0
      %1192 = vmatpush.bf16.msra.mxu0 0
      %1193 = vmatpush.bf16.msra.mxu0 0
      %1194 = vmatpush.bf16.msra.mxu0 0
      %1195 = vmatpush.bf16.msra.mxu0 0
      %1196 = vmatpush.bf16.msra.mxu0 0
      %1197 = vmatpush.bf16.msra.mxu0 %v1188
      %1198 = vmatmul.bf16.gmra.mxu0 %v917
      %v1199 = vpop.f32.mrf.mxu0
      %v1200 = vadd.f32 0.0, %v1199
      %v1201 = vpop.f32.mrf.mxu0
      %v1202 = vadd.f32 0.0, %v1201
      %1203 = vdwg.mxu0
      %v1204 = vadd.f32 %v1185, %v1200
      %v1205 = vadd.f32 %v1186, %v1202
      %1206 = vrot.lane.b32.xlu0 %v1097, 32
      %v1207 = vpop.permute.xlu0 %1206
      %1209 = vmatpush.bf16.msra.mxu0 0
      %1210 = vmatpush.bf16.msra.mxu0 0
      %1211 = vmatpush.bf16.msra.mxu0 0
      %1212 = vmatpush.bf16.msra.mxu0 0
      %1213 = vmatpush.bf16.msra.mxu0 0
      %1214 = vmatpush.bf16.msra.mxu0 0
      %1215 = vmatpush.bf16.msra.mxu0 0
      %1216 = vmatpush.bf16.msra.mxu0 %v1207
      %1217 = vmatmul.bf16.gmra.mxu0 %v947
      %v1218 = vpop.f32.mrf.mxu0
      %v1219 = vadd.f32 0.0, %v1218
      %v1220 = vpop.f32.mrf.mxu0
      %v1221 = vadd.f32 0.0, %v1220
      %1222 = vdwg.mxu0
      %v1223 = vadd.f32 %v1204, %v1219
      %v1224 = vadd.f32 %v1205, %v1221
      %1225 = vrot.lane.b32.xlu0 %v1097, 16
      %v1226 = vpop.permute.xlu0 %1225
      %1228 = vmatpush.bf16.msra.mxu0 0
      %1229 = vmatpush.bf16.msra.mxu0 0
      %1230 = vmatpush.bf16.msra.mxu0 0
      %1231 = vmatpush.bf16.msra.mxu0 0
      %1232 = vmatpush.bf16.msra.mxu0 0
      %1233 = vmatpush.bf16.msra.mxu0 0
      %1234 = vmatpush.bf16.msra.mxu0 0
      %1235 = vmatpush.bf16.msra.mxu0 %v1226
      %1236 = vmatmul.bf16.gmra.mxu0 %v977
      %v1237 = vpop.f32.mrf.mxu0
      %v1238 = vadd.f32 0.0, %v1237
      %v1239 = vpop.f32.mrf.mxu0
      %v1240 = vadd.f32 0.0, %v1239
      %1241 = vdwg.mxu0
      %v1242 = vadd.f32 %v1223, %v1238
      %v1243 = vadd.f32 %v1224, %v1240
      %v1244 = vunpack.c.h.b16 %v1091
      %v1245 = vunpack.c.h.b16 %v1092
      %v1246 = vpack.c.b16 %v1245, %v1244
      %1248 = vmatpush.bf16.msra.mxu0 0
      %1249 = vmatpush.bf16.msra.mxu0 0
      %1250 = vmatpush.bf16.msra.mxu0 0
      %1251 = vmatpush.bf16.msra.mxu0 0
      %1252 = vmatpush.bf16.msra.mxu0 0
      %1253 = vmatpush.bf16.msra.mxu0 0
      %1254 = vmatpush.bf16.msra.mxu0 0
      %1255 = vmatpush.bf16.msra.mxu0 %v1246
      %1256 = vmatmul.bf16.gmra.mxu0 %v1010
      %v1257 = vpop.f32.mrf.mxu0
      %v1258 = vadd.f32 0.0, %v1257
      %v1259 = vpop.f32.mrf.mxu0
      %v1260 = vadd.f32 0.0, %v1259
      %1261 = vdwg.mxu0
      %v1262 = vadd.f32 %v1242, %v1258
      %v1263 = vadd.f32 %v1243, %v1260
      %v1264 = vld [vmem:[%s9 + $0x1] sm:$0x1]
      %v1265 = vperm.slane %v1264, 0
      %v1266 = vadd.f32 %v1262, %v1265
      %v1267 = vadd.f32 %v1263, %v1265
      %v1268 = vmax.f32 %v1266, 0.0
      %v1269 = vmax.f32 %v1267, 0.0
      %v1270 = vld [vmem:[%s9 + $0x2] sm:$0x1]
      %v1271 = vperm.slane %v1270, 0
      %v1272 = vmul.f32 %v1268, %v1271
      %v1273 = vmul.f32 %v1269, %v1271
      %v1274 = vsel %vm773, %v1272, 0.0
      %1275 = vadd.xlane.f32.xlu0 %v1274
      %v1276 = vpop.xlane.xlu0 %1275
      %v1277 = vsel %vm773, %v1273, 0.0
      %1278 = vadd.xlane.f32.xlu0 %v1277
      %v1279 = vpop.xlane.xlu0 %1278
      %v1280 = vld [vmem:[%s9 + $0x3] sm:$0x1]
      %v1281 = vperm.slane %v1280, 0
      %v1282 = vadd.f32 %v1276, %v1281
      %v1283 = vadd.f32 %v1279, %v1281
      %1284 = vxpose.xlu0.b32.start [1/16] %v1282, 128
      %1285 = vxpose.xlu0.b32.cont [2/16] %v1283, 128
      %1286 = vxpose.xlu0.b32.cont [3/16] 0.0, 128
      %1287 = vxpose.xlu0.b32.cont [4/16] 0.0, 128
      %1288 = vxpose.xlu0.b32.cont [5/16] 0.0, 128
      %1289 = vxpose.xlu0.b32.cont [6/16] 0.0, 128
      %1290 = vxpose.xlu0.b32.cont [7/16] 0.0, 128
      %1291 = vxpose.xlu0.b32.cont [8/16] 0.0, 128
      %1292 = vxpose.xlu0.b32.cont [9/16] 0.0, 128
      %1293 = vxpose.xlu0.b32.cont [10/16] 0.0, 128
      %1294 = vxpose.xlu0.b32.cont [11/16] 0.0, 128
      %1295 = vxpose.xlu0.b32.cont [12/16] 0.0, 128
      %1296 = vxpose.xlu0.b32.cont [13/16] 0.0, 128
      %1297 = vxpose.xlu0.b32.cont [14/16] 0.0, 128
      %1298 = vxpose.xlu0.b32.cont [15/16] 0.0, 128
      %1299 = vxpose.xlu0.b32.end [16/16] 0.0, 128
      %v1300 = vpop.trf.xlu0
      %v1301 = vpop.trf.xlu0
      %v1302 = vpop.trf.xlu0
      %v1303 = vpop.trf.xlu0
      %v1304 = vpop.trf.xlu0
      %v1305 = vpop.trf.xlu0
      %v1306 = vpop.trf.xlu0
      %v1307 = vpop.trf.xlu0
      %v1308 = vpop.trf.xlu0
      %v1309 = vpop.trf.xlu0
      %v1310 = vpop.trf.xlu0
      %v1311 = vpop.trf.xlu0
      %v1312 = vpop.trf.xlu0
      %v1313 = vpop.trf.xlu0
      %v1314 = vpop.trf.xlu0
      %v1315 = vpop.trf.xlu0
      %v1316 = vpack.c.bf16 %v1300, %v1300
      %v1317 = vld [vmem:[%s8] sm:$0xff]
      %v1318 = vld [vmem:[%s8 + $0x8] sm:$0xff]
      %v1319 = vld [vmem:[%s9 + $0x4] sm:$0x1]
      %1321 = vset.pattern.permute.xlu0 0
      %1322 = vperm.xlu0 %1321, %v1319
      %v1323 = vpop.permute.xlu0 %1322
      %v1327 = vunpack.c.l.b16 %v1317
      %v1328 = vunpack.c.h.b16 %v1317
      %v1329 = vunpack.c.l.b16 %v1318
      %v1330 = vunpack.c.h.b16 %v1318
      %v1331 = vpack.c.b16 %v1329, %v1327
      %v1332 = vpack.c.b16 %v1330, %v1328
      %v1336 = vsel %vm773, %v1316, 0
      %1338 = vmatpush.bf16.msra.mxu0 0
      %1339 = vmatpush.bf16.msra.mxu0 0
      %1340 = vmatpush.bf16.msra.mxu0 0
      %1341 = vmatpush.bf16.msra.mxu0 0
      %1342 = vmatpush.bf16.msra.mxu0 0
      %1343 = vmatpush.bf16.msra.mxu0 0
      %1344 = vmatpush.bf16.msra.mxu0 0
      %1345 = vmatpush.bf16.msra.mxu0 %v1331
      %1346 = vmatmul.bf16.gmra.mxu0 %v1336
      %v1347 = vpop.f32.mrf.mxu0
      %v1348 = vadd.f32 %v1323, %v1347
      %v1349 = vpop.f32.mrf.mxu0
      %1350 = vdwg.mxu0
      %1351 = vmatpush.bf16.msra.mxu0 0
      %1352 = vmatpush.bf16.msra.mxu0 0
      %1353 = vmatpush.bf16.msra.mxu0 0
      %1354 = vmatpush.bf16.msra.mxu0 0
      %1355 = vmatpush.bf16.msra.mxu0 0
      %1356 = vmatpush.bf16.msra.mxu0 0
      %1357 = vmatpush.bf16.msra.mxu0 0
      %1358 = vmatpush.bf16.msra.mxu0 %v1332
      %1359 = vmatmul.bf16.gmra.mxu0 %v1336
      %v1360 = vpop.f32.mrf.mxu0
      %v1361 = vadd.f32 %v1323, %v1360
      %v1362 = vpop.f32.mrf.mxu0
      %1363 = vdwg.mxu0
      %v1366 = vrot.slane %v1361, 7
      %vm1367 = vcmask 1040384
      %v1368 = vsel %vm1367, %v1348, %v1366
      %v1370 = vlaneseq
      %vm1371 = vcmp.ge.s32.totalorder %v1370, 0
      %vm1372 = vcmp.lt.s32.totalorder %v1370, 256
      %vm1373 = vmand %vm1371, %vm1372
      %1374 = vst.msk [vmem:[%s458] sm:$0x3] %vm1373, %v1368
      %p1375 = scmp.lt.s32.totalorder %s23, 1
      %s1376 = scalar_select %p1375, %s23, 1
      %s1377 = smul.addr %s1376, 2
      %s1378 = scalar_lea.vmem %s10, %s1377
      %p1379 = scmp.lt.s32.totalorder %s23, 1
      %s1380 = scalar_select %p1379, %s23, 1
      %s1381 = scalar_lea.vmem %s11, %s1380
      // Predicated region
      $region61: #{uninext_finelip_forward.5} parent=59 // pred_check
        %p1382 = pneg %p276
      $region62: #{uninext_finelip_forward.5} parent=59 // pred_check_branch
        %1384 = sbr.rel (%p1382) target = $region64
      $region63: #{uninext_finelip_forward.5} parent=59 // pred_region
        _
      $region64: #{uninext_finelip_forward.5} parent=59 // pred_fallthru
        _
      // Predicated region
      $region65: #{uninext_finelip_forward.5} parent=59 // pred_check
        %p1385 = pneg %p302
      $region66: #{uninext_finelip_forward.5} parent=59 // pred_check_branch
        %1387 = sbr.rel (%p1385) target = $region68
      $region67: #{uninext_finelip_forward.5} parent=59 // pred_region
        _
      $region68: #{uninext_finelip_forward.5} parent=59 // pred_fallthru
        _
    $region60: #{uninext_finelip_forward.5} parent=5 // pred_fallthru
      _
    %p1388 = scmp.le.s32.totalorder 2, %s18
    // Predicated region
    $region69: #{uninext_finelip_forward.5} parent=5 // pred_check
      %p1389 = pneg %p1388
    $region70: #{uninext_finelip_forward.5} parent=5 // pred_check_branch
      %1391 = sbr.rel (%p1389) target = $region72
    $region71: #{uninext_finelip_forward.5} parent=5 // pred_region
      %s1392 = ssub.s32 %s18, 2
      // Predicated region
      $region73: #{uninext_finelip_forward.5} parent=71 // pred_check
        %p1393 = pneg %p282
      $region74: #{uninext_finelip_forward.5} parent=71 // pred_check_branch
        %1395 = sbr.rel (%p1393) target = $region76
      $region75: #{uninext_finelip_forward.5} parent=71 // pred_region
        %p1396 = scmp.lt.s32.totalorder %s24, 1
        %s1397 = scalar_select %p1396, %s24, 1
        %s1398 = smul.addr %s1397, 2
        %s1399 = scalar_lea.vmem %s10, %s1398
      $region76: #{uninext_finelip_forward.5} parent=71 // pred_fallthru
        _
      // Predicated region
      $region77: #{uninext_finelip_forward.5} parent=71 // pred_check
        %p1400 = pneg %p308
      $region78: #{uninext_finelip_forward.5} parent=71 // pred_check_branch
        %1402 = sbr.rel (%p1400) target = $region80
      $region79: #{uninext_finelip_forward.5} parent=71 // pred_region
        %p1403 = scmp.lt.s32.totalorder %s24, 1
        %s1404 = scalar_select %p1403, %s24, 1
        %s1405 = scalar_lea.vmem %s11, %s1404
      $region80: #{uninext_finelip_forward.5} parent=71 // pred_fallthru
        _
    $region72: #{uninext_finelip_forward.5} parent=5 // pred_fallthru
      _
  $region6: #{uninext_finelip_forward.5} parent=0 // loop_footer
    %s22 = sadd.s32 1, %s18
  $region7: #{uninext_finelip_forward.5} parent=0 // loop_footer_branch
    %17 = sbr.rel target = $region3
  $region8: #{uninext_finelip_forward.5} parent=0 // loop_exit
    _

</llo_original>
